<compile_context>
chip_gen: v5e
topology: v5e:2x2
jax: 0.10.0
libtpu: 0.0.40
codegen_flags: <defaults>
</compile_context>

<pallas_src>
import jax
import jax.numpy as jnp
from jax import lax
from jax.experimental import pallas as pl
from jax.experimental.pallas import tpu as pltpu

INPUT_SIZE = 6
HIDDEN_SIZE = 6
NUM_LAYERS = 2


def _matvec_vpu(src, w):
    """src: (B, In), w: (In, 4H) -> (B, 4H) = src @ w, done as In broadcast-mul-adds.

    Keeps the tiny recurrent matvecs off the MXU (which would otherwise add systolic
    fill + result-FIFO latency to the serial recurrence every timestep)."""
    acc = src[:, 0:1] * w[0:1, :]
    for k in range(1, src.shape[1]):
        acc = acc + src[:, k:k + 1] * w[k:k + 1, :]
    return acc


def _lstm_kernel(x_ref, wih0_ref, whh0_ref, b0_ref, wih1_ref, whh1_ref, b1_ref,
                 out_ref, h0_sc, c0_sc, h1_sc, c1_sc):
    H = HIDDEN_SIZE
    TC = x_ref.shape[0]          # static time-chunk length
    chunk = pl.program_id(0)

    @pl.when(chunk == 0)
    def _():
        h0_sc[...] = jnp.zeros_like(h0_sc)
        c0_sc[...] = jnp.zeros_like(c0_sc)
        h1_sc[...] = jnp.zeros_like(h1_sc)
        c1_sc[...] = jnp.zeros_like(c1_sc)

    # Hoist weights / biases out of the per-timestep loop (< 2 KiB -> stay in vregs).
    wih0 = wih0_ref[...]   # (D, 4H)
    whh0 = whh0_ref[...]   # (H, 4H)
    b0 = b0_ref[...]       # (1, 4H)
    wih1 = wih1_ref[...]   # (H, 4H)
    whh1 = whh1_ref[...]   # (H, 4H)
    b1 = b1_ref[...]       # (1, 4H)

    def cell(x_in, h_prev, c_prev, wih, whh, b):
        # Gate columns packed (i, f, o, g). The i/f/o columns of wih/whh/b are
        # pre-scaled by 0.5 at pack time, so one tanh over all 4H columns yields
        # sigmoid(i,f,o) = 0.5*tanh(z/2) + 0.5 with a single EUP launch.
        z = b + _matvec_vpu(x_in, wih) + _matvec_vpu(h_prev, whh)   # (B, 4H)
        t = jnp.tanh(z)
        ifo = 0.5 * t[:, :3 * H] + 0.5                              # i, f, o at once
        i = ifo[:, 0 * H:1 * H]
        f = ifo[:, 1 * H:2 * H]
        o = ifo[:, 2 * H:3 * H]
        g = t[:, 3 * H:]
        c_new = f * c_prev + i * g
        h_new = o * jnp.tanh(c_new)
        return h_new, c_new

    def step(tt, carry):
        h0, c0, h1, c1 = carry
        x_t = x_ref[tt]                            # (B, D)
        h0, c0 = cell(x_t, h0, c0, wih0, whh0, b0)
        h1, c1 = cell(h0, h1, c1, wih1, whh1, b1)
        out_ref[tt] = h1.astype(out_ref.dtype)     # single store per step
        return (h0, c0, h1, c1)

    carry0 = (h0_sc[...], c0_sc[...], h1_sc[...], c1_sc[...])
    unroll = True if TC <= 16 else 16
    h0, c0, h1, c1 = lax.fori_loop(0, TC, step, carry0, unroll=unroll)

    # Write state back once per chunk.
    h0_sc[...] = h0
    c0_sc[...] = c0
    h1_sc[...] = h1
    c1_sc[...] = c1


def inertial_encoder_vinet(x_btd, params, *, time_chunk=256):
    """x_btd: (B, T, 6) float32 (PyTorch batch-first). Returns (B, T, 6)."""
    B, T, D = x_btd.shape
    H = HIDDEN_SIZE
    TC = max(1, min(time_chunk, T))
    n_chunks = pl.cdiv(T, TC)
    T_pad = n_chunks * TC

    x_tbd = jnp.transpose(x_btd, (1, 0, 2)).astype(jnp.float32)   # (T, B, D) time-major
    if T_pad != T:
        # Padded timesteps only affect state at t >= T (causal recurrence); sliced off below.
        x_tbd = jnp.pad(x_tbd, ((0, T_pad - T), (0, 0), (0, 0)))

    wih0, whh0, b0, wih1, whh1, b1 = params

    full = lambda shape: pl.BlockSpec(shape, lambda c: (0,) * len(shape))

    out_tbh = pl.pallas_call(
        _lstm_kernel,
        out_shape=jax.ShapeDtypeStruct((T_pad, B, H), jnp.float32),
        grid_spec=pltpu.PrefetchScalarGridSpec(
            num_scalar_prefetch=0,
            grid=(n_chunks,),
            in_specs=[
                pl.BlockSpec((TC, B, D), lambda c: (c, 0, 0)),   # x time-chunk
                full((D, 4 * H)),                                # wih layer 0
                full((H, 4 * H)),                                # whh layer 0
                full((1, 4 * H)),                                # bias layer 0
                full((H, 4 * H)),                                # wih layer 1
                full((H, 4 * H)),                                # whh layer 1
                full((1, 4 * H)),                                # bias layer 1
            ],
            out_specs=pl.BlockSpec((TC, B, H), lambda c: (c, 0, 0)),
            scratch_shapes=[
                pltpu.VMEM((B, H), jnp.float32),  # h layer 0
                pltpu.VMEM((B, H), jnp.float32),  # c layer 0
                pltpu.VMEM((B, H), jnp.float32),  # h layer 1
                pltpu.VMEM((B, H), jnp.float32),  # c layer 1
            ],
        ),
        compiler_params=pltpu.CompilerParams(
            dimension_semantics=("arbitrary",)),  # sequential recurrence over time chunks
    )(x_tbd, wih0, whh0, b0, wih1, whh1, b1)

    return jnp.transpose(out_tbh[:T], (1, 0, 2))   # (B, T, H)


def init_params(key):
    """Deterministic init mirroring PyTorch nn.LSTM: U(-1/sqrt(H), 1/sqrt(H))."""
    H, D = HIDDEN_SIZE, INPUT_SIZE
    k = 1.0 / jnp.sqrt(jnp.float32(H))
    keys = jax.random.split(key, 8)

    def u(kk, shape):
        return jax.random.uniform(kk, shape, jnp.float32, -k, k)

    # PyTorch param shapes: weight_ih_l0 (4H, D), weight_hh_l0 (4H, H), biases (4H,)
    w_ih_l0 = u(keys[0], (4 * H, D))
    w_hh_l0 = u(keys[1], (4 * H, H))
    b_ih_l0 = u(keys[2], (4 * H,))
    b_hh_l0 = u(keys[3], (4 * H,))
    w_ih_l1 = u(keys[4], (4 * H, H))  # layer-1 input is hidden (=6)
    w_hh_l1 = u(keys[5], (4 * H, H))
    b_ih_l1 = u(keys[6], (4 * H,))
    b_hh_l1 = u(keys[7], (4 * H,))

    # Kernel packing: fused (in_dim, 4H) weights with gate column order (i, f, o, g)
    # (PyTorch row order is (i, f, g, o)); combined bias (1, 4H). The i/f/o columns are
    # pre-scaled by 0.5 so the kernel computes sigmoid as 0.5*tanh(z/2)+0.5 with one tanh.
    perm = jnp.array([0, 1, 3, 2])  # i, f, o, g

    def pack_w(w, in_dim):
        w4 = w.reshape(4, H, in_dim)[perm]                 # (4, H, in) reordered
        w4 = w4.at[:3].multiply(0.5)                       # pre-scale i, f, o
        return jnp.transpose(w4, (2, 0, 1)).reshape(in_dim, 4 * H)

    def pack_b(bi, bh):
        b4 = (bi + bh).reshape(4, H)[perm]
        b4 = b4.at[:3].multiply(0.5)
        return b4.reshape(1, 4 * H)

    kernel_params = (pack_w(w_ih_l0, D), pack_w(w_hh_l0, H), pack_b(b_ih_l0, b_hh_l0),
                     pack_w(w_ih_l1, H), pack_w(w_hh_l1, H), pack_b(b_ih_l1, b_hh_l1))
    raw_params = (w_ih_l0, w_hh_l0, b_ih_l0, b_hh_l0,
                  w_ih_l1, w_hh_l1, b_ih_l1, b_hh_l1)
    return kernel_params, raw_params


def reference_lstm(x_btd, raw_params):
    """Plain-JAX reference matching torch.nn.LSTM(6, 6, num_layers=2, batch_first=True)."""
    (w_ih_l0, w_hh_l0, b_ih_l0, b_hh_l0,
     w_ih_l1, w_hh_l1, b_ih_l1, b_hh_l1) = raw_params
    B, T, D = x_btd.shape
    H = HIDDEN_SIZE

    def cell(x_t, h, c, w_ih, w_hh, b_ih, b_hh):
        gates = x_t @ w_ih.T + b_ih + h @ w_hh.T + b_hh
        i = jax.nn.sigmoid(gates[:, 0 * H:1 * H])
        f = jax.nn.sigmoid(gates[:, 1 * H:2 * H])
        g = jnp.tanh(gates[:, 2 * H:3 * H])
        o = jax.nn.sigmoid(gates[:, 3 * H:4 * H])
        c_new = f * c + i * g
        h_new = o * jnp.tanh(c_new)
        return h_new, c_new

    def step(carry, x_t):
        h0, c0, h1, c1 = carry
        h0, c0 = cell(x_t, h0, c0, w_ih_l0, w_hh_l0, b_ih_l0, b_hh_l0)
        h1, c1 = cell(h0, h1, c1, w_ih_l1, w_hh_l1, b_ih_l1, b_hh_l1)
        return (h0, c0, h1, c1), h1

    z = jnp.zeros((B, H), jnp.float32)
    _, outs = lax.scan(step, (z, z, z, z), jnp.transpose(x_btd, (1, 0, 2)))
    return jnp.transpose(outs, (1, 0, 2))


if __name__ == "__main__":
    key = jax.random.PRNGKey(0)
    k_param, k_data1, k_data2 = jax.random.split(key, 3)

    kernel_params, raw_params = init_params(k_param)

    # Test 1: small sequence, single chunk.
    B, T = 2, 8
    x = jax.random.normal(k_data1, (B, T, INPUT_SIZE), jnp.float32)
    out = jax.block_until_ready(inertial_encoder_vinet(x, kernel_params))
    ref = reference_lstm(x, raw_params)
    assert out.shape == (B, T, HIDDEN_SIZE)
    assert jnp.allclose(out, ref, atol=2e-5, rtol=1e-5), (
        f"max abs err {jnp.max(jnp.abs(out - ref))}")

    # Test 2: multi-chunk + padding path (T not a multiple of the time chunk).
    B2, T2 = 2, 37
    x2 = jax.random.normal(k_data2, (B2, T2, INPUT_SIZE), jnp.float32)
    out2 = jax.block_until_ready(
        inertial_encoder_vinet(x2, kernel_params, time_chunk=16))
    ref2 = reference_lstm(x2, raw_params)
    assert out2.shape == (B2, T2, HIDDEN_SIZE)
    assert jnp.allclose(out2, ref2, atol=2e-5, rtol=1e-5), (
        f"max abs err {jnp.max(jnp.abs(out2 - ref2))}")

    print("KERNEL_OK")
</pallas_src>

<mosaic_0001>
module attributes {stable_mosaic.version = 11 : i64} {
  func.func @_lstm_kernel(%arg0: i32, %arg1: memref<8x2x6xf32, #tpu.memory_space<vmem>>, %arg2: memref<6x24xf32, #tpu.memory_space<vmem>>, %arg3: memref<6x24xf32, #tpu.memory_space<vmem>>, %arg4: memref<1x24xf32, #tpu.memory_space<vmem>>, %arg5: memref<6x24xf32, #tpu.memory_space<vmem>>, %arg6: memref<6x24xf32, #tpu.memory_space<vmem>>, %arg7: memref<1x24xf32, #tpu.memory_space<vmem>>, %arg8: memref<8x2x6xf32, #tpu.memory_space<vmem>>, %arg9: memref<2x6xf32, #tpu.memory_space<vmem>>, %arg10: memref<2x6xf32, #tpu.memory_space<vmem>>, %arg11: memref<2x6xf32, #tpu.memory_space<vmem>>, %arg12: memref<2x6xf32, #tpu.memory_space<vmem>>) attributes {dimension_semantics = [#tpu.dimension_semantics<arbitrary>], iteration_bounds = array<i64: 1>, scalar_prefetch = 0 : i64, scratch_operands = 4 : i64, tpu.core_type = #tpu.core_type<tc>, window_params = [{transform_indices = @transform_0, window_bounds = array<i64: 8, 2, 6>}, {pipeline_mode = #tpu.pipeline_mode<synchronous>, transform_indices = @transform_1, window_bounds = array<i64: 6, 24>}, {pipeline_mode = #tpu.pipeline_mode<synchronous>, transform_indices = @transform_2, window_bounds = array<i64: 6, 24>}, {pipeline_mode = #tpu.pipeline_mode<synchronous>, transform_indices = @transform_3, window_bounds = array<i64: 1, 24>}, {pipeline_mode = #tpu.pipeline_mode<synchronous>, transform_indices = @transform_4, window_bounds = array<i64: 6, 24>}, {pipeline_mode = #tpu.pipeline_mode<synchronous>, transform_indices = @transform_5, window_bounds = array<i64: 6, 24>}, {pipeline_mode = #tpu.pipeline_mode<synchronous>, transform_indices = @transform_6, window_bounds = array<i64: 1, 24>}, {transform_indices = @transform_7, window_bounds = array<i64: 8, 2, 6>}]} {
    %c0_i32 = arith.constant 0 : i32
    %0 = arith.cmpi eq, %arg0, %c0_i32 : i32
    %1 = arith.extui %0 : i1 to i32
    %c0_i32_0 = arith.constant 0 : i32
    %2 = arith.cmpi ne, %1, %c0_i32_0 : i32
    scf.if %2 {
      %cst_92 = arith.constant 0.000000e+00 : f32
      %1481 = vector.broadcast %cst_92 : f32 to vector<2x6xf32>
      %c0_93 = arith.constant 0 : index
      %c0_94 = arith.constant 0 : index
      %1482 = vector.load %arg9[%c0_93, %c0_94] : memref<2x6xf32, #tpu.memory_space<vmem>>, vector<2x6xf32>
      tpu.vector_store %arg9[%c0_93, %c0_94], %1481 {strides = array<i32>} : memref<2x6xf32, #tpu.memory_space<vmem>>, vector<2x6xf32>,
      %cst_95 = arith.constant 0.000000e+00 : f32
      %1483 = vector.broadcast %cst_95 : f32 to vector<2x6xf32>
      %c0_96 = arith.constant 0 : index
      %c0_97 = arith.constant 0 : index
      %1484 = vector.load %arg10[%c0_96, %c0_97] : memref<2x6xf32, #tpu.memory_space<vmem>>, vector<2x6xf32>
      tpu.vector_store %arg10[%c0_96, %c0_97], %1483 {strides = array<i32>} : memref<2x6xf32, #tpu.memory_space<vmem>>, vector<2x6xf32>,
      %cst_98 = arith.constant 0.000000e+00 : f32
      %1485 = vector.broadcast %cst_98 : f32 to vector<2x6xf32>
      %c0_99 = arith.constant 0 : index
      %c0_100 = arith.constant 0 : index
      %1486 = vector.load %arg11[%c0_99, %c0_100] : memref<2x6xf32, #tpu.memory_space<vmem>>, vector<2x6xf32>
      tpu.vector_store %arg11[%c0_99, %c0_100], %1485 {strides = array<i32>} : memref<2x6xf32, #tpu.memory_space<vmem>>, vector<2x6xf32>,
      %cst_101 = arith.constant 0.000000e+00 : f32
      %1487 = vector.broadcast %cst_101 : f32 to vector<2x6xf32>
      %c0_102 = arith.constant 0 : index
      %c0_103 = arith.constant 0 : index
      %1488 = vector.load %arg12[%c0_102, %c0_103] : memref<2x6xf32, #tpu.memory_space<vmem>>, vector<2x6xf32>
      tpu.vector_store %arg12[%c0_102, %c0_103], %1487 {strides = array<i32>} : memref<2x6xf32, #tpu.memory_space<vmem>>, vector<2x6xf32>,
    } else {
    }
    %c0 = arith.constant 0 : index
    %c0_1 = arith.constant 0 : index
    %3 = vector.load %arg2[%c0, %c0_1] : memref<6x24xf32, #tpu.memory_space<vmem>>, vector<6x24xf32>
    %c0_2 = arith.constant 0 : index
    %c0_3 = arith.constant 0 : index
    %4 = vector.load %arg3[%c0_2, %c0_3] : memref<6x24xf32, #tpu.memory_space<vmem>>, vector<6x24xf32>
    %c0_4 = arith.constant 0 : index
    %c0_5 = arith.constant 0 : index
    %5 = vector.load %arg4[%c0_4, %c0_5] : memref<1x24xf32, #tpu.memory_space<vmem>>, vector<1x24xf32>
    %c0_6 = arith.constant 0 : index
    %c0_7 = arith.constant 0 : index
    %6 = vector.load %arg5[%c0_6, %c0_7] : memref<6x24xf32, #tpu.memory_space<vmem>>, vector<6x24xf32>
    %c0_8 = arith.constant 0 : index
    %c0_9 = arith.constant 0 : index
    %7 = vector.load %arg6[%c0_8, %c0_9] : memref<6x24xf32, #tpu.memory_space<vmem>>, vector<6x24xf32>
    %c0_10 = arith.constant 0 : index
    %c0_11 = arith.constant 0 : index
    %8 = vector.load %arg7[%c0_10, %c0_11] : memref<1x24xf32, #tpu.memory_space<vmem>>, vector<1x24xf32>
    %c0_12 = arith.constant 0 : index
    %c0_13 = arith.constant 0 : index
    %9 = vector.load %arg9[%c0_12, %c0_13] : memref<2x6xf32, #tpu.memory_space<vmem>>, vector<2x6xf32>
    %c0_14 = arith.constant 0 : index
    %c0_15 = arith.constant 0 : index
    %10 = vector.load %arg10[%c0_14, %c0_15] : memref<2x6xf32, #tpu.memory_space<vmem>>, vector<2x6xf32>
    %c0_16 = arith.constant 0 : index
    %c0_17 = arith.constant 0 : index
    %11 = vector.load %arg11[%c0_16, %c0_17] : memref<2x6xf32, #tpu.memory_space<vmem>>, vector<2x6xf32>
    %c0_18 = arith.constant 0 : index
    %c0_19 = arith.constant 0 : index
    %12 = vector.load %arg12[%c0_18, %c0_19] : memref<2x6xf32, #tpu.memory_space<vmem>>, vector<2x6xf32>
    %c0_i32_20 = arith.constant 0 : i32
    %13 = arith.index_cast %c0_i32_20 : i32 to index
    %c0_21 = arith.constant 0 : index
    %c0_22 = arith.constant 0 : index
    %14 = vector.load %arg1[%13, %c0_21, %c0_22] : memref<8x2x6xf32, #tpu.memory_space<vmem>>, vector<1x2x6xf32>
    %15 = vector.shape_cast %14 : vector<1x2x6xf32> to vector<2x6xf32>
    %16 = vector.extract_strided_slice %15 {offsets = [0, 0], sizes = [2, 1], strides = [1, 1]} : vector<2x6xf32> to vector<2x1xf32>
    %17 = vector.extract_strided_slice %3 {offsets = [0, 0], sizes = [1, 24], strides = [1, 1]} : vector<6x24xf32> to vector<1x24xf32>
    %18 = vector.broadcast %16 : vector<2x1xf32> to vector<2x24xf32>
    %19 = vector.broadcast %17 : vector<1x24xf32> to vector<2x24xf32>
    %20 = arith.mulf %18, %19 : vector<2x24xf32>
    %21 = vector.extract_strided_slice %15 {offsets = [0, 1], sizes = [2, 1], strides = [1, 1]} : vector<2x6xf32> to vector<2x1xf32>
    %22 = vector.extract_strided_slice %3 {offsets = [1, 0], sizes = [1, 24], strides = [1, 1]} : vector<6x24xf32> to vector<1x24xf32>
    %23 = vector.broadcast %21 : vector<2x1xf32> to vector<2x24xf32>
    %24 = vector.broadcast %22 : vector<1x24xf32> to vector<2x24xf32>
    %25 = arith.mulf %23, %24 : vector<2x24xf32>
    %26 = arith.addf %20, %25 : vector<2x24xf32>
    %27 = vector.extract_strided_slice %15 {offsets = [0, 2], sizes = [2, 1], strides = [1, 1]} : vector<2x6xf32> to vector<2x1xf32>
    %28 = vector.extract_strided_slice %3 {offsets = [2, 0], sizes = [1, 24], strides = [1, 1]} : vector<6x24xf32> to vector<1x24xf32>
    %29 = vector.broadcast %27 : vector<2x1xf32> to vector<2x24xf32>
    %30 = vector.broadcast %28 : vector<1x24xf32> to vector<2x24xf32>
    %31 = arith.mulf %29, %30 : vector<2x24xf32>
    %32 = arith.addf %26, %31 : vector<2x24xf32>
    %33 = vector.extract_strided_slice %15 {offsets = [0, 3], sizes = [2, 1], strides = [1, 1]} : vector<2x6xf32> to vector<2x1xf32>
    %34 = vector.extract_strided_slice %3 {offsets = [3, 0], sizes = [1, 24], strides = [1, 1]} : vector<6x24xf32> to vector<1x24xf32>
    %35 = vector.broadcast %33 : vector<2x1xf32> to vector<2x24xf32>
    %36 = vector.broadcast %34 : vector<1x24xf32> to vector<2x24xf32>
    %37 = arith.mulf %35, %36 : vector<2x24xf32>
    %38 = arith.addf %32, %37 : vector<2x24xf32>
    %39 = vector.extract_strided_slice %15 {offsets = [0, 4], sizes = [2, 1], strides = [1, 1]} : vector<2x6xf32> to vector<2x1xf32>
    %40 = vector.extract_strided_slice %3 {offsets = [4, 0], sizes = [1, 24], strides = [1, 1]} : vector<6x24xf32> to vector<1x24xf32>
    %41 = vector.broadcast %39 : vector<2x1xf32> to vector<2x24xf32>
    %42 = vector.broadcast %40 : vector<1x24xf32> to vector<2x24xf32>
    %43 = arith.mulf %41, %42 : vector<2x24xf32>
    %44 = arith.addf %38, %43 : vector<2x24xf32>
    %45 = vector.extract_strided_slice %15 {offsets = [0, 5], sizes = [2, 1], strides = [1, 1]} : vector<2x6xf32> to vector<2x1xf32>
    %46 = vector.extract_strided_slice %3 {offsets = [5, 0], sizes = [1, 24], strides = [1, 1]} : vector<6x24xf32> to vector<1x24xf32>
    %47 = vector.broadcast %45 : vector<2x1xf32> to vector<2x24xf32>
    %48 = vector.broadcast %46 : vector<1x24xf32> to vector<2x24xf32>
    %49 = arith.mulf %47, %48 : vector<2x24xf32>
    %50 = arith.addf %44, %49 : vector<2x24xf32>
    %51 = vector.broadcast %5 : vector<1x24xf32> to vector<2x24xf32>
    %52 = arith.addf %51, %50 : vector<2x24xf32>
    %53 = vector.extract_strided_slice %9 {offsets = [0, 0], sizes = [2, 1], strides = [1, 1]} : vector<2x6xf32> to vector<2x1xf32>
    %54 = vector.extract_strided_slice %4 {offsets = [0, 0], sizes = [1, 24], strides = [1, 1]} : vector<6x24xf32> to vector<1x24xf32>
    %55 = vector.broadcast %53 : vector<2x1xf32> to vector<2x24xf32>
    %56 = vector.broadcast %54 : vector<1x24xf32> to vector<2x24xf32>
    %57 = arith.mulf %55, %56 : vector<2x24xf32>
    %58 = vector.extract_strided_slice %9 {offsets = [0, 1], sizes = [2, 1], strides = [1, 1]} : vector<2x6xf32> to vector<2x1xf32>
    %59 = vector.extract_strided_slice %4 {offsets = [1, 0], sizes = [1, 24], strides = [1, 1]} : vector<6x24xf32> to vector<1x24xf32>
    %60 = vector.broadcast %58 : vector<2x1xf32> to vector<2x24xf32>
    %61 = vector.broadcast %59 : vector<1x24xf32> to vector<2x24xf32>
    %62 = arith.mulf %60, %61 : vector<2x24xf32>
    %63 = arith.addf %57, %62 : vector<2x24xf32>
    %64 = vector.extract_strided_slice %9 {offsets = [0, 2], sizes = [2, 1], strides = [1, 1]} : vector<2x6xf32> to vector<2x1xf32>
    %65 = vector.extract_strided_slice %4 {offsets = [2, 0], sizes = [1, 24], strides = [1, 1]} : vector<6x24xf32> to vector<1x24xf32>
    %66 = vector.broadcast %64 : vector<2x1xf32> to vector<2x24xf32>
    %67 = vector.broadcast %65 : vector<1x24xf32> to vector<2x24xf32>
    %68 = arith.mulf %66, %67 : vector<2x24xf32>
    %69 = arith.addf %63, %68 : vector<2x24xf32>
    %70 = vector.extract_strided_slice %9 {offsets = [0, 3], sizes = [2, 1], strides = [1, 1]} : vector<2x6xf32> to vector<2x1xf32>
    %71 = vector.extract_strided_slice %4 {offsets = [3, 0], sizes = [1, 24], strides = [1, 1]} : vector<6x24xf32> to vector<1x24xf32>
    %72 = vector.broadcast %70 : vector<2x1xf32> to vector<2x24xf32>
    %73 = vector.broadcast %71 : vector<1x24xf32> to vector<2x24xf32>
    %74 = arith.mulf %72, %73 : vector<2x24xf32>
    %75 = arith.addf %69, %74 : vector<2x24xf32>
    %76 = vector.extract_strided_slice %9 {offsets = [0, 4], sizes = [2, 1], strides = [1, 1]} : vector<2x6xf32> to vector<2x1xf32>
    %77 = vector.extract_strided_slice %4 {offsets = [4, 0], sizes = [1, 24], strides = [1, 1]} : vector<6x24xf32> to vector<1x24xf32>
    %78 = vector.broadcast %76 : vector<2x1xf32> to vector<2x24xf32>
    %79 = vector.broadcast %77 : vector<1x24xf32> to vector<2x24xf32>
    %80 = arith.mulf %78, %79 : vector<2x24xf32>
    %81 = arith.addf %75, %80 : vector<2x24xf32>
    %82 = vector.extract_strided_slice %9 {offsets = [0, 5], sizes = [2, 1], strides = [1, 1]} : vector<2x6xf32> to vector<2x1xf32>
    %83 = vector.extract_strided_slice %4 {offsets = [5, 0], sizes = [1, 24], strides = [1, 1]} : vector<6x24xf32> to vector<1x24xf32>
    %84 = vector.broadcast %82 : vector<2x1xf32> to vector<2x24xf32>
    %85 = vector.broadcast %83 : vector<1x24xf32> to vector<2x24xf32>
    %86 = arith.mulf %84, %85 : vector<2x24xf32>
    %87 = arith.addf %81, %86 : vector<2x24xf32>
    %88 = arith.addf %52, %87 : vector<2x24xf32>
    %89 = math.tanh %88 : vector<2x24xf32>
    %90 = vector.extract_strided_slice %89 {offsets = [0, 0], sizes = [2, 18], strides = [1, 1]} : vector<2x24xf32> to vector<2x18xf32>
    %cst = arith.constant 5.000000e-01 : f32
    %91 = vector.broadcast %cst : f32 to vector<2x18xf32>
    %92 = arith.mulf %91, %90 : vector<2x18xf32>
    %cst_23 = arith.constant 5.000000e-01 : f32
    %93 = vector.broadcast %cst_23 : f32 to vector<2x18xf32>
    %94 = arith.addf %92, %93 : vector<2x18xf32>
    %95 = vector.extract_strided_slice %94 {offsets = [0, 0], sizes = [2, 6], strides = [1, 1]} : vector<2x18xf32> to vector<2x6xf32>
    %96 = vector.extract_strided_slice %94 {offsets = [0, 6], sizes = [2, 6], strides = [1, 1]} : vector<2x18xf32> to vector<2x6xf32>
    %97 = vector.extract_strided_slice %94 {offsets = [0, 12], sizes = [2, 6], strides = [1, 1]} : vector<2x18xf32> to vector<2x6xf32>
    %98 = vector.extract_strided_slice %89 {offsets = [0, 18], sizes = [2, 6], strides = [1, 1]} : vector<2x24xf32> to vector<2x6xf32>
    %99 = arith.mulf %96, %10 : vector<2x6xf32>
    %100 = arith.mulf %95, %98 : vector<2x6xf32>
    %101 = arith.addf %99, %100 : vector<2x6xf32>
    %102 = math.tanh %101 : vector<2x6xf32>
    %103 = arith.mulf %97, %102 : vector<2x6xf32>
    %104 = vector.extract_strided_slice %103 {offsets = [0, 0], sizes = [2, 1], strides = [1, 1]} : vector<2x6xf32> to vector<2x1xf32>
    %105 = vector.extract_strided_slice %6 {offsets = [0, 0], sizes = [1, 24], strides = [1, 1]} : vector<6x24xf32> to vector<1x24xf32>
    %106 = vector.broadcast %104 : vector<2x1xf32> to vector<2x24xf32>
    %107 = vector.broadcast %105 : vector<1x24xf32> to vector<2x24xf32>
    %108 = arith.mulf %106, %107 : vector<2x24xf32>
    %109 = vector.extract_strided_slice %103 {offsets = [0, 1], sizes = [2, 1], strides = [1, 1]} : vector<2x6xf32> to vector<2x1xf32>
    %110 = vector.extract_strided_slice %6 {offsets = [1, 0], sizes = [1, 24], strides = [1, 1]} : vector<6x24xf32> to vector<1x24xf32>
    %111 = vector.broadcast %109 : vector<2x1xf32> to vector<2x24xf32>
    %112 = vector.broadcast %110 : vector<1x24xf32> to vector<2x24xf32>
    %113 = arith.mulf %111, %112 : vector<2x24xf32>
    %114 = arith.addf %108, %113 : vector<2x24xf32>
    %115 = vector.extract_strided_slice %103 {offsets = [0, 2], sizes = [2, 1], strides = [1, 1]} : vector<2x6xf32> to vector<2x1xf32>
    %116 = vector.extract_strided_slice %6 {offsets = [2, 0], sizes = [1, 24], strides = [1, 1]} : vector<6x24xf32> to vector<1x24xf32>
    %117 = vector.broadcast %115 : vector<2x1xf32> to vector<2x24xf32>
    %118 = vector.broadcast %116 : vector<1x24xf32> to vector<2x24xf32>
    %119 = arith.mulf %117, %118 : vector<2x24xf32>
    %120 = arith.addf %114, %119 : vector<2x24xf32>
    %121 = vector.extract_strided_slice %103 {offsets = [0, 3], sizes = [2, 1], strides = [1, 1]} : vector<2x6xf32> to vector<2x1xf32>
    %122 = vector.extract_strided_slice %6 {offsets = [3, 0], sizes = [1, 24], strides = [1, 1]} : vector<6x24xf32> to vector<1x24xf32>
    %123 = vector.broadcast %121 : vector<2x1xf32> to vector<2x24xf32>
    %124 = vector.broadcast %122 : vector<1x24xf32> to vector<2x24xf32>
    %125 = arith.mulf %123, %124 : vector<2x24xf32>
    %126 = arith.addf %120, %125 : vector<2x24xf32>
    %127 = vector.extract_strided_slice %103 {offsets = [0, 4], sizes = [2, 1], strides = [1, 1]} : vector<2x6xf32> to vector<2x1xf32>
    %128 = vector.extract_strided_slice %6 {offsets = [4, 0], sizes = [1, 24], strides = [1, 1]} : vector<6x24xf32> to vector<1x24xf32>
    %129 = vector.broadcast %127 : vector<2x1xf32> to vector<2x24xf32>
    %130 = vector.broadcast %128 : vector<1x24xf32> to vector<2x24xf32>
    %131 = arith.mulf %129, %130 : vector<2x24xf32>
    %132 = arith.addf %126, %131 : vector<2x24xf32>
    %133 = vector.extract_strided_slice %103 {offsets = [0, 5], sizes = [2, 1], strides = [1, 1]} : vector<2x6xf32> to vector<2x1xf32>
    %134 = vector.extract_strided_slice %6 {offsets = [5, 0], sizes = [1, 24], strides = [1, 1]} : vector<6x24xf32> to vector<1x24xf32>
    %135 = vector.broadcast %133 : vector<2x1xf32> to vector<2x24xf32>
    %136 = vector.broadcast %134 : vector<1x24xf32> to vector<2x24xf32>
    %137 = arith.mulf %135, %136 : vector<2x24xf32>
    %138 = arith.addf %132, %137 : vector<2x24xf32>
    %139 = vector.broadcast %8 : vector<1x24xf32> to vector<2x24xf32>
    %140 = arith.addf %139, %138 : vector<2x24xf32>
    %141 = vector.extract_strided_slice %11 {offsets = [0, 0], sizes = [2, 1], strides = [1, 1]} : vector<2x6xf32> to vector<2x1xf32>
    %142 = vector.extract_strided_slice %7 {offsets = [0, 0], sizes = [1, 24], strides = [1, 1]} : vector<6x24xf32> to vector<1x24xf32>
    %143 = vector.broadcast %141 : vector<2x1xf32> to vector<2x24xf32>
    %144 = vector.broadcast %142 : vector<1x24xf32> to vector<2x24xf32>
    %145 = arith.mulf %143, %144 : vector<2x24xf32>
    %146 = vector.extract_strided_slice %11 {offsets = [0, 1], sizes = [2, 1], strides = [1, 1]} : vector<2x6xf32> to vector<2x1xf32>
    %147 = vector.extract_strided_slice %7 {offsets = [1, 0], sizes = [1, 24], strides = [1, 1]} : vector<6x24xf32> to vector<1x24xf32>
    %148 = vector.broadcast %146 : vector<2x1xf32> to vector<2x24xf32>
    %149 = vector.broadcast %147 : vector<1x24xf32> to vector<2x24xf32>
    %150 = arith.mulf %148, %149 : vector<2x24xf32>
    %151 = arith.addf %145, %150 : vector<2x24xf32>
    %152 = vector.extract_strided_slice %11 {offsets = [0, 2], sizes = [2, 1], strides = [1, 1]} : vector<2x6xf32> to vector<2x1xf32>
    %153 = vector.extract_strided_slice %7 {offsets = [2, 0], sizes = [1, 24], strides = [1, 1]} : vector<6x24xf32> to vector<1x24xf32>
    %154 = vector.broadcast %152 : vector<2x1xf32> to vector<2x24xf32>
    %155 = vector.broadcast %153 : vector<1x24xf32> to vector<2x24xf32>
    %156 = arith.mulf %154, %155 : vector<2x24xf32>
    %157 = arith.addf %151, %156 : vector<2x24xf32>
    %158 = vector.extract_strided_slice %11 {offsets = [0, 3], sizes = [2, 1], strides = [1, 1]} : vector<2x6xf32> to vector<2x1xf32>
    %159 = vector.extract_strided_slice %7 {offsets = [3, 0], sizes = [1, 24], strides = [1, 1]} : vector<6x24xf32> to vector<1x24xf32>
    %160 = vector.broadcast %158 : vector<2x1xf32> to vector<2x24xf32>
    %161 = vector.broadcast %159 : vector<1x24xf32> to vector<2x24xf32>
    %162 = arith.mulf %160, %161 : vector<2x24xf32>
    %163 = arith.addf %157, %162 : vector<2x24xf32>
    %164 = vector.extract_strided_slice %11 {offsets = [0, 4], sizes = [2, 1], strides = [1, 1]} : vector<2x6xf32> to vector<2x1xf32>
    %165 = vector.extract_strided_slice %7 {offsets = [4, 0], sizes = [1, 24], strides = [1, 1]} : vector<6x24xf32> to vector<1x24xf32>
    %166 = vector.broadcast %164 : vector<2x1xf32> to vector<2x24xf32>
    %167 = vector.broadcast %165 : vector<1x24xf32> to vector<2x24xf32>
    %168 = arith.mulf %166, %167 : vector<2x24xf32>
    %169 = arith.addf %163, %168 : vector<2x24xf32>
    %170 = vector.extract_strided_slice %11 {offsets = [0, 5], sizes = [2, 1], strides = [1, 1]} : vector<2x6xf32> to vector<2x1xf32>
    %171 = vector.extract_strided_slice %7 {offsets = [5, 0], sizes = [1, 24], strides = [1, 1]} : vector<6x24xf32> to vector<1x24xf32>
    %172 = vector.broadcast %170 : vector<2x1xf32> to vector<2x24xf32>
    %173 = vector.broadcast %171 : vector<1x24xf32> to vector<2x24xf32>
    %174 = arith.mulf %172, %173 : vector<2x24xf32>
    %175 = arith.addf %169, %174 : vector<2x24xf32>
    %176 = arith.addf %140, %175 : vector<2x24xf32>
    %177 = math.tanh %176 : vector<2x24xf32>
    %178 = vector.extract_strided_slice %177 {offsets = [0, 0], sizes = [2, 18], strides = [1, 1]} : vector<2x24xf32> to vector<2x18xf32>
    %cst_24 = arith.constant 5.000000e-01 : f32
    %179 = vector.broadcast %cst_24 : f32 to vector<2x18xf32>
    %180 = arith.mulf %179, %178 : vector<2x18xf32>
    %cst_25 = arith.constant 5.000000e-01 : f32
    %181 = vector.broadcast %cst_25 : f32 to vector<2x18xf32>
    %182 = arith.addf %180, %181 : vector<2x18xf32>
    %183 = vector.extract_strided_slice %182 {offsets = [0, 0], sizes = [2, 6], strides = [1, 1]} : vector<2x18xf32> to vector<2x6xf32>
    %184 = vector.extract_strided_slice %182 {offsets = [0, 6], sizes = [2, 6], strides = [1, 1]} : vector<2x18xf32> to vector<2x6xf32>
    %185 = vector.extract_strided_slice %182 {offsets = [0, 12], sizes = [2, 6], strides = [1, 1]} : vector<2x18xf32> to vector<2x6xf32>
    %186 = vector.extract_strided_slice %177 {offsets = [0, 18], sizes = [2, 6], strides = [1, 1]} : vector<2x24xf32> to vector<2x6xf32>
    %187 = arith.mulf %184, %12 : vector<2x6xf32>
    %188 = arith.mulf %183, %186 : vector<2x6xf32>
    %189 = arith.addf %187, %188 : vector<2x6xf32>
    %190 = math.tanh %189 : vector<2x6xf32>
    %191 = arith.mulf %185, %190 : vector<2x6xf32>
    %192 = arith.index_cast %c0_i32_20 : i32 to index
    %c0_26 = arith.constant 0 : index
    %c0_27 = arith.constant 0 : index
    %193 = vector.load %arg8[%192, %c0_26, %c0_27] : memref<8x2x6xf32, #tpu.memory_space<vmem>>, vector<1x2x6xf32>
    %194 = vector.shape_cast %193 : vector<1x2x6xf32> to vector<2x6xf32>
    %195 = vector.shape_cast %191 : vector<2x6xf32> to vector<1x2x6xf32>
    tpu.vector_store %arg8[%192, %c0_26, %c0_27], %195 {strides = array<i32>} : memref<8x2x6xf32, #tpu.memory_space<vmem>>, vector<1x2x6xf32>,
    %c1_i32 = arith.constant 1 : i32
    %196 = arith.index_cast %c1_i32 : i32 to index
    %c0_28 = arith.constant 0 : index
    %c0_29 = arith.constant 0 : index
    %197 = vector.load %arg1[%196, %c0_28, %c0_29] : memref<8x2x6xf32, #tpu.memory_space<vmem>>, vector<1x2x6xf32>
    %198 = vector.shape_cast %197 : vector<1x2x6xf32> to vector<2x6xf32>
    %199 = vector.extract_strided_slice %198 {offsets = [0, 0], sizes = [2, 1], strides = [1, 1]} : vector<2x6xf32> to vector<2x1xf32>
    %200 = vector.extract_strided_slice %3 {offsets = [0, 0], sizes = [1, 24], strides = [1, 1]} : vector<6x24xf32> to vector<1x24xf32>
    %201 = vector.broadcast %199 : vector<2x1xf32> to vector<2x24xf32>
    %202 = vector.broadcast %200 : vector<1x24xf32> to vector<2x24xf32>
    %203 = arith.mulf %201, %202 : vector<2x24xf32>
    %204 = vector.extract_strided_slice %198 {offsets = [0, 1], sizes = [2, 1], strides = [1, 1]} : vector<2x6xf32> to vector<2x1xf32>
    %205 = vector.extract_strided_slice %3 {offsets = [1, 0], sizes = [1, 24], strides = [1, 1]} : vector<6x24xf32> to vector<1x24xf32>
    %206 = vector.broadcast %204 : vector<2x1xf32> to vector<2x24xf32>
    %207 = vector.broadcast %205 : vector<1x24xf32> to vector<2x24xf32>
    %208 = arith.mulf %206, %207 : vector<2x24xf32>
    %209 = arith.addf %203, %208 : vector<2x24xf32>
    %210 = vector.extract_strided_slice %198 {offsets = [0, 2], sizes = [2, 1], strides = [1, 1]} : vector<2x6xf32> to vector<2x1xf32>
    %211 = vector.extract_strided_slice %3 {offsets = [2, 0], sizes = [1, 24], strides = [1, 1]} : vector<6x24xf32> to vector<1x24xf32>
    %212 = vector.broadcast %210 : vector<2x1xf32> to vector<2x24xf32>
    %213 = vector.broadcast %211 : vector<1x24xf32> to vector<2x24xf32>
    %214 = arith.mulf %212, %213 : vector<2x24xf32>
    %215 = arith.addf %209, %214 : vector<2x24xf32>
    %216 = vector.extract_strided_slice %198 {offsets = [0, 3], sizes = [2, 1], strides = [1, 1]} : vector<2x6xf32> to vector<2x1xf32>
    %217 = vector.extract_strided_slice %3 {offsets = [3, 0], sizes = [1, 24], strides = [1, 1]} : vector<6x24xf32> to vector<1x24xf32>
    %218 = vector.broadcast %216 : vector<2x1xf32> to vector<2x24xf32>
    %219 = vector.broadcast %217 : vector<1x24xf32> to vector<2x24xf32>
    %220 = arith.mulf %218, %219 : vector<2x24xf32>
    %221 = arith.addf %215, %220 : vector<2x24xf32>
    %222 = vector.extract_strided_slice %198 {offsets = [0, 4], sizes = [2, 1], strides = [1, 1]} : vector<2x6xf32> to vector<2x1xf32>
    %223 = vector.extract_strided_slice %3 {offsets = [4, 0], sizes = [1, 24], strides = [1, 1]} : vector<6x24xf32> to vector<1x24xf32>
    %224 = vector.broadcast %222 : vector<2x1xf32> to vector<2x24xf32>
    %225 = vector.broadcast %223 : vector<1x24xf32> to vector<2x24xf32>
    %226 = arith.mulf %224, %225 : vector<2x24xf32>
    %227 = arith.addf %221, %226 : vector<2x24xf32>
    %228 = vector.extract_strided_slice %198 {offsets = [0, 5], sizes = [2, 1], strides = [1, 1]} : vector<2x6xf32> to vector<2x1xf32>
    %229 = vector.extract_strided_slice %3 {offsets = [5, 0], sizes = [1, 24], strides = [1, 1]} : vector<6x24xf32> to vector<1x24xf32>
    %230 = vector.broadcast %228 : vector<2x1xf32> to vector<2x24xf32>
    %231 = vector.broadcast %229 : vector<1x24xf32> to vector<2x24xf32>
    %232 = arith.mulf %230, %231 : vector<2x24xf32>
    %233 = arith.addf %227, %232 : vector<2x24xf32>
    %234 = vector.broadcast %5 : vector<1x24xf32> to vector<2x24xf32>
    %235 = arith.addf %234, %233 : vector<2x24xf32>
    %236 = vector.extract_strided_slice %103 {offsets = [0, 0], sizes = [2, 1], strides = [1, 1]} : vector<2x6xf32> to vector<2x1xf32>
    %237 = vector.extract_strided_slice %4 {offsets = [0, 0], sizes = [1, 24], strides = [1, 1]} : vector<6x24xf32> to vector<1x24xf32>
    %238 = vector.broadcast %236 : vector<2x1xf32> to vector<2x24xf32>
    %239 = vector.broadcast %237 : vector<1x24xf32> to vector<2x24xf32>
    %240 = arith.mulf %238, %239 : vector<2x24xf32>
    %241 = vector.extract_strided_slice %103 {offsets = [0, 1], sizes = [2, 1], strides = [1, 1]} : vector<2x6xf32> to vector<2x1xf32>
    %242 = vector.extract_strided_slice %4 {offsets = [1, 0], sizes = [1, 24], strides = [1, 1]} : vector<6x24xf32> to vector<1x24xf32>
    %243 = vector.broadcast %241 : vector<2x1xf32> to vector<2x24xf32>
    %244 = vector.broadcast %242 : vector<1x24xf32> to vector<2x24xf32>
    %245 = arith.mulf %243, %244 : vector<2x24xf32>
    %246 = arith.addf %240, %245 : vector<2x24xf32>
    %247 = vector.extract_strided_slice %103 {offsets = [0, 2], sizes = [2, 1], strides = [1, 1]} : vector<2x6xf32> to vector<2x1xf32>
    %248 = vector.extract_strided_slice %4 {offsets = [2, 0], sizes = [1, 24], strides = [1, 1]} : vector<6x24xf32> to vector<1x24xf32>
    %249 = vector.broadcast %247 : vector<2x1xf32> to vector<2x24xf32>
    %250 = vector.broadcast %248 : vector<1x24xf32> to vector<2x24xf32>
    %251 = arith.mulf %249, %250 : vector<2x24xf32>
    %252 = arith.addf %246, %251 : vector<2x24xf32>
    %253 = vector.extract_strided_slice %103 {offsets = [0, 3], sizes = [2, 1], strides = [1, 1]} : vector<2x6xf32> to vector<2x1xf32>
    %254 = vector.extract_strided_slice %4 {offsets = [3, 0], sizes = [1, 24], strides = [1, 1]} : vector<6x24xf32> to vector<1x24xf32>
    %255 = vector.broadcast %253 : vector<2x1xf32> to vector<2x24xf32>
    %256 = vector.broadcast %254 : vector<1x24xf32> to vector<2x24xf32>
    %257 = arith.mulf %255, %256 : vector<2x24xf32>
    %258 = arith.addf %252, %257 : vector<2x24xf32>
    %259 = vector.extract_strided_slice %103 {offsets = [0, 4], sizes = [2, 1], strides = [1, 1]} : vector<2x6xf32> to vector<2x1xf32>
    %260 = vector.extract_strided_slice %4 {offsets = [4, 0], sizes = [1, 24], strides = [1, 1]} : vector<6x24xf32> to vector<1x24xf32>
    %261 = vector.broadcast %259 : vector<2x1xf32> to vector<2x24xf32>
    %262 = vector.broadcast %260 : vector<1x24xf32> to vector<2x24xf32>
    %263 = arith.mulf %261, %262 : vector<2x24xf32>
    %264 = arith.addf %258, %263 : vector<2x24xf32>
    %265 = vector.extract_strided_slice %103 {offsets = [0, 5], sizes = [2, 1], strides = [1, 1]} : vector<2x6xf32> to vector<2x1xf32>
    %266 = vector.extract_strided_slice %4 {offsets = [5, 0], sizes = [1, 24], strides = [1, 1]} : vector<6x24xf32> to vector<1x24xf32>
    %267 = vector.broadcast %265 : vector<2x1xf32> to vector<2x24xf32>
    %268 = vector.broadcast %266 : vector<1x24xf32> to vector<2x24xf32>
    %269 = arith.mulf %267, %268 : vector<2x24xf32>
    %270 = arith.addf %264, %269 : vector<2x24xf32>
    %271 = arith.addf %235, %270 : vector<2x24xf32>
    %272 = math.tanh %271 : vector<2x24xf32>
    %273 = vector.extract_strided_slice %272 {offsets = [0, 0], sizes = [2, 18], strides = [1, 1]} : vector<2x24xf32> to vector<2x18xf32>
    %cst_30 = arith.constant 5.000000e-01 : f32
    %274 = vector.broadcast %cst_30 : f32 to vector<2x18xf32>
    %275 = arith.mulf %274, %273 : vector<2x18xf32>
    %cst_31 = arith.constant 5.000000e-01 : f32
    %276 = vector.broadcast %cst_31 : f32 to vector<2x18xf32>
    %277 = arith.addf %275, %276 : vector<2x18xf32>
    %278 = vector.extract_strided_slice %277 {offsets = [0, 0], sizes = [2, 6], strides = [1, 1]} : vector<2x18xf32> to vector<2x6xf32>
    %279 = vector.extract_strided_slice %277 {offsets = [0, 6], sizes = [2, 6], strides = [1, 1]} : vector<2x18xf32> to vector<2x6xf32>
    %280 = vector.extract_strided_slice %277 {offsets = [0, 12], sizes = [2, 6], strides = [1, 1]} : vector<2x18xf32> to vector<2x6xf32>
    %281 = vector.extract_strided_slice %272 {offsets = [0, 18], sizes = [2, 6], strides = [1, 1]} : vector<2x24xf32> to vector<2x6xf32>
    %282 = arith.mulf %279, %101 : vector<2x6xf32>
    %283 = arith.mulf %278, %281 : vector<2x6xf32>
    %284 = arith.addf %282, %283 : vector<2x6xf32>
    %285 = math.tanh %284 : vector<2x6xf32>
    %286 = arith.mulf %280, %285 : vector<2x6xf32>
    %287 = vector.extract_strided_slice %286 {offsets = [0, 0], sizes = [2, 1], strides = [1, 1]} : vector<2x6xf32> to vector<2x1xf32>
    %288 = vector.extract_strided_slice %6 {offsets = [0, 0], sizes = [1, 24], strides = [1, 1]} : vector<6x24xf32> to vector<1x24xf32>
    %289 = vector.broadcast %287 : vector<2x1xf32> to vector<2x24xf32>
    %290 = vector.broadcast %288 : vector<1x24xf32> to vector<2x24xf32>
    %291 = arith.mulf %289, %290 : vector<2x24xf32>
    %292 = vector.extract_strided_slice %286 {offsets = [0, 1], sizes = [2, 1], strides = [1, 1]} : vector<2x6xf32> to vector<2x1xf32>
    %293 = vector.extract_strided_slice %6 {offsets = [1, 0], sizes = [1, 24], strides = [1, 1]} : vector<6x24xf32> to vector<1x24xf32>
    %294 = vector.broadcast %292 : vector<2x1xf32> to vector<2x24xf32>
    %295 = vector.broadcast %293 : vector<1x24xf32> to vector<2x24xf32>
    %296 = arith.mulf %294, %295 : vector<2x24xf32>
    %297 = arith.addf %291, %296 : vector<2x24xf32>
    %298 = vector.extract_strided_slice %286 {offsets = [0, 2], sizes = [2, 1], strides = [1, 1]} : vector<2x6xf32> to vector<2x1xf32>
    %299 = vector.extract_strided_slice %6 {offsets = [2, 0], sizes = [1, 24], strides = [1, 1]} : vector<6x24xf32> to vector<1x24xf32>
    %300 = vector.broadcast %298 : vector<2x1xf32> to vector<2x24xf32>
    %301 = vector.broadcast %299 : vector<1x24xf32> to vector<2x24xf32>
    %302 = arith.mulf %300, %301 : vector<2x24xf32>
    %303 = arith.addf %297, %302 : vector<2x24xf32>
    %304 = vector.extract_strided_slice %286 {offsets = [0, 3], sizes = [2, 1], strides = [1, 1]} : vector<2x6xf32> to vector<2x1xf32>
    %305 = vector.extract_strided_slice %6 {offsets = [3, 0], sizes = [1, 24], strides = [1, 1]} : vector<6x24xf32> to vector<1x24xf32>
    %306 = vector.broadcast %304 : vector<2x1xf32> to vector<2x24xf32>
    %307 = vector.broadcast %305 : vector<1x24xf32> to vector<2x24xf32>
    %308 = arith.mulf %306, %307 : vector<2x24xf32>
    %309 = arith.addf %303, %308 : vector<2x24xf32>
    %310 = vector.extract_strided_slice %286 {offsets = [0, 4], sizes = [2, 1], strides = [1, 1]} : vector<2x6xf32> to vector<2x1xf32>
    %311 = vector.extract_strided_slice %6 {offsets = [4, 0], sizes = [1, 24], strides = [1, 1]} : vector<6x24xf32> to vector<1x24xf32>
    %312 = vector.broadcast %310 : vector<2x1xf32> to vector<2x24xf32>
    %313 = vector.broadcast %311 : vector<1x24xf32> to vector<2x24xf32>
    %314 = arith.mulf %312, %313 : vector<2x24xf32>
    %315 = arith.addf %309, %314 : vector<2x24xf32>
    %316 = vector.extract_strided_slice %286 {offsets = [0, 5], sizes = [2, 1], strides = [1, 1]} : vector<2x6xf32> to vector<2x1xf32>
    %317 = vector.extract_strided_slice %6 {offsets = [5, 0], sizes = [1, 24], strides = [1, 1]} : vector<6x24xf32> to vector<1x24xf32>
    %318 = vector.broadcast %316 : vector<2x1xf32> to vector<2x24xf32>
    %319 = vector.broadcast %317 : vector<1x24xf32> to vector<2x24xf32>
    %320 = arith.mulf %318, %319 : vector<2x24xf32>
    %321 = arith.addf %315, %320 : vector<2x24xf32>
    %322 = vector.broadcast %8 : vector<1x24xf32> to vector<2x24xf32>
    %323 = arith.addf %322, %321 : vector<2x24xf32>
    %324 = vector.extract_strided_slice %191 {offsets = [0, 0], sizes = [2, 1], strides = [1, 1]} : vector<2x6xf32> to vector<2x1xf32>
    %325 = vector.extract_strided_slice %7 {offsets = [0, 0], sizes = [1, 24], strides = [1, 1]} : vector<6x24xf32> to vector<1x24xf32>
    %326 = vector.broadcast %324 : vector<2x1xf32> to vector<2x24xf32>
    %327 = vector.broadcast %325 : vector<1x24xf32> to vector<2x24xf32>
    %328 = arith.mulf %326, %327 : vector<2x24xf32>
    %329 = vector.extract_strided_slice %191 {offsets = [0, 1], sizes = [2, 1], strides = [1, 1]} : vector<2x6xf32> to vector<2x1xf32>
    %330 = vector.extract_strided_slice %7 {offsets = [1, 0], sizes = [1, 24], strides = [1, 1]} : vector<6x24xf32> to vector<1x24xf32>
    %331 = vector.broadcast %329 : vector<2x1xf32> to vector<2x24xf32>
    %332 = vector.broadcast %330 : vector<1x24xf32> to vector<2x24xf32>
    %333 = arith.mulf %331, %332 : vector<2x24xf32>
    %334 = arith.addf %328, %333 : vector<2x24xf32>
    %335 = vector.extract_strided_slice %191 {offsets = [0, 2], sizes = [2, 1], strides = [1, 1]} : vector<2x6xf32> to vector<2x1xf32>
    %336 = vector.extract_strided_slice %7 {offsets = [2, 0], sizes = [1, 24], strides = [1, 1]} : vector<6x24xf32> to vector<1x24xf32>
    %337 = vector.broadcast %335 : vector<2x1xf32> to vector<2x24xf32>
    %338 = vector.broadcast %336 : vector<1x24xf32> to vector<2x24xf32>
    %339 = arith.mulf %337, %338 : vector<2x24xf32>
    %340 = arith.addf %334, %339 : vector<2x24xf32>
    %341 = vector.extract_strided_slice %191 {offsets = [0, 3], sizes = [2, 1], strides = [1, 1]} : vector<2x6xf32> to vector<2x1xf32>
    %342 = vector.extract_strided_slice %7 {offsets = [3, 0], sizes = [1, 24], strides = [1, 1]} : vector<6x24xf32> to vector<1x24xf32>
    %343 = vector.broadcast %341 : vector<2x1xf32> to vector<2x24xf32>
    %344 = vector.broadcast %342 : vector<1x24xf32> to vector<2x24xf32>
    %345 = arith.mulf %343, %344 : vector<2x24xf32>
    %346 = arith.addf %340, %345 : vector<2x24xf32>
    %347 = vector.extract_strided_slice %191 {offsets = [0, 4], sizes = [2, 1], strides = [1, 1]} : vector<2x6xf32> to vector<2x1xf32>
    %348 = vector.extract_strided_slice %7 {offsets = [4, 0], sizes = [1, 24], strides = [1, 1]} : vector<6x24xf32> to vector<1x24xf32>
    %349 = vector.broadcast %347 : vector<2x1xf32> to vector<2x24xf32>
    %350 = vector.broadcast %348 : vector<1x24xf32> to vector<2x24xf32>
    %351 = arith.mulf %349, %350 : vector<2x24xf32>
    %352 = arith.addf %346, %351 : vector<2x24xf32>
    %353 = vector.extract_strided_slice %191 {offsets = [0, 5], sizes = [2, 1], strides = [1, 1]} : vector<2x6xf32> to vector<2x1xf32>
    %354 = vector.extract_strided_slice %7 {offsets = [5, 0], sizes = [1, 24], strides = [1, 1]} : vector<6x24xf32> to vector<1x24xf32>
    %355 = vector.broadcast %353 : vector<2x1xf32> to vector<2x24xf32>
    %356 = vector.broadcast %354 : vector<1x24xf32> to vector<2x24xf32>
    %357 = arith.mulf %355, %356 : vector<2x24xf32>
    %358 = arith.addf %352, %357 : vector<2x24xf32>
    %359 = arith.addf %323, %358 : vector<2x24xf32>
    %360 = math.tanh %359 : vector<2x24xf32>
    %361 = vector.extract_strided_slice %360 {offsets = [0, 0], sizes = [2, 18], strides = [1, 1]} : vector<2x24xf32> to vector<2x18xf32>
    %cst_32 = arith.constant 5.000000e-01 : f32
    %362 = vector.broadcast %cst_32 : f32 to vector<2x18xf32>
    %363 = arith.mulf %362, %361 : vector<2x18xf32>
    %cst_33 = arith.constant 5.000000e-01 : f32
    %364 = vector.broadcast %cst_33 : f32 to vector<2x18xf32>
    %365 = arith.addf %363, %364 : vector<2x18xf32>
    %366 = vector.extract_strided_slice %365 {offsets = [0, 0], sizes = [2, 6], strides = [1, 1]} : vector<2x18xf32> to vector<2x6xf32>
    %367 = vector.extract_strided_slice %365 {offsets = [0, 6], sizes = [2, 6], strides = [1, 1]} : vector<2x18xf32> to vector<2x6xf32>
    %368 = vector.extract_strided_slice %365 {offsets = [0, 12], sizes = [2, 6], strides = [1, 1]} : vector<2x18xf32> to vector<2x6xf32>
    %369 = vector.extract_strided_slice %360 {offsets = [0, 18], sizes = [2, 6], strides = [1, 1]} : vector<2x24xf32> to vector<2x6xf32>
    %370 = arith.mulf %367, %189 : vector<2x6xf32>
    %371 = arith.mulf %366, %369 : vector<2x6xf32>
    %372 = arith.addf %370, %371 : vector<2x6xf32>
    %373 = math.tanh %372 : vector<2x6xf32>
    %374 = arith.mulf %368, %373 : vector<2x6xf32>
    %375 = arith.index_cast %c1_i32 : i32 to index
    %c0_34 = arith.constant 0 : index
    %c0_35 = arith.constant 0 : index
    %376 = vector.load %arg8[%375, %c0_34, %c0_35] : memref<8x2x6xf32, #tpu.memory_space<vmem>>, vector<1x2x6xf32>
    %377 = vector.shape_cast %376 : vector<1x2x6xf32> to vector<2x6xf32>
    %378 = vector.shape_cast %374 : vector<2x6xf32> to vector<1x2x6xf32>
    tpu.vector_store %arg8[%375, %c0_34, %c0_35], %378 {strides = array<i32>} : memref<8x2x6xf32, #tpu.memory_space<vmem>>, vector<1x2x6xf32>,
    %c2_i32 = arith.constant 2 : i32
    %379 = arith.index_cast %c2_i32 : i32 to index
    %c0_36 = arith.constant 0 : index
    %c0_37 = arith.constant 0 : index
    %380 = vector.load %arg1[%379, %c0_36, %c0_37] : memref<8x2x6xf32, #tpu.memory_space<vmem>>, vector<1x2x6xf32>
    %381 = vector.shape_cast %380 : vector<1x2x6xf32> to vector<2x6xf32>
    %382 = vector.extract_strided_slice %381 {offsets = [0, 0], sizes = [2, 1], strides = [1, 1]} : vector<2x6xf32> to vector<2x1xf32>
    %383 = vector.extract_strided_slice %3 {offsets = [0, 0], sizes = [1, 24], strides = [1, 1]} : vector<6x24xf32> to vector<1x24xf32>
    %384 = vector.broadcast %382 : vector<2x1xf32> to vector<2x24xf32>
    %385 = vector.broadcast %383 : vector<1x24xf32> to vector<2x24xf32>
    %386 = arith.mulf %384, %385 : vector<2x24xf32>
    %387 = vector.extract_strided_slice %381 {offsets = [0, 1], sizes = [2, 1], strides = [1, 1]} : vector<2x6xf32> to vector<2x1xf32>
    %388 = vector.extract_strided_slice %3 {offsets = [1, 0], sizes = [1, 24], strides = [1, 1]} : vector<6x24xf32> to vector<1x24xf32>
    %389 = vector.broadcast %387 : vector<2x1xf32> to vector<2x24xf32>
    %390 = vector.broadcast %388 : vector<1x24xf32> to vector<2x24xf32>
    %391 = arith.mulf %389, %390 : vector<2x24xf32>
    %392 = arith.addf %386, %391 : vector<2x24xf32>
    %393 = vector.extract_strided_slice %381 {offsets = [0, 2], sizes = [2, 1], strides = [1, 1]} : vector<2x6xf32> to vector<2x1xf32>
    %394 = vector.extract_strided_slice %3 {offsets = [2, 0], sizes = [1, 24], strides = [1, 1]} : vector<6x24xf32> to vector<1x24xf32>
    %395 = vector.broadcast %393 : vector<2x1xf32> to vector<2x24xf32>
    %396 = vector.broadcast %394 : vector<1x24xf32> to vector<2x24xf32>
    %397 = arith.mulf %395, %396 : vector<2x24xf32>
    %398 = arith.addf %392, %397 : vector<2x24xf32>
    %399 = vector.extract_strided_slice %381 {offsets = [0, 3], sizes = [2, 1], strides = [1, 1]} : vector<2x6xf32> to vector<2x1xf32>
    %400 = vector.extract_strided_slice %3 {offsets = [3, 0], sizes = [1, 24], strides = [1, 1]} : vector<6x24xf32> to vector<1x24xf32>
    %401 = vector.broadcast %399 : vector<2x1xf32> to vector<2x24xf32>
    %402 = vector.broadcast %400 : vector<1x24xf32> to vector<2x24xf32>
    %403 = arith.mulf %401, %402 : vector<2x24xf32>
    %404 = arith.addf %398, %403 : vector<2x24xf32>
    %405 = vector.extract_strided_slice %381 {offsets = [0, 4], sizes = [2, 1], strides = [1, 1]} : vector<2x6xf32> to vector<2x1xf32>
    %406 = vector.extract_strided_slice %3 {offsets = [4, 0], sizes = [1, 24], strides = [1, 1]} : vector<6x24xf32> to vector<1x24xf32>
    %407 = vector.broadcast %405 : vector<2x1xf32> to vector<2x24xf32>
    %408 = vector.broadcast %406 : vector<1x24xf32> to vector<2x24xf32>
    %409 = arith.mulf %407, %408 : vector<2x24xf32>
    %410 = arith.addf %404, %409 : vector<2x24xf32>
    %411 = vector.extract_strided_slice %381 {offsets = [0, 5], sizes = [2, 1], strides = [1, 1]} : vector<2x6xf32> to vector<2x1xf32>
    %412 = vector.extract_strided_slice %3 {offsets = [5, 0], sizes = [1, 24], strides = [1, 1]} : vector<6x24xf32> to vector<1x24xf32>
    %413 = vector.broadcast %411 : vector<2x1xf32> to vector<2x24xf32>
    %414 = vector.broadcast %412 : vector<1x24xf32> to vector<2x24xf32>
    %415 = arith.mulf %413, %414 : vector<2x24xf32>
    %416 = arith.addf %410, %415 : vector<2x24xf32>
    %417 = vector.broadcast %5 : vector<1x24xf32> to vector<2x24xf32>
    %418 = arith.addf %417, %416 : vector<2x24xf32>
    %419 = vector.extract_strided_slice %286 {offsets = [0, 0], sizes = [2, 1], strides = [1, 1]} : vector<2x6xf32> to vector<2x1xf32>
    %420 = vector.extract_strided_slice %4 {offsets = [0, 0], sizes = [1, 24], strides = [1, 1]} : vector<6x24xf32> to vector<1x24xf32>
    %421 = vector.broadcast %419 : vector<2x1xf32> to vector<2x24xf32>
    %422 = vector.broadcast %420 : vector<1x24xf32> to vector<2x24xf32>
    %423 = arith.mulf %421, %422 : vector<2x24xf32>
    %424 = vector.extract_strided_slice %286 {offsets = [0, 1], sizes = [2, 1], strides = [1, 1]} : vector<2x6xf32> to vector<2x1xf32>
    %425 = vector.extract_strided_slice %4 {offsets = [1, 0], sizes = [1, 24], strides = [1, 1]} : vector<6x24xf32> to vector<1x24xf32>
    %426 = vector.broadcast %424 : vector<2x1xf32> to vector<2x24xf32>
    %427 = vector.broadcast %425 : vector<1x24xf32> to vector<2x24xf32>
    %428 = arith.mulf %426, %427 : vector<2x24xf32>
    %429 = arith.addf %423, %428 : vector<2x24xf32>
    %430 = vector.extract_strided_slice %286 {offsets = [0, 2], sizes = [2, 1], strides = [1, 1]} : vector<2x6xf32> to vector<2x1xf32>
    %431 = vector.extract_strided_slice %4 {offsets = [2, 0], sizes = [1, 24], strides = [1, 1]} : vector<6x24xf32> to vector<1x24xf32>
    %432 = vector.broadcast %430 : vector<2x1xf32> to vector<2x24xf32>
    %433 = vector.broadcast %431 : vector<1x24xf32> to vector<2x24xf32>
    %434 = arith.mulf %432, %433 : vector<2x24xf32>
    %435 = arith.addf %429, %434 : vector<2x24xf32>
    %436 = vector.extract_strided_slice %286 {offsets = [0, 3], sizes = [2, 1], strides = [1, 1]} : vector<2x6xf32> to vector<2x1xf32>
    %437 = vector.extract_strided_slice %4 {offsets = [3, 0], sizes = [1, 24], strides = [1, 1]} : vector<6x24xf32> to vector<1x24xf32>
    %438 = vector.broadcast %436 : vector<2x1xf32> to vector<2x24xf32>
    %439 = vector.broadcast %437 : vector<1x24xf32> to vector<2x24xf32>
    %440 = arith.mulf %438, %439 : vector<2x24xf32>
    %441 = arith.addf %435, %440 : vector<2x24xf32>
    %442 = vector.extract_strided_slice %286 {offsets = [0, 4], sizes = [2, 1], strides = [1, 1]} : vector<2x6xf32> to vector<2x1xf32>
    %443 = vector.extract_strided_slice %4 {offsets = [4, 0], sizes = [1, 24], strides = [1, 1]} : vector<6x24xf32> to vector<1x24xf32>
    %444 = vector.broadcast %442 : vector<2x1xf32> to vector<2x24xf32>
    %445 = vector.broadcast %443 : vector<1x24xf32> to vector<2x24xf32>
    %446 = arith.mulf %444, %445 : vector<2x24xf32>
    %447 = arith.addf %441, %446 : vector<2x24xf32>
    %448 = vector.extract_strided_slice %286 {offsets = [0, 5], sizes = [2, 1], strides = [1, 1]} : vector<2x6xf32> to vector<2x1xf32>
    %449 = vector.extract_strided_slice %4 {offsets = [5, 0], sizes = [1, 24], strides = [1, 1]} : vector<6x24xf32> to vector<1x24xf32>
    %450 = vector.broadcast %448 : vector<2x1xf32> to vector<2x24xf32>
    %451 = vector.broadcast %449 : vector<1x24xf32> to vector<2x24xf32>
    %452 = arith.mulf %450, %451 : vector<2x24xf32>
    %453 = arith.addf %447, %452 : vector<2x24xf32>
    %454 = arith.addf %418, %453 : vector<2x24xf32>
    %455 = math.tanh %454 : vector<2x24xf32>
    %456 = vector.extract_strided_slice %455 {offsets = [0, 0], sizes = [2, 18], strides = [1, 1]} : vector<2x24xf32> to vector<2x18xf32>
    %cst_38 = arith.constant 5.000000e-01 : f32
    %457 = vector.broadcast %cst_38 : f32 to vector<2x18xf32>
    %458 = arith.mulf %457, %456 : vector<2x18xf32>
    %cst_39 = arith.constant 5.000000e-01 : f32
    %459 = vector.broadcast %cst_39 : f32 to vector<2x18xf32>
    %460 = arith.addf %458, %459 : vector<2x18xf32>
    %461 = vector.extract_strided_slice %460 {offsets = [0, 0], sizes = [2, 6], strides = [1, 1]} : vector<2x18xf32> to vector<2x6xf32>
    %462 = vector.extract_strided_slice %460 {offsets = [0, 6], sizes = [2, 6], strides = [1, 1]} : vector<2x18xf32> to vector<2x6xf32>
    %463 = vector.extract_strided_slice %460 {offsets = [0, 12], sizes = [2, 6], strides = [1, 1]} : vector<2x18xf32> to vector<2x6xf32>
    %464 = vector.extract_strided_slice %455 {offsets = [0, 18], sizes = [2, 6], strides = [1, 1]} : vector<2x24xf32> to vector<2x6xf32>
    %465 = arith.mulf %462, %284 : vector<2x6xf32>
    %466 = arith.mulf %461, %464 : vector<2x6xf32>
    %467 = arith.addf %465, %466 : vector<2x6xf32>
    %468 = math.tanh %467 : vector<2x6xf32>
    %469 = arith.mulf %463, %468 : vector<2x6xf32>
    %470 = vector.extract_strided_slice %469 {offsets = [0, 0], sizes = [2, 1], strides = [1, 1]} : vector<2x6xf32> to vector<2x1xf32>
    %471 = vector.extract_strided_slice %6 {offsets = [0, 0], sizes = [1, 24], strides = [1, 1]} : vector<6x24xf32> to vector<1x24xf32>
    %472 = vector.broadcast %470 : vector<2x1xf32> to vector<2x24xf32>
    %473 = vector.broadcast %471 : vector<1x24xf32> to vector<2x24xf32>
    %474 = arith.mulf %472, %473 : vector<2x24xf32>
    %475 = vector.extract_strided_slice %469 {offsets = [0, 1], sizes = [2, 1], strides = [1, 1]} : vector<2x6xf32> to vector<2x1xf32>
    %476 = vector.extract_strided_slice %6 {offsets = [1, 0], sizes = [1, 24], strides = [1, 1]} : vector<6x24xf32> to vector<1x24xf32>
    %477 = vector.broadcast %475 : vector<2x1xf32> to vector<2x24xf32>
    %478 = vector.broadcast %476 : vector<1x24xf32> to vector<2x24xf32>
    %479 = arith.mulf %477, %478 : vector<2x24xf32>
    %480 = arith.addf %474, %479 : vector<2x24xf32>
    %481 = vector.extract_strided_slice %469 {offsets = [0, 2], sizes = [2, 1], strides = [1, 1]} : vector<2x6xf32> to vector<2x1xf32>
    %482 = vector.extract_strided_slice %6 {offsets = [2, 0], sizes = [1, 24], strides = [1, 1]} : vector<6x24xf32> to vector<1x24xf32>
    %483 = vector.broadcast %481 : vector<2x1xf32> to vector<2x24xf32>
    %484 = vector.broadcast %482 : vector<1x24xf32> to vector<2x24xf32>
    %485 = arith.mulf %483, %484 : vector<2x24xf32>
    %486 = arith.addf %480, %485 : vector<2x24xf32>
    %487 = vector.extract_strided_slice %469 {offsets = [0, 3], sizes = [2, 1], strides = [1, 1]} : vector<2x6xf32> to vector<2x1xf32>
    %488 = vector.extract_strided_slice %6 {offsets = [3, 0], sizes = [1, 24], strides = [1, 1]} : vector<6x24xf32> to vector<1x24xf32>
    %489 = vector.broadcast %487 : vector<2x1xf32> to vector<2x24xf32>
    %490 = vector.broadcast %488 : vector<1x24xf32> to vector<2x24xf32>
    %491 = arith.mulf %489, %490 : vector<2x24xf32>
    %492 = arith.addf %486, %491 : vector<2x24xf32>
    %493 = vector.extract_strided_slice %469 {offsets = [0, 4], sizes = [2, 1], strides = [1, 1]} : vector<2x6xf32> to vector<2x1xf32>
    %494 = vector.extract_strided_slice %6 {offsets = [4, 0], sizes = [1, 24], strides = [1, 1]} : vector<6x24xf32> to vector<1x24xf32>
    %495 = vector.broadcast %493 : vector<2x1xf32> to vector<2x24xf32>
    %496 = vector.broadcast %494 : vector<1x24xf32> to vector<2x24xf32>
    %497 = arith.mulf %495, %496 : vector<2x24xf32>
    %498 = arith.addf %492, %497 : vector<2x24xf32>
    %499 = vector.extract_strided_slice %469 {offsets = [0, 5], sizes = [2, 1], strides = [1, 1]} : vector<2x6xf32> to vector<2x1xf32>
    %500 = vector.extract_strided_slice %6 {offsets = [5, 0], sizes = [1, 24], strides = [1, 1]} : vector<6x24xf32> to vector<1x24xf32>
    %501 = vector.broadcast %499 : vector<2x1xf32> to vector<2x24xf32>
    %502 = vector.broadcast %500 : vector<1x24xf32> to vector<2x24xf32>
    %503 = arith.mulf %501, %502 : vector<2x24xf32>
    %504 = arith.addf %498, %503 : vector<2x24xf32>
    %505 = vector.broadcast %8 : vector<1x24xf32> to vector<2x24xf32>
    %506 = arith.addf %505, %504 : vector<2x24xf32>
    %507 = vector.extract_strided_slice %374 {offsets = [0, 0], sizes = [2, 1], strides = [1, 1]} : vector<2x6xf32> to vector<2x1xf32>
    %508 = vector.extract_strided_slice %7 {offsets = [0, 0], sizes = [1, 24], strides = [1, 1]} : vector<6x24xf32> to vector<1x24xf32>
    %509 = vector.broadcast %507 : vector<2x1xf32> to vector<2x24xf32>
    %510 = vector.broadcast %508 : vector<1x24xf32> to vector<2x24xf32>
    %511 = arith.mulf %509, %510 : vector<2x24xf32>
    %512 = vector.extract_strided_slice %374 {offsets = [0, 1], sizes = [2, 1], strides = [1, 1]} : vector<2x6xf32> to vector<2x1xf32>
    %513 = vector.extract_strided_slice %7 {offsets = [1, 0], sizes = [1, 24], strides = [1, 1]} : vector<6x24xf32> to vector<1x24xf32>
    %514 = vector.broadcast %512 : vector<2x1xf32> to vector<2x24xf32>
    %515 = vector.broadcast %513 : vector<1x24xf32> to vector<2x24xf32>
    %516 = arith.mulf %514, %515 : vector<2x24xf32>
    %517 = arith.addf %511, %516 : vector<2x24xf32>
    %518 = vector.extract_strided_slice %374 {offsets = [0, 2], sizes = [2, 1], strides = [1, 1]} : vector<2x6xf32> to vector<2x1xf32>
    %519 = vector.extract_strided_slice %7 {offsets = [2, 0], sizes = [1, 24], strides = [1, 1]} : vector<6x24xf32> to vector<1x24xf32>
    %520 = vector.broadcast %518 : vector<2x1xf32> to vector<2x24xf32>
    %521 = vector.broadcast %519 : vector<1x24xf32> to vector<2x24xf32>
    %522 = arith.mulf %520, %521 : vector<2x24xf32>
    %523 = arith.addf %517, %522 : vector<2x24xf32>
    %524 = vector.extract_strided_slice %374 {offsets = [0, 3], sizes = [2, 1], strides = [1, 1]} : vector<2x6xf32> to vector<2x1xf32>
    %525 = vector.extract_strided_slice %7 {offsets = [3, 0], sizes = [1, 24], strides = [1, 1]} : vector<6x24xf32> to vector<1x24xf32>
    %526 = vector.broadcast %524 : vector<2x1xf32> to vector<2x24xf32>
    %527 = vector.broadcast %525 : vector<1x24xf32> to vector<2x24xf32>
    %528 = arith.mulf %526, %527 : vector<2x24xf32>
    %529 = arith.addf %523, %528 : vector<2x24xf32>
    %530 = vector.extract_strided_slice %374 {offsets = [0, 4], sizes = [2, 1], strides = [1, 1]} : vector<2x6xf32> to vector<2x1xf32>
    %531 = vector.extract_strided_slice %7 {offsets = [4, 0], sizes = [1, 24], strides = [1, 1]} : vector<6x24xf32> to vector<1x24xf32>
    %532 = vector.broadcast %530 : vector<2x1xf32> to vector<2x24xf32>
    %533 = vector.broadcast %531 : vector<1x24xf32> to vector<2x24xf32>
    %534 = arith.mulf %532, %533 : vector<2x24xf32>
    %535 = arith.addf %529, %534 : vector<2x24xf32>
    %536 = vector.extract_strided_slice %374 {offsets = [0, 5], sizes = [2, 1], strides = [1, 1]} : vector<2x6xf32> to vector<2x1xf32>
    %537 = vector.extract_strided_slice %7 {offsets = [5, 0], sizes = [1, 24], strides = [1, 1]} : vector<6x24xf32> to vector<1x24xf32>
    %538 = vector.broadcast %536 : vector<2x1xf32> to vector<2x24xf32>
    %539 = vector.broadcast %537 : vector<1x24xf32> to vector<2x24xf32>
    %540 = arith.mulf %538, %539 : vector<2x24xf32>
    %541 = arith.addf %535, %540 : vector<2x24xf32>
    %542 = arith.addf %506, %541 : vector<2x24xf32>
    %543 = math.tanh %542 : vector<2x24xf32>
    %544 = vector.extract_strided_slice %543 {offsets = [0, 0], sizes = [2, 18], strides = [1, 1]} : vector<2x24xf32> to vector<2x18xf32>
    %cst_40 = arith.constant 5.000000e-01 : f32
    %545 = vector.broadcast %cst_40 : f32 to vector<2x18xf32>
    %546 = arith.mulf %545, %544 : vector<2x18xf32>
    %cst_41 = arith.constant 5.000000e-01 : f32
    %547 = vector.broadcast %cst_41 : f32 to vector<2x18xf32>
    %548 = arith.addf %546, %547 : vector<2x18xf32>
    %549 = vector.extract_strided_slice %548 {offsets = [0, 0], sizes = [2, 6], strides = [1, 1]} : vector<2x18xf32> to vector<2x6xf32>
    %550 = vector.extract_strided_slice %548 {offsets = [0, 6], sizes = [2, 6], strides = [1, 1]} : vector<2x18xf32> to vector<2x6xf32>
    %551 = vector.extract_strided_slice %548 {offsets = [0, 12], sizes = [2, 6], strides = [1, 1]} : vector<2x18xf32> to vector<2x6xf32>
    %552 = vector.extract_strided_slice %543 {offsets = [0, 18], sizes = [2, 6], strides = [1, 1]} : vector<2x24xf32> to vector<2x6xf32>
    %553 = arith.mulf %550, %372 : vector<2x6xf32>
    %554 = arith.mulf %549, %552 : vector<2x6xf32>
    %555 = arith.addf %553, %554 : vector<2x6xf32>
    %556 = math.tanh %555 : vector<2x6xf32>
    %557 = arith.mulf %551, %556 : vector<2x6xf32>
    %558 = arith.index_cast %c2_i32 : i32 to index
    %c0_42 = arith.constant 0 : index
    %c0_43 = arith.constant 0 : index
    %559 = vector.load %arg8[%558, %c0_42, %c0_43] : memref<8x2x6xf32, #tpu.memory_space<vmem>>, vector<1x2x6xf32>
    %560 = vector.shape_cast %559 : vector<1x2x6xf32> to vector<2x6xf32>
    %561 = vector.shape_cast %557 : vector<2x6xf32> to vector<1x2x6xf32>
    tpu.vector_store %arg8[%558, %c0_42, %c0_43], %561 {strides = array<i32>} : memref<8x2x6xf32, #tpu.memory_space<vmem>>, vector<1x2x6xf32>,
    %c3_i32 = arith.constant 3 : i32
    %562 = arith.index_cast %c3_i32 : i32 to index
    %c0_44 = arith.constant 0 : index
    %c0_45 = arith.constant 0 : index
    %563 = vector.load %arg1[%562, %c0_44, %c0_45] : memref<8x2x6xf32, #tpu.memory_space<vmem>>, vector<1x2x6xf32>
    %564 = vector.shape_cast %563 : vector<1x2x6xf32> to vector<2x6xf32>
    %565 = vector.extract_strided_slice %564 {offsets = [0, 0], sizes = [2, 1], strides = [1, 1]} : vector<2x6xf32> to vector<2x1xf32>
    %566 = vector.extract_strided_slice %3 {offsets = [0, 0], sizes = [1, 24], strides = [1, 1]} : vector<6x24xf32> to vector<1x24xf32>
    %567 = vector.broadcast %565 : vector<2x1xf32> to vector<2x24xf32>
    %568 = vector.broadcast %566 : vector<1x24xf32> to vector<2x24xf32>
    %569 = arith.mulf %567, %568 : vector<2x24xf32>
    %570 = vector.extract_strided_slice %564 {offsets = [0, 1], sizes = [2, 1], strides = [1, 1]} : vector<2x6xf32> to vector<2x1xf32>
    %571 = vector.extract_strided_slice %3 {offsets = [1, 0], sizes = [1, 24], strides = [1, 1]} : vector<6x24xf32> to vector<1x24xf32>
    %572 = vector.broadcast %570 : vector<2x1xf32> to vector<2x24xf32>
    %573 = vector.broadcast %571 : vector<1x24xf32> to vector<2x24xf32>
    %574 = arith.mulf %572, %573 : vector<2x24xf32>
    %575 = arith.addf %569, %574 : vector<2x24xf32>
    %576 = vector.extract_strided_slice %564 {offsets = [0, 2], sizes = [2, 1], strides = [1, 1]} : vector<2x6xf32> to vector<2x1xf32>
    %577 = vector.extract_strided_slice %3 {offsets = [2, 0], sizes = [1, 24], strides = [1, 1]} : vector<6x24xf32> to vector<1x24xf32>
    %578 = vector.broadcast %576 : vector<2x1xf32> to vector<2x24xf32>
    %579 = vector.broadcast %577 : vector<1x24xf32> to vector<2x24xf32>
    %580 = arith.mulf %578, %579 : vector<2x24xf32>
    %581 = arith.addf %575, %580 : vector<2x24xf32>
    %582 = vector.extract_strided_slice %564 {offsets = [0, 3], sizes = [2, 1], strides = [1, 1]} : vector<2x6xf32> to vector<2x1xf32>
    %583 = vector.extract_strided_slice %3 {offsets = [3, 0], sizes = [1, 24], strides = [1, 1]} : vector<6x24xf32> to vector<1x24xf32>
    %584 = vector.broadcast %582 : vector<2x1xf32> to vector<2x24xf32>
    %585 = vector.broadcast %583 : vector<1x24xf32> to vector<2x24xf32>
    %586 = arith.mulf %584, %585 : vector<2x24xf32>
    %587 = arith.addf %581, %586 : vector<2x24xf32>
    %588 = vector.extract_strided_slice %564 {offsets = [0, 4], sizes = [2, 1], strides = [1, 1]} : vector<2x6xf32> to vector<2x1xf32>
    %589 = vector.extract_strided_slice %3 {offsets = [4, 0], sizes = [1, 24], strides = [1, 1]} : vector<6x24xf32> to vector<1x24xf32>
    %590 = vector.broadcast %588 : vector<2x1xf32> to vector<2x24xf32>
    %591 = vector.broadcast %589 : vector<1x24xf32> to vector<2x24xf32>
    %592 = arith.mulf %590, %591 : vector<2x24xf32>
    %593 = arith.addf %587, %592 : vector<2x24xf32>
    %594 = vector.extract_strided_slice %564 {offsets = [0, 5], sizes = [2, 1], strides = [1, 1]} : vector<2x6xf32> to vector<2x1xf32>
    %595 = vector.extract_strided_slice %3 {offsets = [5, 0], sizes = [1, 24], strides = [1, 1]} : vector<6x24xf32> to vector<1x24xf32>
    %596 = vector.broadcast %594 : vector<2x1xf32> to vector<2x24xf32>
    %597 = vector.broadcast %595 : vector<1x24xf32> to vector<2x24xf32>
    %598 = arith.mulf %596, %597 : vector<2x24xf32>
    %599 = arith.addf %593, %598 : vector<2x24xf32>
    %600 = vector.broadcast %5 : vector<1x24xf32> to vector<2x24xf32>
    %601 = arith.addf %600, %599 : vector<2x24xf32>
    %602 = vector.extract_strided_slice %469 {offsets = [0, 0], sizes = [2, 1], strides = [1, 1]} : vector<2x6xf32> to vector<2x1xf32>
    %603 = vector.extract_strided_slice %4 {offsets = [0, 0], sizes = [1, 24], strides = [1, 1]} : vector<6x24xf32> to vector<1x24xf32>
    %604 = vector.broadcast %602 : vector<2x1xf32> to vector<2x24xf32>
    %605 = vector.broadcast %603 : vector<1x24xf32> to vector<2x24xf32>
    %606 = arith.mulf %604, %605 : vector<2x24xf32>
    %607 = vector.extract_strided_slice %469 {offsets = [0, 1], sizes = [2, 1], strides = [1, 1]} : vector<2x6xf32> to vector<2x1xf32>
    %608 = vector.extract_strided_slice %4 {offsets = [1, 0], sizes = [1, 24], strides = [1, 1]} : vector<6x24xf32> to vector<1x24xf32>
    %609 = vector.broadcast %607 : vector<2x1xf32> to vector<2x24xf32>
    %610 = vector.broadcast %608 : vector<1x24xf32> to vector<2x24xf32>
    %611 = arith.mulf %609, %610 : vector<2x24xf32>
    %612 = arith.addf %606, %611 : vector<2x24xf32>
    %613 = vector.extract_strided_slice %469 {offsets = [0, 2], sizes = [2, 1], strides = [1, 1]} : vector<2x6xf32> to vector<2x1xf32>
    %614 = vector.extract_strided_slice %4 {offsets = [2, 0], sizes = [1, 24], strides = [1, 1]} : vector<6x24xf32> to vector<1x24xf32>
    %615 = vector.broadcast %613 : vector<2x1xf32> to vector<2x24xf32>
    %616 = vector.broadcast %614 : vector<1x24xf32> to vector<2x24xf32>
    %617 = arith.mulf %615, %616 : vector<2x24xf32>
    %618 = arith.addf %612, %617 : vector<2x24xf32>
    %619 = vector.extract_strided_slice %469 {offsets = [0, 3], sizes = [2, 1], strides = [1, 1]} : vector<2x6xf32> to vector<2x1xf32>
    %620 = vector.extract_strided_slice %4 {offsets = [3, 0], sizes = [1, 24], strides = [1, 1]} : vector<6x24xf32> to vector<1x24xf32>
    %621 = vector.broadcast %619 : vector<2x1xf32> to vector<2x24xf32>
    %622 = vector.broadcast %620 : vector<1x24xf32> to vector<2x24xf32>
    %623 = arith.mulf %621, %622 : vector<2x24xf32>
    %624 = arith.addf %618, %623 : vector<2x24xf32>
    %625 = vector.extract_strided_slice %469 {offsets = [0, 4], sizes = [2, 1], strides = [1, 1]} : vector<2x6xf32> to vector<2x1xf32>
    %626 = vector.extract_strided_slice %4 {offsets = [4, 0], sizes = [1, 24], strides = [1, 1]} : vector<6x24xf32> to vector<1x24xf32>
    %627 = vector.broadcast %625 : vector<2x1xf32> to vector<2x24xf32>
    %628 = vector.broadcast %626 : vector<1x24xf32> to vector<2x24xf32>
    %629 = arith.mulf %627, %628 : vector<2x24xf32>
    %630 = arith.addf %624, %629 : vector<2x24xf32>
    %631 = vector.extract_strided_slice %469 {offsets = [0, 5], sizes = [2, 1], strides = [1, 1]} : vector<2x6xf32> to vector<2x1xf32>
    %632 = vector.extract_strided_slice %4 {offsets = [5, 0], sizes = [1, 24], strides = [1, 1]} : vector<6x24xf32> to vector<1x24xf32>
    %633 = vector.broadcast %631 : vector<2x1xf32> to vector<2x24xf32>
    %634 = vector.broadcast %632 : vector<1x24xf32> to vector<2x24xf32>
    %635 = arith.mulf %633, %634 : vector<2x24xf32>
    %636 = arith.addf %630, %635 : vector<2x24xf32>
    %637 = arith.addf %601, %636 : vector<2x24xf32>
    %638 = math.tanh %637 : vector<2x24xf32>
    %639 = vector.extract_strided_slice %638 {offsets = [0, 0], sizes = [2, 18], strides = [1, 1]} : vector<2x24xf32> to vector<2x18xf32>
    %cst_46 = arith.constant 5.000000e-01 : f32
    %640 = vector.broadcast %cst_46 : f32 to vector<2x18xf32>
    %641 = arith.mulf %640, %639 : vector<2x18xf32>
    %cst_47 = arith.constant 5.000000e-01 : f32
    %642 = vector.broadcast %cst_47 : f32 to vector<2x18xf32>
    %643 = arith.addf %641, %642 : vector<2x18xf32>
    %644 = vector.extract_strided_slice %643 {offsets = [0, 0], sizes = [2, 6], strides = [1, 1]} : vector<2x18xf32> to vector<2x6xf32>
    %645 = vector.extract_strided_slice %643 {offsets = [0, 6], sizes = [2, 6], strides = [1, 1]} : vector<2x18xf32> to vector<2x6xf32>
    %646 = vector.extract_strided_slice %643 {offsets = [0, 12], sizes = [2, 6], strides = [1, 1]} : vector<2x18xf32> to vector<2x6xf32>
    %647 = vector.extract_strided_slice %638 {offsets = [0, 18], sizes = [2, 6], strides = [1, 1]} : vector<2x24xf32> to vector<2x6xf32>
    %648 = arith.mulf %645, %467 : vector<2x6xf32>
    %649 = arith.mulf %644, %647 : vector<2x6xf32>
    %650 = arith.addf %648, %649 : vector<2x6xf32>
    %651 = math.tanh %650 : vector<2x6xf32>
    %652 = arith.mulf %646, %651 : vector<2x6xf32>
    %653 = vector.extract_strided_slice %652 {offsets = [0, 0], sizes = [2, 1], strides = [1, 1]} : vector<2x6xf32> to vector<2x1xf32>
    %654 = vector.extract_strided_slice %6 {offsets = [0, 0], sizes = [1, 24], strides = [1, 1]} : vector<6x24xf32> to vector<1x24xf32>
    %655 = vector.broadcast %653 : vector<2x1xf32> to vector<2x24xf32>
    %656 = vector.broadcast %654 : vector<1x24xf32> to vector<2x24xf32>
    %657 = arith.mulf %655, %656 : vector<2x24xf32>
    %658 = vector.extract_strided_slice %652 {offsets = [0, 1], sizes = [2, 1], strides = [1, 1]} : vector<2x6xf32> to vector<2x1xf32>
    %659 = vector.extract_strided_slice %6 {offsets = [1, 0], sizes = [1, 24], strides = [1, 1]} : vector<6x24xf32> to vector<1x24xf32>
    %660 = vector.broadcast %658 : vector<2x1xf32> to vector<2x24xf32>
    %661 = vector.broadcast %659 : vector<1x24xf32> to vector<2x24xf32>
    %662 = arith.mulf %660, %661 : vector<2x24xf32>
    %663 = arith.addf %657, %662 : vector<2x24xf32>
    %664 = vector.extract_strided_slice %652 {offsets = [0, 2], sizes = [2, 1], strides = [1, 1]} : vector<2x6xf32> to vector<2x1xf32>
    %665 = vector.extract_strided_slice %6 {offsets = [2, 0], sizes = [1, 24], strides = [1, 1]} : vector<6x24xf32> to vector<1x24xf32>
    %666 = vector.broadcast %664 : vector<2x1xf32> to vector<2x24xf32>
    %667 = vector.broadcast %665 : vector<1x24xf32> to vector<2x24xf32>
    %668 = arith.mulf %666, %667 : vector<2x24xf32>
    %669 = arith.addf %663, %668 : vector<2x24xf32>
    %670 = vector.extract_strided_slice %652 {offsets = [0, 3], sizes = [2, 1], strides = [1, 1]} : vector<2x6xf32> to vector<2x1xf32>
    %671 = vector.extract_strided_slice %6 {offsets = [3, 0], sizes = [1, 24], strides = [1, 1]} : vector<6x24xf32> to vector<1x24xf32>
    %672 = vector.broadcast %670 : vector<2x1xf32> to vector<2x24xf32>
    %673 = vector.broadcast %671 : vector<1x24xf32> to vector<2x24xf32>
    %674 = arith.mulf %672, %673 : vector<2x24xf32>
    %675 = arith.addf %669, %674 : vector<2x24xf32>
    %676 = vector.extract_strided_slice %652 {offsets = [0, 4], sizes = [2, 1], strides = [1, 1]} : vector<2x6xf32> to vector<2x1xf32>
    %677 = vector.extract_strided_slice %6 {offsets = [4, 0], sizes = [1, 24], strides = [1, 1]} : vector<6x24xf32> to vector<1x24xf32>
    %678 = vector.broadcast %676 : vector<2x1xf32> to vector<2x24xf32>
    %679 = vector.broadcast %677 : vector<1x24xf32> to vector<2x24xf32>
    %680 = arith.mulf %678, %679 : vector<2x24xf32>
    %681 = arith.addf %675, %680 : vector<2x24xf32>
    %682 = vector.extract_strided_slice %652 {offsets = [0, 5], sizes = [2, 1], strides = [1, 1]} : vector<2x6xf32> to vector<2x1xf32>
    %683 = vector.extract_strided_slice %6 {offsets = [5, 0], sizes = [1, 24], strides = [1, 1]} : vector<6x24xf32> to vector<1x24xf32>
    %684 = vector.broadcast %682 : vector<2x1xf32> to vector<2x24xf32>
    %685 = vector.broadcast %683 : vector<1x24xf32> to vector<2x24xf32>
    %686 = arith.mulf %684, %685 : vector<2x24xf32>
    %687 = arith.addf %681, %686 : vector<2x24xf32>
    %688 = vector.broadcast %8 : vector<1x24xf32> to vector<2x24xf32>
    %689 = arith.addf %688, %687 : vector<2x24xf32>
    %690 = vector.extract_strided_slice %557 {offsets = [0, 0], sizes = [2, 1], strides = [1, 1]} : vector<2x6xf32> to vector<2x1xf32>
    %691 = vector.extract_strided_slice %7 {offsets = [0, 0], sizes = [1, 24], strides = [1, 1]} : vector<6x24xf32> to vector<1x24xf32>
    %692 = vector.broadcast %690 : vector<2x1xf32> to vector<2x24xf32>
    %693 = vector.broadcast %691 : vector<1x24xf32> to vector<2x24xf32>
    %694 = arith.mulf %692, %693 : vector<2x24xf32>
    %695 = vector.extract_strided_slice %557 {offsets = [0, 1], sizes = [2, 1], strides = [1, 1]} : vector<2x6xf32> to vector<2x1xf32>
    %696 = vector.extract_strided_slice %7 {offsets = [1, 0], sizes = [1, 24], strides = [1, 1]} : vector<6x24xf32> to vector<1x24xf32>
    %697 = vector.broadcast %695 : vector<2x1xf32> to vector<2x24xf32>
    %698 = vector.broadcast %696 : vector<1x24xf32> to vector<2x24xf32>
    %699 = arith.mulf %697, %698 : vector<2x24xf32>
    %700 = arith.addf %694, %699 : vector<2x24xf32>
    %701 = vector.extract_strided_slice %557 {offsets = [0, 2], sizes = [2, 1], strides = [1, 1]} : vector<2x6xf32> to vector<2x1xf32>
    %702 = vector.extract_strided_slice %7 {offsets = [2, 0], sizes = [1, 24], strides = [1, 1]} : vector<6x24xf32> to vector<1x24xf32>
    %703 = vector.broadcast %701 : vector<2x1xf32> to vector<2x24xf32>
    %704 = vector.broadcast %702 : vector<1x24xf32> to vector<2x24xf32>
    %705 = arith.mulf %703, %704 : vector<2x24xf32>
    %706 = arith.addf %700, %705 : vector<2x24xf32>
    %707 = vector.extract_strided_slice %557 {offsets = [0, 3], sizes = [2, 1], strides = [1, 1]} : vector<2x6xf32> to vector<2x1xf32>
    %708 = vector.extract_strided_slice %7 {offsets = [3, 0], sizes = [1, 24], strides = [1, 1]} : vector<6x24xf32> to vector<1x24xf32>
    %709 = vector.broadcast %707 : vector<2x1xf32> to vector<2x24xf32>
    %710 = vector.broadcast %708 : vector<1x24xf32> to vector<2x24xf32>
    %711 = arith.mulf %709, %710 : vector<2x24xf32>
    %712 = arith.addf %706, %711 : vector<2x24xf32>
    %713 = vector.extract_strided_slice %557 {offsets = [0, 4], sizes = [2, 1], strides = [1, 1]} : vector<2x6xf32> to vector<2x1xf32>
    %714 = vector.extract_strided_slice %7 {offsets = [4, 0], sizes = [1, 24], strides = [1, 1]} : vector<6x24xf32> to vector<1x24xf32>
    %715 = vector.broadcast %713 : vector<2x1xf32> to vector<2x24xf32>
    %716 = vector.broadcast %714 : vector<1x24xf32> to vector<2x24xf32>
    %717 = arith.mulf %715, %716 : vector<2x24xf32>
    %718 = arith.addf %712, %717 : vector<2x24xf32>
    %719 = vector.extract_strided_slice %557 {offsets = [0, 5], sizes = [2, 1], strides = [1, 1]} : vector<2x6xf32> to vector<2x1xf32>
    %720 = vector.extract_strided_slice %7 {offsets = [5, 0], sizes = [1, 24], strides = [1, 1]} : vector<6x24xf32> to vector<1x24xf32>
    %721 = vector.broadcast %719 : vector<2x1xf32> to vector<2x24xf32>
    %722 = vector.broadcast %720 : vector<1x24xf32> to vector<2x24xf32>
    %723 = arith.mulf %721, %722 : vector<2x24xf32>
    %724 = arith.addf %718, %723 : vector<2x24xf32>
    %725 = arith.addf %689, %724 : vector<2x24xf32>
    %726 = math.tanh %725 : vector<2x24xf32>
    %727 = vector.extract_strided_slice %726 {offsets = [0, 0], sizes = [2, 18], strides = [1, 1]} : vector<2x24xf32> to vector<2x18xf32>
    %cst_48 = arith.constant 5.000000e-01 : f32
    %728 = vector.broadcast %cst_48 : f32 to vector<2x18xf32>
    %729 = arith.mulf %728, %727 : vector<2x18xf32>
    %cst_49 = arith.constant 5.000000e-01 : f32
    %730 = vector.broadcast %cst_49 : f32 to vector<2x18xf32>
    %731 = arith.addf %729, %730 : vector<2x18xf32>
    %732 = vector.extract_strided_slice %731 {offsets = [0, 0], sizes = [2, 6], strides = [1, 1]} : vector<2x18xf32> to vector<2x6xf32>
    %733 = vector.extract_strided_slice %731 {offsets = [0, 6], sizes = [2, 6], strides = [1, 1]} : vector<2x18xf32> to vector<2x6xf32>
    %734 = vector.extract_strided_slice %731 {offsets = [0, 12], sizes = [2, 6], strides = [1, 1]} : vector<2x18xf32> to vector<2x6xf32>
    %735 = vector.extract_strided_slice %726 {offsets = [0, 18], sizes = [2, 6], strides = [1, 1]} : vector<2x24xf32> to vector<2x6xf32>
    %736 = arith.mulf %733, %555 : vector<2x6xf32>
    %737 = arith.mulf %732, %735 : vector<2x6xf32>
    %738 = arith.addf %736, %737 : vector<2x6xf32>
    %739 = math.tanh %738 : vector<2x6xf32>
    %740 = arith.mulf %734, %739 : vector<2x6xf32>
    %741 = arith.index_cast %c3_i32 : i32 to index
    %c0_50 = arith.constant 0 : index
    %c0_51 = arith.constant 0 : index
    %742 = vector.load %arg8[%741, %c0_50, %c0_51] : memref<8x2x6xf32, #tpu.memory_space<vmem>>, vector<1x2x6xf32>
    %743 = vector.shape_cast %742 : vector<1x2x6xf32> to vector<2x6xf32>
    %744 = vector.shape_cast %740 : vector<2x6xf32> to vector<1x2x6xf32>
    tpu.vector_store %arg8[%741, %c0_50, %c0_51], %744 {strides = array<i32>} : memref<8x2x6xf32, #tpu.memory_space<vmem>>, vector<1x2x6xf32>,
    %c4_i32 = arith.constant 4 : i32
    %745 = arith.index_cast %c4_i32 : i32 to index
    %c0_52 = arith.constant 0 : index
    %c0_53 = arith.constant 0 : index
    %746 = vector.load %arg1[%745, %c0_52, %c0_53] : memref<8x2x6xf32, #tpu.memory_space<vmem>>, vector<1x2x6xf32>
    %747 = vector.shape_cast %746 : vector<1x2x6xf32> to vector<2x6xf32>
    %748 = vector.extract_strided_slice %747 {offsets = [0, 0], sizes = [2, 1], strides = [1, 1]} : vector<2x6xf32> to vector<2x1xf32>
    %749 = vector.extract_strided_slice %3 {offsets = [0, 0], sizes = [1, 24], strides = [1, 1]} : vector<6x24xf32> to vector<1x24xf32>
    %750 = vector.broadcast %748 : vector<2x1xf32> to vector<2x24xf32>
    %751 = vector.broadcast %749 : vector<1x24xf32> to vector<2x24xf32>
    %752 = arith.mulf %750, %751 : vector<2x24xf32>
    %753 = vector.extract_strided_slice %747 {offsets = [0, 1], sizes = [2, 1], strides = [1, 1]} : vector<2x6xf32> to vector<2x1xf32>
    %754 = vector.extract_strided_slice %3 {offsets = [1, 0], sizes = [1, 24], strides = [1, 1]} : vector<6x24xf32> to vector<1x24xf32>
    %755 = vector.broadcast %753 : vector<2x1xf32> to vector<2x24xf32>
    %756 = vector.broadcast %754 : vector<1x24xf32> to vector<2x24xf32>
    %757 = arith.mulf %755, %756 : vector<2x24xf32>
    %758 = arith.addf %752, %757 : vector<2x24xf32>
    %759 = vector.extract_strided_slice %747 {offsets = [0, 2], sizes = [2, 1], strides = [1, 1]} : vector<2x6xf32> to vector<2x1xf32>
    %760 = vector.extract_strided_slice %3 {offsets = [2, 0], sizes = [1, 24], strides = [1, 1]} : vector<6x24xf32> to vector<1x24xf32>
    %761 = vector.broadcast %759 : vector<2x1xf32> to vector<2x24xf32>
    %762 = vector.broadcast %760 : vector<1x24xf32> to vector<2x24xf32>
    %763 = arith.mulf %761, %762 : vector<2x24xf32>
    %764 = arith.addf %758, %763 : vector<2x24xf32>
    %765 = vector.extract_strided_slice %747 {offsets = [0, 3], sizes = [2, 1], strides = [1, 1]} : vector<2x6xf32> to vector<2x1xf32>
    %766 = vector.extract_strided_slice %3 {offsets = [3, 0], sizes = [1, 24], strides = [1, 1]} : vector<6x24xf32> to vector<1x24xf32>
    %767 = vector.broadcast %765 : vector<2x1xf32> to vector<2x24xf32>
    %768 = vector.broadcast %766 : vector<1x24xf32> to vector<2x24xf32>
    %769 = arith.mulf %767, %768 : vector<2x24xf32>
    %770 = arith.addf %764, %769 : vector<2x24xf32>
    %771 = vector.extract_strided_slice %747 {offsets = [0, 4], sizes = [2, 1], strides = [1, 1]} : vector<2x6xf32> to vector<2x1xf32>
    %772 = vector.extract_strided_slice %3 {offsets = [4, 0], sizes = [1, 24], strides = [1, 1]} : vector<6x24xf32> to vector<1x24xf32>
    %773 = vector.broadcast %771 : vector<2x1xf32> to vector<2x24xf32>
    %774 = vector.broadcast %772 : vector<1x24xf32> to vector<2x24xf32>
    %775 = arith.mulf %773, %774 : vector<2x24xf32>
    %776 = arith.addf %770, %775 : vector<2x24xf32>
    %777 = vector.extract_strided_slice %747 {offsets = [0, 5], sizes = [2, 1], strides = [1, 1]} : vector<2x6xf32> to vector<2x1xf32>
    %778 = vector.extract_strided_slice %3 {offsets = [5, 0], sizes = [1, 24], strides = [1, 1]} : vector<6x24xf32> to vector<1x24xf32>
    %779 = vector.broadcast %777 : vector<2x1xf32> to vector<2x24xf32>
    %780 = vector.broadcast %778 : vector<1x24xf32> to vector<2x24xf32>
    %781 = arith.mulf %779, %780 : vector<2x24xf32>
    %782 = arith.addf %776, %781 : vector<2x24xf32>
    %783 = vector.broadcast %5 : vector<1x24xf32> to vector<2x24xf32>
    %784 = arith.addf %783, %782 : vector<2x24xf32>
    %785 = vector.extract_strided_slice %652 {offsets = [0, 0], sizes = [2, 1], strides = [1, 1]} : vector<2x6xf32> to vector<2x1xf32>
    %786 = vector.extract_strided_slice %4 {offsets = [0, 0], sizes = [1, 24], strides = [1, 1]} : vector<6x24xf32> to vector<1x24xf32>
    %787 = vector.broadcast %785 : vector<2x1xf32> to vector<2x24xf32>
    %788 = vector.broadcast %786 : vector<1x24xf32> to vector<2x24xf32>
    %789 = arith.mulf %787, %788 : vector<2x24xf32>
    %790 = vector.extract_strided_slice %652 {offsets = [0, 1], sizes = [2, 1], strides = [1, 1]} : vector<2x6xf32> to vector<2x1xf32>
    %791 = vector.extract_strided_slice %4 {offsets = [1, 0], sizes = [1, 24], strides = [1, 1]} : vector<6x24xf32> to vector<1x24xf32>
    %792 = vector.broadcast %790 : vector<2x1xf32> to vector<2x24xf32>
    %793 = vector.broadcast %791 : vector<1x24xf32> to vector<2x24xf32>
    %794 = arith.mulf %792, %793 : vector<2x24xf32>
    %795 = arith.addf %789, %794 : vector<2x24xf32>
    %796 = vector.extract_strided_slice %652 {offsets = [0, 2], sizes = [2, 1], strides = [1, 1]} : vector<2x6xf32> to vector<2x1xf32>
    %797 = vector.extract_strided_slice %4 {offsets = [2, 0], sizes = [1, 24], strides = [1, 1]} : vector<6x24xf32> to vector<1x24xf32>
    %798 = vector.broadcast %796 : vector<2x1xf32> to vector<2x24xf32>
    %799 = vector.broadcast %797 : vector<1x24xf32> to vector<2x24xf32>
    %800 = arith.mulf %798, %799 : vector<2x24xf32>
    %801 = arith.addf %795, %800 : vector<2x24xf32>
    %802 = vector.extract_strided_slice %652 {offsets = [0, 3], sizes = [2, 1], strides = [1, 1]} : vector<2x6xf32> to vector<2x1xf32>
    %803 = vector.extract_strided_slice %4 {offsets = [3, 0], sizes = [1, 24], strides = [1, 1]} : vector<6x24xf32> to vector<1x24xf32>
    %804 = vector.broadcast %802 : vector<2x1xf32> to vector<2x24xf32>
    %805 = vector.broadcast %803 : vector<1x24xf32> to vector<2x24xf32>
    %806 = arith.mulf %804, %805 : vector<2x24xf32>
    %807 = arith.addf %801, %806 : vector<2x24xf32>
    %808 = vector.extract_strided_slice %652 {offsets = [0, 4], sizes = [2, 1], strides = [1, 1]} : vector<2x6xf32> to vector<2x1xf32>
    %809 = vector.extract_strided_slice %4 {offsets = [4, 0], sizes = [1, 24], strides = [1, 1]} : vector<6x24xf32> to vector<1x24xf32>
    %810 = vector.broadcast %808 : vector<2x1xf32> to vector<2x24xf32>
    %811 = vector.broadcast %809 : vector<1x24xf32> to vector<2x24xf32>
    %812 = arith.mulf %810, %811 : vector<2x24xf32>
    %813 = arith.addf %807, %812 : vector<2x24xf32>
    %814 = vector.extract_strided_slice %652 {offsets = [0, 5], sizes = [2, 1], strides = [1, 1]} : vector<2x6xf32> to vector<2x1xf32>
    %815 = vector.extract_strided_slice %4 {offsets = [5, 0], sizes = [1, 24], strides = [1, 1]} : vector<6x24xf32> to vector<1x24xf32>
    %816 = vector.broadcast %814 : vector<2x1xf32> to vector<2x24xf32>
    %817 = vector.broadcast %815 : vector<1x24xf32> to vector<2x24xf32>
    %818 = arith.mulf %816, %817 : vector<2x24xf32>
    %819 = arith.addf %813, %818 : vector<2x24xf32>
    %820 = arith.addf %784, %819 : vector<2x24xf32>
    %821 = math.tanh %820 : vector<2x24xf32>
    %822 = vector.extract_strided_slice %821 {offsets = [0, 0], sizes = [2, 18], strides = [1, 1]} : vector<2x24xf32> to vector<2x18xf32>
    %cst_54 = arith.constant 5.000000e-01 : f32
    %823 = vector.broadcast %cst_54 : f32 to vector<2x18xf32>
    %824 = arith.mulf %823, %822 : vector<2x18xf32>
    %cst_55 = arith.constant 5.000000e-01 : f32
    %825 = vector.broadcast %cst_55 : f32 to vector<2x18xf32>
    %826 = arith.addf %824, %825 : vector<2x18xf32>
    %827 = vector.extract_strided_slice %826 {offsets = [0, 0], sizes = [2, 6], strides = [1, 1]} : vector<2x18xf32> to vector<2x6xf32>
    %828 = vector.extract_strided_slice %826 {offsets = [0, 6], sizes = [2, 6], strides = [1, 1]} : vector<2x18xf32> to vector<2x6xf32>
    %829 = vector.extract_strided_slice %826 {offsets = [0, 12], sizes = [2, 6], strides = [1, 1]} : vector<2x18xf32> to vector<2x6xf32>
    %830 = vector.extract_strided_slice %821 {offsets = [0, 18], sizes = [2, 6], strides = [1, 1]} : vector<2x24xf32> to vector<2x6xf32>
    %831 = arith.mulf %828, %650 : vector<2x6xf32>
    %832 = arith.mulf %827, %830 : vector<2x6xf32>
    %833 = arith.addf %831, %832 : vector<2x6xf32>
    %834 = math.tanh %833 : vector<2x6xf32>
    %835 = arith.mulf %829, %834 : vector<2x6xf32>
    %836 = vector.extract_strided_slice %835 {offsets = [0, 0], sizes = [2, 1], strides = [1, 1]} : vector<2x6xf32> to vector<2x1xf32>
    %837 = vector.extract_strided_slice %6 {offsets = [0, 0], sizes = [1, 24], strides = [1, 1]} : vector<6x24xf32> to vector<1x24xf32>
    %838 = vector.broadcast %836 : vector<2x1xf32> to vector<2x24xf32>
    %839 = vector.broadcast %837 : vector<1x24xf32> to vector<2x24xf32>
    %840 = arith.mulf %838, %839 : vector<2x24xf32>
    %841 = vector.extract_strided_slice %835 {offsets = [0, 1], sizes = [2, 1], strides = [1, 1]} : vector<2x6xf32> to vector<2x1xf32>
    %842 = vector.extract_strided_slice %6 {offsets = [1, 0], sizes = [1, 24], strides = [1, 1]} : vector<6x24xf32> to vector<1x24xf32>
    %843 = vector.broadcast %841 : vector<2x1xf32> to vector<2x24xf32>
    %844 = vector.broadcast %842 : vector<1x24xf32> to vector<2x24xf32>
    %845 = arith.mulf %843, %844 : vector<2x24xf32>
    %846 = arith.addf %840, %845 : vector<2x24xf32>
    %847 = vector.extract_strided_slice %835 {offsets = [0, 2], sizes = [2, 1], strides = [1, 1]} : vector<2x6xf32> to vector<2x1xf32>
    %848 = vector.extract_strided_slice %6 {offsets = [2, 0], sizes = [1, 24], strides = [1, 1]} : vector<6x24xf32> to vector<1x24xf32>
    %849 = vector.broadcast %847 : vector<2x1xf32> to vector<2x24xf32>
    %850 = vector.broadcast %848 : vector<1x24xf32> to vector<2x24xf32>
    %851 = arith.mulf %849, %850 : vector<2x24xf32>
    %852 = arith.addf %846, %851 : vector<2x24xf32>
    %853 = vector.extract_strided_slice %835 {offsets = [0, 3], sizes = [2, 1], strides = [1, 1]} : vector<2x6xf32> to vector<2x1xf32>
    %854 = vector.extract_strided_slice %6 {offsets = [3, 0], sizes = [1, 24], strides = [1, 1]} : vector<6x24xf32> to vector<1x24xf32>
    %855 = vector.broadcast %853 : vector<2x1xf32> to vector<2x24xf32>
    %856 = vector.broadcast %854 : vector<1x24xf32> to vector<2x24xf32>
    %857 = arith.mulf %855, %856 : vector<2x24xf32>
    %858 = arith.addf %852, %857 : vector<2x24xf32>
    %859 = vector.extract_strided_slice %835 {offsets = [0, 4], sizes = [2, 1], strides = [1, 1]} : vector<2x6xf32> to vector<2x1xf32>
    %860 = vector.extract_strided_slice %6 {offsets = [4, 0], sizes = [1, 24], strides = [1, 1]} : vector<6x24xf32> to vector<1x24xf32>
    %861 = vector.broadcast %859 : vector<2x1xf32> to vector<2x24xf32>
    %862 = vector.broadcast %860 : vector<1x24xf32> to vector<2x24xf32>
    %863 = arith.mulf %861, %862 : vector<2x24xf32>
    %864 = arith.addf %858, %863 : vector<2x24xf32>
    %865 = vector.extract_strided_slice %835 {offsets = [0, 5], sizes = [2, 1], strides = [1, 1]} : vector<2x6xf32> to vector<2x1xf32>
    %866 = vector.extract_strided_slice %6 {offsets = [5, 0], sizes = [1, 24], strides = [1, 1]} : vector<6x24xf32> to vector<1x24xf32>
    %867 = vector.broadcast %865 : vector<2x1xf32> to vector<2x24xf32>
    %868 = vector.broadcast %866 : vector<1x24xf32> to vector<2x24xf32>
    %869 = arith.mulf %867, %868 : vector<2x24xf32>
    %870 = arith.addf %864, %869 : vector<2x24xf32>
    %871 = vector.broadcast %8 : vector<1x24xf32> to vector<2x24xf32>
    %872 = arith.addf %871, %870 : vector<2x24xf32>
    %873 = vector.extract_strided_slice %740 {offsets = [0, 0], sizes = [2, 1], strides = [1, 1]} : vector<2x6xf32> to vector<2x1xf32>
    %874 = vector.extract_strided_slice %7 {offsets = [0, 0], sizes = [1, 24], strides = [1, 1]} : vector<6x24xf32> to vector<1x24xf32>
    %875 = vector.broadcast %873 : vector<2x1xf32> to vector<2x24xf32>
    %876 = vector.broadcast %874 : vector<1x24xf32> to vector<2x24xf32>
    %877 = arith.mulf %875, %876 : vector<2x24xf32>
    %878 = vector.extract_strided_slice %740 {offsets = [0, 1], sizes = [2, 1], strides = [1, 1]} : vector<2x6xf32> to vector<2x1xf32>
    %879 = vector.extract_strided_slice %7 {offsets = [1, 0], sizes = [1, 24], strides = [1, 1]} : vector<6x24xf32> to vector<1x24xf32>
    %880 = vector.broadcast %878 : vector<2x1xf32> to vector<2x24xf32>
    %881 = vector.broadcast %879 : vector<1x24xf32> to vector<2x24xf32>
    %882 = arith.mulf %880, %881 : vector<2x24xf32>
    %883 = arith.addf %877, %882 : vector<2x24xf32>
    %884 = vector.extract_strided_slice %740 {offsets = [0, 2], sizes = [2, 1], strides = [1, 1]} : vector<2x6xf32> to vector<2x1xf32>
    %885 = vector.extract_strided_slice %7 {offsets = [2, 0], sizes = [1, 24], strides = [1, 1]} : vector<6x24xf32> to vector<1x24xf32>
    %886 = vector.broadcast %884 : vector<2x1xf32> to vector<2x24xf32>
    %887 = vector.broadcast %885 : vector<1x24xf32> to vector<2x24xf32>
    %888 = arith.mulf %886, %887 : vector<2x24xf32>
    %889 = arith.addf %883, %888 : vector<2x24xf32>
    %890 = vector.extract_strided_slice %740 {offsets = [0, 3], sizes = [2, 1], strides = [1, 1]} : vector<2x6xf32> to vector<2x1xf32>
    %891 = vector.extract_strided_slice %7 {offsets = [3, 0], sizes = [1, 24], strides = [1, 1]} : vector<6x24xf32> to vector<1x24xf32>
    %892 = vector.broadcast %890 : vector<2x1xf32> to vector<2x24xf32>
    %893 = vector.broadcast %891 : vector<1x24xf32> to vector<2x24xf32>
    %894 = arith.mulf %892, %893 : vector<2x24xf32>
    %895 = arith.addf %889, %894 : vector<2x24xf32>
    %896 = vector.extract_strided_slice %740 {offsets = [0, 4], sizes = [2, 1], strides = [1, 1]} : vector<2x6xf32> to vector<2x1xf32>
    %897 = vector.extract_strided_slice %7 {offsets = [4, 0], sizes = [1, 24], strides = [1, 1]} : vector<6x24xf32> to vector<1x24xf32>
    %898 = vector.broadcast %896 : vector<2x1xf32> to vector<2x24xf32>
    %899 = vector.broadcast %897 : vector<1x24xf32> to vector<2x24xf32>
    %900 = arith.mulf %898, %899 : vector<2x24xf32>
    %901 = arith.addf %895, %900 : vector<2x24xf32>
    %902 = vector.extract_strided_slice %740 {offsets = [0, 5], sizes = [2, 1], strides = [1, 1]} : vector<2x6xf32> to vector<2x1xf32>
    %903 = vector.extract_strided_slice %7 {offsets = [5, 0], sizes = [1, 24], strides = [1, 1]} : vector<6x24xf32> to vector<1x24xf32>
    %904 = vector.broadcast %902 : vector<2x1xf32> to vector<2x24xf32>
    %905 = vector.broadcast %903 : vector<1x24xf32> to vector<2x24xf32>
    %906 = arith.mulf %904, %905 : vector<2x24xf32>
    %907 = arith.addf %901, %906 : vector<2x24xf32>
    %908 = arith.addf %872, %907 : vector<2x24xf32>
    %909 = math.tanh %908 : vector<2x24xf32>
    %910 = vector.extract_strided_slice %909 {offsets = [0, 0], sizes = [2, 18], strides = [1, 1]} : vector<2x24xf32> to vector<2x18xf32>
    %cst_56 = arith.constant 5.000000e-01 : f32
    %911 = vector.broadcast %cst_56 : f32 to vector<2x18xf32>
    %912 = arith.mulf %911, %910 : vector<2x18xf32>
    %cst_57 = arith.constant 5.000000e-01 : f32
    %913 = vector.broadcast %cst_57 : f32 to vector<2x18xf32>
    %914 = arith.addf %912, %913 : vector<2x18xf32>
    %915 = vector.extract_strided_slice %914 {offsets = [0, 0], sizes = [2, 6], strides = [1, 1]} : vector<2x18xf32> to vector<2x6xf32>
    %916 = vector.extract_strided_slice %914 {offsets = [0, 6], sizes = [2, 6], strides = [1, 1]} : vector<2x18xf32> to vector<2x6xf32>
    %917 = vector.extract_strided_slice %914 {offsets = [0, 12], sizes = [2, 6], strides = [1, 1]} : vector<2x18xf32> to vector<2x6xf32>
    %918 = vector.extract_strided_slice %909 {offsets = [0, 18], sizes = [2, 6], strides = [1, 1]} : vector<2x24xf32> to vector<2x6xf32>
    %919 = arith.mulf %916, %738 : vector<2x6xf32>
    %920 = arith.mulf %915, %918 : vector<2x6xf32>
    %921 = arith.addf %919, %920 : vector<2x6xf32>
    %922 = math.tanh %921 : vector<2x6xf32>
    %923 = arith.mulf %917, %922 : vector<2x6xf32>
    %924 = arith.index_cast %c4_i32 : i32 to index
    %c0_58 = arith.constant 0 : index
    %c0_59 = arith.constant 0 : index
    %925 = vector.load %arg8[%924, %c0_58, %c0_59] : memref<8x2x6xf32, #tpu.memory_space<vmem>>, vector<1x2x6xf32>
    %926 = vector.shape_cast %925 : vector<1x2x6xf32> to vector<2x6xf32>
    %927 = vector.shape_cast %923 : vector<2x6xf32> to vector<1x2x6xf32>
    tpu.vector_store %arg8[%924, %c0_58, %c0_59], %927 {strides = array<i32>} : memref<8x2x6xf32, #tpu.memory_space<vmem>>, vector<1x2x6xf32>,
    %c5_i32 = arith.constant 5 : i32
    %928 = arith.index_cast %c5_i32 : i32 to index
    %c0_60 = arith.constant 0 : index
    %c0_61 = arith.constant 0 : index
    %929 = vector.load %arg1[%928, %c0_60, %c0_61] : memref<8x2x6xf32, #tpu.memory_space<vmem>>, vector<1x2x6xf32>
    %930 = vector.shape_cast %929 : vector<1x2x6xf32> to vector<2x6xf32>
    %931 = vector.extract_strided_slice %930 {offsets = [0, 0], sizes = [2, 1], strides = [1, 1]} : vector<2x6xf32> to vector<2x1xf32>
    %932 = vector.extract_strided_slice %3 {offsets = [0, 0], sizes = [1, 24], strides = [1, 1]} : vector<6x24xf32> to vector<1x24xf32>
    %933 = vector.broadcast %931 : vector<2x1xf32> to vector<2x24xf32>
    %934 = vector.broadcast %932 : vector<1x24xf32> to vector<2x24xf32>
    %935 = arith.mulf %933, %934 : vector<2x24xf32>
    %936 = vector.extract_strided_slice %930 {offsets = [0, 1], sizes = [2, 1], strides = [1, 1]} : vector<2x6xf32> to vector<2x1xf32>
    %937 = vector.extract_strided_slice %3 {offsets = [1, 0], sizes = [1, 24], strides = [1, 1]} : vector<6x24xf32> to vector<1x24xf32>
    %938 = vector.broadcast %936 : vector<2x1xf32> to vector<2x24xf32>
    %939 = vector.broadcast %937 : vector<1x24xf32> to vector<2x24xf32>
    %940 = arith.mulf %938, %939 : vector<2x24xf32>
    %941 = arith.addf %935, %940 : vector<2x24xf32>
    %942 = vector.extract_strided_slice %930 {offsets = [0, 2], sizes = [2, 1], strides = [1, 1]} : vector<2x6xf32> to vector<2x1xf32>
    %943 = vector.extract_strided_slice %3 {offsets = [2, 0], sizes = [1, 24], strides = [1, 1]} : vector<6x24xf32> to vector<1x24xf32>
    %944 = vector.broadcast %942 : vector<2x1xf32> to vector<2x24xf32>
    %945 = vector.broadcast %943 : vector<1x24xf32> to vector<2x24xf32>
    %946 = arith.mulf %944, %945 : vector<2x24xf32>
    %947 = arith.addf %941, %946 : vector<2x24xf32>
    %948 = vector.extract_strided_slice %930 {offsets = [0, 3], sizes = [2, 1], strides = [1, 1]} : vector<2x6xf32> to vector<2x1xf32>
    %949 = vector.extract_strided_slice %3 {offsets = [3, 0], sizes = [1, 24], strides = [1, 1]} : vector<6x24xf32> to vector<1x24xf32>
    %950 = vector.broadcast %948 : vector<2x1xf32> to vector<2x24xf32>
    %951 = vector.broadcast %949 : vector<1x24xf32> to vector<2x24xf32>
    %952 = arith.mulf %950, %951 : vector<2x24xf32>
    %953 = arith.addf %947, %952 : vector<2x24xf32>
    %954 = vector.extract_strided_slice %930 {offsets = [0, 4], sizes = [2, 1], strides = [1, 1]} : vector<2x6xf32> to vector<2x1xf32>
    %955 = vector.extract_strided_slice %3 {offsets = [4, 0], sizes = [1, 24], strides = [1, 1]} : vector<6x24xf32> to vector<1x24xf32>
    %956 = vector.broadcast %954 : vector<2x1xf32> to vector<2x24xf32>
    %957 = vector.broadcast %955 : vector<1x24xf32> to vector<2x24xf32>
    %958 = arith.mulf %956, %957 : vector<2x24xf32>
    %959 = arith.addf %953, %958 : vector<2x24xf32>
    %960 = vector.extract_strided_slice %930 {offsets = [0, 5], sizes = [2, 1], strides = [1, 1]} : vector<2x6xf32> to vector<2x1xf32>
    %961 = vector.extract_strided_slice %3 {offsets = [5, 0], sizes = [1, 24], strides = [1, 1]} : vector<6x24xf32> to vector<1x24xf32>
    %962 = vector.broadcast %960 : vector<2x1xf32> to vector<2x24xf32>
    %963 = vector.broadcast %961 : vector<1x24xf32> to vector<2x24xf32>
    %964 = arith.mulf %962, %963 : vector<2x24xf32>
    %965 = arith.addf %959, %964 : vector<2x24xf32>
    %966 = vector.broadcast %5 : vector<1x24xf32> to vector<2x24xf32>
    %967 = arith.addf %966, %965 : vector<2x24xf32>
    %968 = vector.extract_strided_slice %835 {offsets = [0, 0], sizes = [2, 1], strides = [1, 1]} : vector<2x6xf32> to vector<2x1xf32>
    %969 = vector.extract_strided_slice %4 {offsets = [0, 0], sizes = [1, 24], strides = [1, 1]} : vector<6x24xf32> to vector<1x24xf32>
    %970 = vector.broadcast %968 : vector<2x1xf32> to vector<2x24xf32>
    %971 = vector.broadcast %969 : vector<1x24xf32> to vector<2x24xf32>
    %972 = arith.mulf %970, %971 : vector<2x24xf32>
    %973 = vector.extract_strided_slice %835 {offsets = [0, 1], sizes = [2, 1], strides = [1, 1]} : vector<2x6xf32> to vector<2x1xf32>
    %974 = vector.extract_strided_slice %4 {offsets = [1, 0], sizes = [1, 24], strides = [1, 1]} : vector<6x24xf32> to vector<1x24xf32>
    %975 = vector.broadcast %973 : vector<2x1xf32> to vector<2x24xf32>
    %976 = vector.broadcast %974 : vector<1x24xf32> to vector<2x24xf32>
    %977 = arith.mulf %975, %976 : vector<2x24xf32>
    %978 = arith.addf %972, %977 : vector<2x24xf32>
    %979 = vector.extract_strided_slice %835 {offsets = [0, 2], sizes = [2, 1], strides = [1, 1]} : vector<2x6xf32> to vector<2x1xf32>
    %980 = vector.extract_strided_slice %4 {offsets = [2, 0], sizes = [1, 24], strides = [1, 1]} : vector<6x24xf32> to vector<1x24xf32>
    %981 = vector.broadcast %979 : vector<2x1xf32> to vector<2x24xf32>
    %982 = vector.broadcast %980 : vector<1x24xf32> to vector<2x24xf32>
    %983 = arith.mulf %981, %982 : vector<2x24xf32>
    %984 = arith.addf %978, %983 : vector<2x24xf32>
    %985 = vector.extract_strided_slice %835 {offsets = [0, 3], sizes = [2, 1], strides = [1, 1]} : vector<2x6xf32> to vector<2x1xf32>
    %986 = vector.extract_strided_slice %4 {offsets = [3, 0], sizes = [1, 24], strides = [1, 1]} : vector<6x24xf32> to vector<1x24xf32>
    %987 = vector.broadcast %985 : vector<2x1xf32> to vector<2x24xf32>
    %988 = vector.broadcast %986 : vector<1x24xf32> to vector<2x24xf32>
    %989 = arith.mulf %987, %988 : vector<2x24xf32>
    %990 = arith.addf %984, %989 : vector<2x24xf32>
    %991 = vector.extract_strided_slice %835 {offsets = [0, 4], sizes = [2, 1], strides = [1, 1]} : vector<2x6xf32> to vector<2x1xf32>
    %992 = vector.extract_strided_slice %4 {offsets = [4, 0], sizes = [1, 24], strides = [1, 1]} : vector<6x24xf32> to vector<1x24xf32>
    %993 = vector.broadcast %991 : vector<2x1xf32> to vector<2x24xf32>
    %994 = vector.broadcast %992 : vector<1x24xf32> to vector<2x24xf32>
    %995 = arith.mulf %993, %994 : vector<2x24xf32>
    %996 = arith.addf %990, %995 : vector<2x24xf32>
    %997 = vector.extract_strided_slice %835 {offsets = [0, 5], sizes = [2, 1], strides = [1, 1]} : vector<2x6xf32> to vector<2x1xf32>
    %998 = vector.extract_strided_slice %4 {offsets = [5, 0], sizes = [1, 24], strides = [1, 1]} : vector<6x24xf32> to vector<1x24xf32>
    %999 = vector.broadcast %997 : vector<2x1xf32> to vector<2x24xf32>
    %1000 = vector.broadcast %998 : vector<1x24xf32> to vector<2x24xf32>
    %1001 = arith.mulf %999, %1000 : vector<2x24xf32>
    %1002 = arith.addf %996, %1001 : vector<2x24xf32>
    %1003 = arith.addf %967, %1002 : vector<2x24xf32>
    %1004 = math.tanh %1003 : vector<2x24xf32>
    %1005 = vector.extract_strided_slice %1004 {offsets = [0, 0], sizes = [2, 18], strides = [1, 1]} : vector<2x24xf32> to vector<2x18xf32>
    %cst_62 = arith.constant 5.000000e-01 : f32
    %1006 = vector.broadcast %cst_62 : f32 to vector<2x18xf32>
    %1007 = arith.mulf %1006, %1005 : vector<2x18xf32>
    %cst_63 = arith.constant 5.000000e-01 : f32
    %1008 = vector.broadcast %cst_63 : f32 to vector<2x18xf32>
    %1009 = arith.addf %1007, %1008 : vector<2x18xf32>
    %1010 = vector.extract_strided_slice %1009 {offsets = [0, 0], sizes = [2, 6], strides = [1, 1]} : vector<2x18xf32> to vector<2x6xf32>
    %1011 = vector.extract_strided_slice %1009 {offsets = [0, 6], sizes = [2, 6], strides = [1, 1]} : vector<2x18xf32> to vector<2x6xf32>
    %1012 = vector.extract_strided_slice %1009 {offsets = [0, 12], sizes = [2, 6], strides = [1, 1]} : vector<2x18xf32> to vector<2x6xf32>
    %1013 = vector.extract_strided_slice %1004 {offsets = [0, 18], sizes = [2, 6], strides = [1, 1]} : vector<2x24xf32> to vector<2x6xf32>
    %1014 = arith.mulf %1011, %833 : vector<2x6xf32>
    %1015 = arith.mulf %1010, %1013 : vector<2x6xf32>
    %1016 = arith.addf %1014, %1015 : vector<2x6xf32>
    %1017 = math.tanh %1016 : vector<2x6xf32>
    %1018 = arith.mulf %1012, %1017 : vector<2x6xf32>
    %1019 = vector.extract_strided_slice %1018 {offsets = [0, 0], sizes = [2, 1], strides = [1, 1]} : vector<2x6xf32> to vector<2x1xf32>
    %1020 = vector.extract_strided_slice %6 {offsets = [0, 0], sizes = [1, 24], strides = [1, 1]} : vector<6x24xf32> to vector<1x24xf32>
    %1021 = vector.broadcast %1019 : vector<2x1xf32> to vector<2x24xf32>
    %1022 = vector.broadcast %1020 : vector<1x24xf32> to vector<2x24xf32>
    %1023 = arith.mulf %1021, %1022 : vector<2x24xf32>
    %1024 = vector.extract_strided_slice %1018 {offsets = [0, 1], sizes = [2, 1], strides = [1, 1]} : vector<2x6xf32> to vector<2x1xf32>
    %1025 = vector.extract_strided_slice %6 {offsets = [1, 0], sizes = [1, 24], strides = [1, 1]} : vector<6x24xf32> to vector<1x24xf32>
    %1026 = vector.broadcast %1024 : vector<2x1xf32> to vector<2x24xf32>
    %1027 = vector.broadcast %1025 : vector<1x24xf32> to vector<2x24xf32>
    %1028 = arith.mulf %1026, %1027 : vector<2x24xf32>
    %1029 = arith.addf %1023, %1028 : vector<2x24xf32>
    %1030 = vector.extract_strided_slice %1018 {offsets = [0, 2], sizes = [2, 1], strides = [1, 1]} : vector<2x6xf32> to vector<2x1xf32>
    %1031 = vector.extract_strided_slice %6 {offsets = [2, 0], sizes = [1, 24], strides = [1, 1]} : vector<6x24xf32> to vector<1x24xf32>
    %1032 = vector.broadcast %1030 : vector<2x1xf32> to vector<2x24xf32>
    %1033 = vector.broadcast %1031 : vector<1x24xf32> to vector<2x24xf32>
    %1034 = arith.mulf %1032, %1033 : vector<2x24xf32>
    %1035 = arith.addf %1029, %1034 : vector<2x24xf32>
    %1036 = vector.extract_strided_slice %1018 {offsets = [0, 3], sizes = [2, 1], strides = [1, 1]} : vector<2x6xf32> to vector<2x1xf32>
    %1037 = vector.extract_strided_slice %6 {offsets = [3, 0], sizes = [1, 24], strides = [1, 1]} : vector<6x24xf32> to vector<1x24xf32>
    %1038 = vector.broadcast %1036 : vector<2x1xf32> to vector<2x24xf32>
    %1039 = vector.broadcast %1037 : vector<1x24xf32> to vector<2x24xf32>
    %1040 = arith.mulf %1038, %1039 : vector<2x24xf32>
    %1041 = arith.addf %1035, %1040 : vector<2x24xf32>
    %1042 = vector.extract_strided_slice %1018 {offsets = [0, 4], sizes = [2, 1], strides = [1, 1]} : vector<2x6xf32> to vector<2x1xf32>
    %1043 = vector.extract_strided_slice %6 {offsets = [4, 0], sizes = [1, 24], strides = [1, 1]} : vector<6x24xf32> to vector<1x24xf32>
    %1044 = vector.broadcast %1042 : vector<2x1xf32> to vector<2x24xf32>
    %1045 = vector.broadcast %1043 : vector<1x24xf32> to vector<2x24xf32>
    %1046 = arith.mulf %1044, %1045 : vector<2x24xf32>
    %1047 = arith.addf %1041, %1046 : vector<2x24xf32>
    %1048 = vector.extract_strided_slice %1018 {offsets = [0, 5], sizes = [2, 1], strides = [1, 1]} : vector<2x6xf32> to vector<2x1xf32>
    %1049 = vector.extract_strided_slice %6 {offsets = [5, 0], sizes = [1, 24], strides = [1, 1]} : vector<6x24xf32> to vector<1x24xf32>
    %1050 = vector.broadcast %1048 : vector<2x1xf32> to vector<2x24xf32>
    %1051 = vector.broadcast %1049 : vector<1x24xf32> to vector<2x24xf32>
    %1052 = arith.mulf %1050, %1051 : vector<2x24xf32>
    %1053 = arith.addf %1047, %1052 : vector<2x24xf32>
    %1054 = vector.broadcast %8 : vector<1x24xf32> to vector<2x24xf32>
    %1055 = arith.addf %1054, %1053 : vector<2x24xf32>
    %1056 = vector.extract_strided_slice %923 {offsets = [0, 0], sizes = [2, 1], strides = [1, 1]} : vector<2x6xf32> to vector<2x1xf32>
    %1057 = vector.extract_strided_slice %7 {offsets = [0, 0], sizes = [1, 24], strides = [1, 1]} : vector<6x24xf32> to vector<1x24xf32>
    %1058 = vector.broadcast %1056 : vector<2x1xf32> to vector<2x24xf32>
    %1059 = vector.broadcast %1057 : vector<1x24xf32> to vector<2x24xf32>
    %1060 = arith.mulf %1058, %1059 : vector<2x24xf32>
    %1061 = vector.extract_strided_slice %923 {offsets = [0, 1], sizes = [2, 1], strides = [1, 1]} : vector<2x6xf32> to vector<2x1xf32>
    %1062 = vector.extract_strided_slice %7 {offsets = [1, 0], sizes = [1, 24], strides = [1, 1]} : vector<6x24xf32> to vector<1x24xf32>
    %1063 = vector.broadcast %1061 : vector<2x1xf32> to vector<2x24xf32>
    %1064 = vector.broadcast %1062 : vector<1x24xf32> to vector<2x24xf32>
    %1065 = arith.mulf %1063, %1064 : vector<2x24xf32>
    %1066 = arith.addf %1060, %1065 : vector<2x24xf32>
    %1067 = vector.extract_strided_slice %923 {offsets = [0, 2], sizes = [2, 1], strides = [1, 1]} : vector<2x6xf32> to vector<2x1xf32>
    %1068 = vector.extract_strided_slice %7 {offsets = [2, 0], sizes = [1, 24], strides = [1, 1]} : vector<6x24xf32> to vector<1x24xf32>
    %1069 = vector.broadcast %1067 : vector<2x1xf32> to vector<2x24xf32>
    %1070 = vector.broadcast %1068 : vector<1x24xf32> to vector<2x24xf32>
    %1071 = arith.mulf %1069, %1070 : vector<2x24xf32>
    %1072 = arith.addf %1066, %1071 : vector<2x24xf32>
    %1073 = vector.extract_strided_slice %923 {offsets = [0, 3], sizes = [2, 1], strides = [1, 1]} : vector<2x6xf32> to vector<2x1xf32>
    %1074 = vector.extract_strided_slice %7 {offsets = [3, 0], sizes = [1, 24], strides = [1, 1]} : vector<6x24xf32> to vector<1x24xf32>
    %1075 = vector.broadcast %1073 : vector<2x1xf32> to vector<2x24xf32>
    %1076 = vector.broadcast %1074 : vector<1x24xf32> to vector<2x24xf32>
    %1077 = arith.mulf %1075, %1076 : vector<2x24xf32>
    %1078 = arith.addf %1072, %1077 : vector<2x24xf32>
    %1079 = vector.extract_strided_slice %923 {offsets = [0, 4], sizes = [2, 1], strides = [1, 1]} : vector<2x6xf32> to vector<2x1xf32>
    %1080 = vector.extract_strided_slice %7 {offsets = [4, 0], sizes = [1, 24], strides = [1, 1]} : vector<6x24xf32> to vector<1x24xf32>
    %1081 = vector.broadcast %1079 : vector<2x1xf32> to vector<2x24xf32>
    %1082 = vector.broadcast %1080 : vector<1x24xf32> to vector<2x24xf32>
    %1083 = arith.mulf %1081, %1082 : vector<2x24xf32>
    %1084 = arith.addf %1078, %1083 : vector<2x24xf32>
    %1085 = vector.extract_strided_slice %923 {offsets = [0, 5], sizes = [2, 1], strides = [1, 1]} : vector<2x6xf32> to vector<2x1xf32>
    %1086 = vector.extract_strided_slice %7 {offsets = [5, 0], sizes = [1, 24], strides = [1, 1]} : vector<6x24xf32> to vector<1x24xf32>
    %1087 = vector.broadcast %1085 : vector<2x1xf32> to vector<2x24xf32>
    %1088 = vector.broadcast %1086 : vector<1x24xf32> to vector<2x24xf32>
    %1089 = arith.mulf %1087, %1088 : vector<2x24xf32>
    %1090 = arith.addf %1084, %1089 : vector<2x24xf32>
    %1091 = arith.addf %1055, %1090 : vector<2x24xf32>
    %1092 = math.tanh %1091 : vector<2x24xf32>
    %1093 = vector.extract_strided_slice %1092 {offsets = [0, 0], sizes = [2, 18], strides = [1, 1]} : vector<2x24xf32> to vector<2x18xf32>
    %cst_64 = arith.constant 5.000000e-01 : f32
    %1094 = vector.broadcast %cst_64 : f32 to vector<2x18xf32>
    %1095 = arith.mulf %1094, %1093 : vector<2x18xf32>
    %cst_65 = arith.constant 5.000000e-01 : f32
    %1096 = vector.broadcast %cst_65 : f32 to vector<2x18xf32>
    %1097 = arith.addf %1095, %1096 : vector<2x18xf32>
    %1098 = vector.extract_strided_slice %1097 {offsets = [0, 0], sizes = [2, 6], strides = [1, 1]} : vector<2x18xf32> to vector<2x6xf32>
    %1099 = vector.extract_strided_slice %1097 {offsets = [0, 6], sizes = [2, 6], strides = [1, 1]} : vector<2x18xf32> to vector<2x6xf32>
    %1100 = vector.extract_strided_slice %1097 {offsets = [0, 12], sizes = [2, 6], strides = [1, 1]} : vector<2x18xf32> to vector<2x6xf32>
    %1101 = vector.extract_strided_slice %1092 {offsets = [0, 18], sizes = [2, 6], strides = [1, 1]} : vector<2x24xf32> to vector<2x6xf32>
    %1102 = arith.mulf %1099, %921 : vector<2x6xf32>
    %1103 = arith.mulf %1098, %1101 : vector<2x6xf32>
    %1104 = arith.addf %1102, %1103 : vector<2x6xf32>
    %1105 = math.tanh %1104 : vector<2x6xf32>
    %1106 = arith.mulf %1100, %1105 : vector<2x6xf32>
    %1107 = arith.index_cast %c5_i32 : i32 to index
    %c0_66 = arith.constant 0 : index
    %c0_67 = arith.constant 0 : index
    %1108 = vector.load %arg8[%1107, %c0_66, %c0_67] : memref<8x2x6xf32, #tpu.memory_space<vmem>>, vector<1x2x6xf32>
    %1109 = vector.shape_cast %1108 : vector<1x2x6xf32> to vector<2x6xf32>
    %1110 = vector.shape_cast %1106 : vector<2x6xf32> to vector<1x2x6xf32>
    tpu.vector_store %arg8[%1107, %c0_66, %c0_67], %1110 {strides = array<i32>} : memref<8x2x6xf32, #tpu.memory_space<vmem>>, vector<1x2x6xf32>,
    %c6_i32 = arith.constant 6 : i32
    %1111 = arith.index_cast %c6_i32 : i32 to index
    %c0_68 = arith.constant 0 : index
    %c0_69 = arith.constant 0 : index
    %1112 = vector.load %arg1[%1111, %c0_68, %c0_69] : memref<8x2x6xf32, #tpu.memory_space<vmem>>, vector<1x2x6xf32>
    %1113 = vector.shape_cast %1112 : vector<1x2x6xf32> to vector<2x6xf32>
    %1114 = vector.extract_strided_slice %1113 {offsets = [0, 0], sizes = [2, 1], strides = [1, 1]} : vector<2x6xf32> to vector<2x1xf32>
    %1115 = vector.extract_strided_slice %3 {offsets = [0, 0], sizes = [1, 24], strides = [1, 1]} : vector<6x24xf32> to vector<1x24xf32>
    %1116 = vector.broadcast %1114 : vector<2x1xf32> to vector<2x24xf32>
    %1117 = vector.broadcast %1115 : vector<1x24xf32> to vector<2x24xf32>
    %1118 = arith.mulf %1116, %1117 : vector<2x24xf32>
    %1119 = vector.extract_strided_slice %1113 {offsets = [0, 1], sizes = [2, 1], strides = [1, 1]} : vector<2x6xf32> to vector<2x1xf32>
    %1120 = vector.extract_strided_slice %3 {offsets = [1, 0], sizes = [1, 24], strides = [1, 1]} : vector<6x24xf32> to vector<1x24xf32>
    %1121 = vector.broadcast %1119 : vector<2x1xf32> to vector<2x24xf32>
    %1122 = vector.broadcast %1120 : vector<1x24xf32> to vector<2x24xf32>
    %1123 = arith.mulf %1121, %1122 : vector<2x24xf32>
    %1124 = arith.addf %1118, %1123 : vector<2x24xf32>
    %1125 = vector.extract_strided_slice %1113 {offsets = [0, 2], sizes = [2, 1], strides = [1, 1]} : vector<2x6xf32> to vector<2x1xf32>
    %1126 = vector.extract_strided_slice %3 {offsets = [2, 0], sizes = [1, 24], strides = [1, 1]} : vector<6x24xf32> to vector<1x24xf32>
    %1127 = vector.broadcast %1125 : vector<2x1xf32> to vector<2x24xf32>
    %1128 = vector.broadcast %1126 : vector<1x24xf32> to vector<2x24xf32>
    %1129 = arith.mulf %1127, %1128 : vector<2x24xf32>
    %1130 = arith.addf %1124, %1129 : vector<2x24xf32>
    %1131 = vector.extract_strided_slice %1113 {offsets = [0, 3], sizes = [2, 1], strides = [1, 1]} : vector<2x6xf32> to vector<2x1xf32>
    %1132 = vector.extract_strided_slice %3 {offsets = [3, 0], sizes = [1, 24], strides = [1, 1]} : vector<6x24xf32> to vector<1x24xf32>
    %1133 = vector.broadcast %1131 : vector<2x1xf32> to vector<2x24xf32>
    %1134 = vector.broadcast %1132 : vector<1x24xf32> to vector<2x24xf32>
    %1135 = arith.mulf %1133, %1134 : vector<2x24xf32>
    %1136 = arith.addf %1130, %1135 : vector<2x24xf32>
    %1137 = vector.extract_strided_slice %1113 {offsets = [0, 4], sizes = [2, 1], strides = [1, 1]} : vector<2x6xf32> to vector<2x1xf32>
    %1138 = vector.extract_strided_slice %3 {offsets = [4, 0], sizes = [1, 24], strides = [1, 1]} : vector<6x24xf32> to vector<1x24xf32>
    %1139 = vector.broadcast %1137 : vector<2x1xf32> to vector<2x24xf32>
    %1140 = vector.broadcast %1138 : vector<1x24xf32> to vector<2x24xf32>
    %1141 = arith.mulf %1139, %1140 : vector<2x24xf32>
    %1142 = arith.addf %1136, %1141 : vector<2x24xf32>
    %1143 = vector.extract_strided_slice %1113 {offsets = [0, 5], sizes = [2, 1], strides = [1, 1]} : vector<2x6xf32> to vector<2x1xf32>
    %1144 = vector.extract_strided_slice %3 {offsets = [5, 0], sizes = [1, 24], strides = [1, 1]} : vector<6x24xf32> to vector<1x24xf32>
    %1145 = vector.broadcast %1143 : vector<2x1xf32> to vector<2x24xf32>
    %1146 = vector.broadcast %1144 : vector<1x24xf32> to vector<2x24xf32>
    %1147 = arith.mulf %1145, %1146 : vector<2x24xf32>
    %1148 = arith.addf %1142, %1147 : vector<2x24xf32>
    %1149 = vector.broadcast %5 : vector<1x24xf32> to vector<2x24xf32>
    %1150 = arith.addf %1149, %1148 : vector<2x24xf32>
    %1151 = vector.extract_strided_slice %1018 {offsets = [0, 0], sizes = [2, 1], strides = [1, 1]} : vector<2x6xf32> to vector<2x1xf32>
    %1152 = vector.extract_strided_slice %4 {offsets = [0, 0], sizes = [1, 24], strides = [1, 1]} : vector<6x24xf32> to vector<1x24xf32>
    %1153 = vector.broadcast %1151 : vector<2x1xf32> to vector<2x24xf32>
    %1154 = vector.broadcast %1152 : vector<1x24xf32> to vector<2x24xf32>
    %1155 = arith.mulf %1153, %1154 : vector<2x24xf32>
    %1156 = vector.extract_strided_slice %1018 {offsets = [0, 1], sizes = [2, 1], strides = [1, 1]} : vector<2x6xf32> to vector<2x1xf32>
    %1157 = vector.extract_strided_slice %4 {offsets = [1, 0], sizes = [1, 24], strides = [1, 1]} : vector<6x24xf32> to vector<1x24xf32>
    %1158 = vector.broadcast %1156 : vector<2x1xf32> to vector<2x24xf32>
    %1159 = vector.broadcast %1157 : vector<1x24xf32> to vector<2x24xf32>
    %1160 = arith.mulf %1158, %1159 : vector<2x24xf32>
    %1161 = arith.addf %1155, %1160 : vector<2x24xf32>
    %1162 = vector.extract_strided_slice %1018 {offsets = [0, 2], sizes = [2, 1], strides = [1, 1]} : vector<2x6xf32> to vector<2x1xf32>
    %1163 = vector.extract_strided_slice %4 {offsets = [2, 0], sizes = [1, 24], strides = [1, 1]} : vector<6x24xf32> to vector<1x24xf32>
    %1164 = vector.broadcast %1162 : vector<2x1xf32> to vector<2x24xf32>
    %1165 = vector.broadcast %1163 : vector<1x24xf32> to vector<2x24xf32>
    %1166 = arith.mulf %1164, %1165 : vector<2x24xf32>
    %1167 = arith.addf %1161, %1166 : vector<2x24xf32>
    %1168 = vector.extract_strided_slice %1018 {offsets = [0, 3], sizes = [2, 1], strides = [1, 1]} : vector<2x6xf32> to vector<2x1xf32>
    %1169 = vector.extract_strided_slice %4 {offsets = [3, 0], sizes = [1, 24], strides = [1, 1]} : vector<6x24xf32> to vector<1x24xf32>
    %1170 = vector.broadcast %1168 : vector<2x1xf32> to vector<2x24xf32>
    %1171 = vector.broadcast %1169 : vector<1x24xf32> to vector<2x24xf32>
    %1172 = arith.mulf %1170, %1171 : vector<2x24xf32>
    %1173 = arith.addf %1167, %1172 : vector<2x24xf32>
    %1174 = vector.extract_strided_slice %1018 {offsets = [0, 4], sizes = [2, 1], strides = [1, 1]} : vector<2x6xf32> to vector<2x1xf32>
    %1175 = vector.extract_strided_slice %4 {offsets = [4, 0], sizes = [1, 24], strides = [1, 1]} : vector<6x24xf32> to vector<1x24xf32>
    %1176 = vector.broadcast %1174 : vector<2x1xf32> to vector<2x24xf32>
    %1177 = vector.broadcast %1175 : vector<1x24xf32> to vector<2x24xf32>
    %1178 = arith.mulf %1176, %1177 : vector<2x24xf32>
    %1179 = arith.addf %1173, %1178 : vector<2x24xf32>
    %1180 = vector.extract_strided_slice %1018 {offsets = [0, 5], sizes = [2, 1], strides = [1, 1]} : vector<2x6xf32> to vector<2x1xf32>
    %1181 = vector.extract_strided_slice %4 {offsets = [5, 0], sizes = [1, 24], strides = [1, 1]} : vector<6x24xf32> to vector<1x24xf32>
    %1182 = vector.broadcast %1180 : vector<2x1xf32> to vector<2x24xf32>
    %1183 = vector.broadcast %1181 : vector<1x24xf32> to vector<2x24xf32>
    %1184 = arith.mulf %1182, %1183 : vector<2x24xf32>
    %1185 = arith.addf %1179, %1184 : vector<2x24xf32>
    %1186 = arith.addf %1150, %1185 : vector<2x24xf32>
    %1187 = math.tanh %1186 : vector<2x24xf32>
    %1188 = vector.extract_strided_slice %1187 {offsets = [0, 0], sizes = [2, 18], strides = [1, 1]} : vector<2x24xf32> to vector<2x18xf32>
    %cst_70 = arith.constant 5.000000e-01 : f32
    %1189 = vector.broadcast %cst_70 : f32 to vector<2x18xf32>
    %1190 = arith.mulf %1189, %1188 : vector<2x18xf32>
    %cst_71 = arith.constant 5.000000e-01 : f32
    %1191 = vector.broadcast %cst_71 : f32 to vector<2x18xf32>
    %1192 = arith.addf %1190, %1191 : vector<2x18xf32>
    %1193 = vector.extract_strided_slice %1192 {offsets = [0, 0], sizes = [2, 6], strides = [1, 1]} : vector<2x18xf32> to vector<2x6xf32>
    %1194 = vector.extract_strided_slice %1192 {offsets = [0, 6], sizes = [2, 6], strides = [1, 1]} : vector<2x18xf32> to vector<2x6xf32>
    %1195 = vector.extract_strided_slice %1192 {offsets = [0, 12], sizes = [2, 6], strides = [1, 1]} : vector<2x18xf32> to vector<2x6xf32>
    %1196 = vector.extract_strided_slice %1187 {offsets = [0, 18], sizes = [2, 6], strides = [1, 1]} : vector<2x24xf32> to vector<2x6xf32>
    %1197 = arith.mulf %1194, %1016 : vector<2x6xf32>
    %1198 = arith.mulf %1193, %1196 : vector<2x6xf32>
    %1199 = arith.addf %1197, %1198 : vector<2x6xf32>
    %1200 = math.tanh %1199 : vector<2x6xf32>
    %1201 = arith.mulf %1195, %1200 : vector<2x6xf32>
    %1202 = vector.extract_strided_slice %1201 {offsets = [0, 0], sizes = [2, 1], strides = [1, 1]} : vector<2x6xf32> to vector<2x1xf32>
    %1203 = vector.extract_strided_slice %6 {offsets = [0, 0], sizes = [1, 24], strides = [1, 1]} : vector<6x24xf32> to vector<1x24xf32>
    %1204 = vector.broadcast %1202 : vector<2x1xf32> to vector<2x24xf32>
    %1205 = vector.broadcast %1203 : vector<1x24xf32> to vector<2x24xf32>
    %1206 = arith.mulf %1204, %1205 : vector<2x24xf32>
    %1207 = vector.extract_strided_slice %1201 {offsets = [0, 1], sizes = [2, 1], strides = [1, 1]} : vector<2x6xf32> to vector<2x1xf32>
    %1208 = vector.extract_strided_slice %6 {offsets = [1, 0], sizes = [1, 24], strides = [1, 1]} : vector<6x24xf32> to vector<1x24xf32>
    %1209 = vector.broadcast %1207 : vector<2x1xf32> to vector<2x24xf32>
    %1210 = vector.broadcast %1208 : vector<1x24xf32> to vector<2x24xf32>
    %1211 = arith.mulf %1209, %1210 : vector<2x24xf32>
    %1212 = arith.addf %1206, %1211 : vector<2x24xf32>
    %1213 = vector.extract_strided_slice %1201 {offsets = [0, 2], sizes = [2, 1], strides = [1, 1]} : vector<2x6xf32> to vector<2x1xf32>
    %1214 = vector.extract_strided_slice %6 {offsets = [2, 0], sizes = [1, 24], strides = [1, 1]} : vector<6x24xf32> to vector<1x24xf32>
    %1215 = vector.broadcast %1213 : vector<2x1xf32> to vector<2x24xf32>
    %1216 = vector.broadcast %1214 : vector<1x24xf32> to vector<2x24xf32>
    %1217 = arith.mulf %1215, %1216 : vector<2x24xf32>
    %1218 = arith.addf %1212, %1217 : vector<2x24xf32>
    %1219 = vector.extract_strided_slice %1201 {offsets = [0, 3], sizes = [2, 1], strides = [1, 1]} : vector<2x6xf32> to vector<2x1xf32>
    %1220 = vector.extract_strided_slice %6 {offsets = [3, 0], sizes = [1, 24], strides = [1, 1]} : vector<6x24xf32> to vector<1x24xf32>
    %1221 = vector.broadcast %1219 : vector<2x1xf32> to vector<2x24xf32>
    %1222 = vector.broadcast %1220 : vector<1x24xf32> to vector<2x24xf32>
    %1223 = arith.mulf %1221, %1222 : vector<2x24xf32>
    %1224 = arith.addf %1218, %1223 : vector<2x24xf32>
    %1225 = vector.extract_strided_slice %1201 {offsets = [0, 4], sizes = [2, 1], strides = [1, 1]} : vector<2x6xf32> to vector<2x1xf32>
    %1226 = vector.extract_strided_slice %6 {offsets = [4, 0], sizes = [1, 24], strides = [1, 1]} : vector<6x24xf32> to vector<1x24xf32>
    %1227 = vector.broadcast %1225 : vector<2x1xf32> to vector<2x24xf32>
    %1228 = vector.broadcast %1226 : vector<1x24xf32> to vector<2x24xf32>
    %1229 = arith.mulf %1227, %1228 : vector<2x24xf32>
    %1230 = arith.addf %1224, %1229 : vector<2x24xf32>
    %1231 = vector.extract_strided_slice %1201 {offsets = [0, 5], sizes = [2, 1], strides = [1, 1]} : vector<2x6xf32> to vector<2x1xf32>
    %1232 = vector.extract_strided_slice %6 {offsets = [5, 0], sizes = [1, 24], strides = [1, 1]} : vector<6x24xf32> to vector<1x24xf32>
    %1233 = vector.broadcast %1231 : vector<2x1xf32> to vector<2x24xf32>
    %1234 = vector.broadcast %1232 : vector<1x24xf32> to vector<2x24xf32>
    %1235 = arith.mulf %1233, %1234 : vector<2x24xf32>
    %1236 = arith.addf %1230, %1235 : vector<2x24xf32>
    %1237 = vector.broadcast %8 : vector<1x24xf32> to vector<2x24xf32>
    %1238 = arith.addf %1237, %1236 : vector<2x24xf32>
    %1239 = vector.extract_strided_slice %1106 {offsets = [0, 0], sizes = [2, 1], strides = [1, 1]} : vector<2x6xf32> to vector<2x1xf32>
    %1240 = vector.extract_strided_slice %7 {offsets = [0, 0], sizes = [1, 24], strides = [1, 1]} : vector<6x24xf32> to vector<1x24xf32>
    %1241 = vector.broadcast %1239 : vector<2x1xf32> to vector<2x24xf32>
    %1242 = vector.broadcast %1240 : vector<1x24xf32> to vector<2x24xf32>
    %1243 = arith.mulf %1241, %1242 : vector<2x24xf32>
    %1244 = vector.extract_strided_slice %1106 {offsets = [0, 1], sizes = [2, 1], strides = [1, 1]} : vector<2x6xf32> to vector<2x1xf32>
    %1245 = vector.extract_strided_slice %7 {offsets = [1, 0], sizes = [1, 24], strides = [1, 1]} : vector<6x24xf32> to vector<1x24xf32>
    %1246 = vector.broadcast %1244 : vector<2x1xf32> to vector<2x24xf32>
    %1247 = vector.broadcast %1245 : vector<1x24xf32> to vector<2x24xf32>
    %1248 = arith.mulf %1246, %1247 : vector<2x24xf32>
    %1249 = arith.addf %1243, %1248 : vector<2x24xf32>
    %1250 = vector.extract_strided_slice %1106 {offsets = [0, 2], sizes = [2, 1], strides = [1, 1]} : vector<2x6xf32> to vector<2x1xf32>
    %1251 = vector.extract_strided_slice %7 {offsets = [2, 0], sizes = [1, 24], strides = [1, 1]} : vector<6x24xf32> to vector<1x24xf32>
    %1252 = vector.broadcast %1250 : vector<2x1xf32> to vector<2x24xf32>
    %1253 = vector.broadcast %1251 : vector<1x24xf32> to vector<2x24xf32>
    %1254 = arith.mulf %1252, %1253 : vector<2x24xf32>
    %1255 = arith.addf %1249, %1254 : vector<2x24xf32>
    %1256 = vector.extract_strided_slice %1106 {offsets = [0, 3], sizes = [2, 1], strides = [1, 1]} : vector<2x6xf32> to vector<2x1xf32>
    %1257 = vector.extract_strided_slice %7 {offsets = [3, 0], sizes = [1, 24], strides = [1, 1]} : vector<6x24xf32> to vector<1x24xf32>
    %1258 = vector.broadcast %1256 : vector<2x1xf32> to vector<2x24xf32>
    %1259 = vector.broadcast %1257 : vector<1x24xf32> to vector<2x24xf32>
    %1260 = arith.mulf %1258, %1259 : vector<2x24xf32>
    %1261 = arith.addf %1255, %1260 : vector<2x24xf32>
    %1262 = vector.extract_strided_slice %1106 {offsets = [0, 4], sizes = [2, 1], strides = [1, 1]} : vector<2x6xf32> to vector<2x1xf32>
    %1263 = vector.extract_strided_slice %7 {offsets = [4, 0], sizes = [1, 24], strides = [1, 1]} : vector<6x24xf32> to vector<1x24xf32>
    %1264 = vector.broadcast %1262 : vector<2x1xf32> to vector<2x24xf32>
    %1265 = vector.broadcast %1263 : vector<1x24xf32> to vector<2x24xf32>
    %1266 = arith.mulf %1264, %1265 : vector<2x24xf32>
    %1267 = arith.addf %1261, %1266 : vector<2x24xf32>
    %1268 = vector.extract_strided_slice %1106 {offsets = [0, 5], sizes = [2, 1], strides = [1, 1]} : vector<2x6xf32> to vector<2x1xf32>
    %1269 = vector.extract_strided_slice %7 {offsets = [5, 0], sizes = [1, 24], strides = [1, 1]} : vector<6x24xf32> to vector<1x24xf32>
    %1270 = vector.broadcast %1268 : vector<2x1xf32> to vector<2x24xf32>
    %1271 = vector.broadcast %1269 : vector<1x24xf32> to vector<2x24xf32>
    %1272 = arith.mulf %1270, %1271 : vector<2x24xf32>
    %1273 = arith.addf %1267, %1272 : vector<2x24xf32>
    %1274 = arith.addf %1238, %1273 : vector<2x24xf32>
    %1275 = math.tanh %1274 : vector<2x24xf32>
    %1276 = vector.extract_strided_slice %1275 {offsets = [0, 0], sizes = [2, 18], strides = [1, 1]} : vector<2x24xf32> to vector<2x18xf32>
    %cst_72 = arith.constant 5.000000e-01 : f32
    %1277 = vector.broadcast %cst_72 : f32 to vector<2x18xf32>
    %1278 = arith.mulf %1277, %1276 : vector<2x18xf32>
    %cst_73 = arith.constant 5.000000e-01 : f32
    %1279 = vector.broadcast %cst_73 : f32 to vector<2x18xf32>
    %1280 = arith.addf %1278, %1279 : vector<2x18xf32>
    %1281 = vector.extract_strided_slice %1280 {offsets = [0, 0], sizes = [2, 6], strides = [1, 1]} : vector<2x18xf32> to vector<2x6xf32>
    %1282 = vector.extract_strided_slice %1280 {offsets = [0, 6], sizes = [2, 6], strides = [1, 1]} : vector<2x18xf32> to vector<2x6xf32>
    %1283 = vector.extract_strided_slice %1280 {offsets = [0, 12], sizes = [2, 6], strides = [1, 1]} : vector<2x18xf32> to vector<2x6xf32>
    %1284 = vector.extract_strided_slice %1275 {offsets = [0, 18], sizes = [2, 6], strides = [1, 1]} : vector<2x24xf32> to vector<2x6xf32>
    %1285 = arith.mulf %1282, %1104 : vector<2x6xf32>
    %1286 = arith.mulf %1281, %1284 : vector<2x6xf32>
    %1287 = arith.addf %1285, %1286 : vector<2x6xf32>
    %1288 = math.tanh %1287 : vector<2x6xf32>
    %1289 = arith.mulf %1283, %1288 : vector<2x6xf32>
    %1290 = arith.index_cast %c6_i32 : i32 to index
    %c0_74 = arith.constant 0 : index
    %c0_75 = arith.constant 0 : index
    %1291 = vector.load %arg8[%1290, %c0_74, %c0_75] : memref<8x2x6xf32, #tpu.memory_space<vmem>>, vector<1x2x6xf32>
    %1292 = vector.shape_cast %1291 : vector<1x2x6xf32> to vector<2x6xf32>
    %1293 = vector.shape_cast %1289 : vector<2x6xf32> to vector<1x2x6xf32>
    tpu.vector_store %arg8[%1290, %c0_74, %c0_75], %1293 {strides = array<i32>} : memref<8x2x6xf32, #tpu.memory_space<vmem>>, vector<1x2x6xf32>,
    %c7_i32 = arith.constant 7 : i32
    %1294 = arith.index_cast %c7_i32 : i32 to index
    %c0_76 = arith.constant 0 : index
    %c0_77 = arith.constant 0 : index
    %1295 = vector.load %arg1[%1294, %c0_76, %c0_77] : memref<8x2x6xf32, #tpu.memory_space<vmem>>, vector<1x2x6xf32>
    %1296 = vector.shape_cast %1295 : vector<1x2x6xf32> to vector<2x6xf32>
    %1297 = vector.extract_strided_slice %1296 {offsets = [0, 0], sizes = [2, 1], strides = [1, 1]} : vector<2x6xf32> to vector<2x1xf32>
    %1298 = vector.extract_strided_slice %3 {offsets = [0, 0], sizes = [1, 24], strides = [1, 1]} : vector<6x24xf32> to vector<1x24xf32>
    %1299 = vector.broadcast %1297 : vector<2x1xf32> to vector<2x24xf32>
    %1300 = vector.broadcast %1298 : vector<1x24xf32> to vector<2x24xf32>
    %1301 = arith.mulf %1299, %1300 : vector<2x24xf32>
    %1302 = vector.extract_strided_slice %1296 {offsets = [0, 1], sizes = [2, 1], strides = [1, 1]} : vector<2x6xf32> to vector<2x1xf32>
    %1303 = vector.extract_strided_slice %3 {offsets = [1, 0], sizes = [1, 24], strides = [1, 1]} : vector<6x24xf32> to vector<1x24xf32>
    %1304 = vector.broadcast %1302 : vector<2x1xf32> to vector<2x24xf32>
    %1305 = vector.broadcast %1303 : vector<1x24xf32> to vector<2x24xf32>
    %1306 = arith.mulf %1304, %1305 : vector<2x24xf32>
    %1307 = arith.addf %1301, %1306 : vector<2x24xf32>
    %1308 = vector.extract_strided_slice %1296 {offsets = [0, 2], sizes = [2, 1], strides = [1, 1]} : vector<2x6xf32> to vector<2x1xf32>
    %1309 = vector.extract_strided_slice %3 {offsets = [2, 0], sizes = [1, 24], strides = [1, 1]} : vector<6x24xf32> to vector<1x24xf32>
    %1310 = vector.broadcast %1308 : vector<2x1xf32> to vector<2x24xf32>
    %1311 = vector.broadcast %1309 : vector<1x24xf32> to vector<2x24xf32>
    %1312 = arith.mulf %1310, %1311 : vector<2x24xf32>
    %1313 = arith.addf %1307, %1312 : vector<2x24xf32>
    %1314 = vector.extract_strided_slice %1296 {offsets = [0, 3], sizes = [2, 1], strides = [1, 1]} : vector<2x6xf32> to vector<2x1xf32>
    %1315 = vector.extract_strided_slice %3 {offsets = [3, 0], sizes = [1, 24], strides = [1, 1]} : vector<6x24xf32> to vector<1x24xf32>
    %1316 = vector.broadcast %1314 : vector<2x1xf32> to vector<2x24xf32>
    %1317 = vector.broadcast %1315 : vector<1x24xf32> to vector<2x24xf32>
    %1318 = arith.mulf %1316, %1317 : vector<2x24xf32>
    %1319 = arith.addf %1313, %1318 : vector<2x24xf32>
    %1320 = vector.extract_strided_slice %1296 {offsets = [0, 4], sizes = [2, 1], strides = [1, 1]} : vector<2x6xf32> to vector<2x1xf32>
    %1321 = vector.extract_strided_slice %3 {offsets = [4, 0], sizes = [1, 24], strides = [1, 1]} : vector<6x24xf32> to vector<1x24xf32>
    %1322 = vector.broadcast %1320 : vector<2x1xf32> to vector<2x24xf32>
    %1323 = vector.broadcast %1321 : vector<1x24xf32> to vector<2x24xf32>
    %1324 = arith.mulf %1322, %1323 : vector<2x24xf32>
    %1325 = arith.addf %1319, %1324 : vector<2x24xf32>
    %1326 = vector.extract_strided_slice %1296 {offsets = [0, 5], sizes = [2, 1], strides = [1, 1]} : vector<2x6xf32> to vector<2x1xf32>
    %1327 = vector.extract_strided_slice %3 {offsets = [5, 0], sizes = [1, 24], strides = [1, 1]} : vector<6x24xf32> to vector<1x24xf32>
    %1328 = vector.broadcast %1326 : vector<2x1xf32> to vector<2x24xf32>
    %1329 = vector.broadcast %1327 : vector<1x24xf32> to vector<2x24xf32>
    %1330 = arith.mulf %1328, %1329 : vector<2x24xf32>
    %1331 = arith.addf %1325, %1330 : vector<2x24xf32>
    %1332 = vector.broadcast %5 : vector<1x24xf32> to vector<2x24xf32>
    %1333 = arith.addf %1332, %1331 : vector<2x24xf32>
    %1334 = vector.extract_strided_slice %1201 {offsets = [0, 0], sizes = [2, 1], strides = [1, 1]} : vector<2x6xf32> to vector<2x1xf32>
    %1335 = vector.extract_strided_slice %4 {offsets = [0, 0], sizes = [1, 24], strides = [1, 1]} : vector<6x24xf32> to vector<1x24xf32>
    %1336 = vector.broadcast %1334 : vector<2x1xf32> to vector<2x24xf32>
    %1337 = vector.broadcast %1335 : vector<1x24xf32> to vector<2x24xf32>
    %1338 = arith.mulf %1336, %1337 : vector<2x24xf32>
    %1339 = vector.extract_strided_slice %1201 {offsets = [0, 1], sizes = [2, 1], strides = [1, 1]} : vector<2x6xf32> to vector<2x1xf32>
    %1340 = vector.extract_strided_slice %4 {offsets = [1, 0], sizes = [1, 24], strides = [1, 1]} : vector<6x24xf32> to vector<1x24xf32>
    %1341 = vector.broadcast %1339 : vector<2x1xf32> to vector<2x24xf32>
    %1342 = vector.broadcast %1340 : vector<1x24xf32> to vector<2x24xf32>
    %1343 = arith.mulf %1341, %1342 : vector<2x24xf32>
    %1344 = arith.addf %1338, %1343 : vector<2x24xf32>
    %1345 = vector.extract_strided_slice %1201 {offsets = [0, 2], sizes = [2, 1], strides = [1, 1]} : vector<2x6xf32> to vector<2x1xf32>
    %1346 = vector.extract_strided_slice %4 {offsets = [2, 0], sizes = [1, 24], strides = [1, 1]} : vector<6x24xf32> to vector<1x24xf32>
    %1347 = vector.broadcast %1345 : vector<2x1xf32> to vector<2x24xf32>
    %1348 = vector.broadcast %1346 : vector<1x24xf32> to vector<2x24xf32>
    %1349 = arith.mulf %1347, %1348 : vector<2x24xf32>
    %1350 = arith.addf %1344, %1349 : vector<2x24xf32>
    %1351 = vector.extract_strided_slice %1201 {offsets = [0, 3], sizes = [2, 1], strides = [1, 1]} : vector<2x6xf32> to vector<2x1xf32>
    %1352 = vector.extract_strided_slice %4 {offsets = [3, 0], sizes = [1, 24], strides = [1, 1]} : vector<6x24xf32> to vector<1x24xf32>
    %1353 = vector.broadcast %1351 : vector<2x1xf32> to vector<2x24xf32>
    %1354 = vector.broadcast %1352 : vector<1x24xf32> to vector<2x24xf32>
    %1355 = arith.mulf %1353, %1354 : vector<2x24xf32>
    %1356 = arith.addf %1350, %1355 : vector<2x24xf32>
    %1357 = vector.extract_strided_slice %1201 {offsets = [0, 4], sizes = [2, 1], strides = [1, 1]} : vector<2x6xf32> to vector<2x1xf32>
    %1358 = vector.extract_strided_slice %4 {offsets = [4, 0], sizes = [1, 24], strides = [1, 1]} : vector<6x24xf32> to vector<1x24xf32>
    %1359 = vector.broadcast %1357 : vector<2x1xf32> to vector<2x24xf32>
    %1360 = vector.broadcast %1358 : vector<1x24xf32> to vector<2x24xf32>
    %1361 = arith.mulf %1359, %1360 : vector<2x24xf32>
    %1362 = arith.addf %1356, %1361 : vector<2x24xf32>
    %1363 = vector.extract_strided_slice %1201 {offsets = [0, 5], sizes = [2, 1], strides = [1, 1]} : vector<2x6xf32> to vector<2x1xf32>
    %1364 = vector.extract_strided_slice %4 {offsets = [5, 0], sizes = [1, 24], strides = [1, 1]} : vector<6x24xf32> to vector<1x24xf32>
    %1365 = vector.broadcast %1363 : vector<2x1xf32> to vector<2x24xf32>
    %1366 = vector.broadcast %1364 : vector<1x24xf32> to vector<2x24xf32>
    %1367 = arith.mulf %1365, %1366 : vector<2x24xf32>
    %1368 = arith.addf %1362, %1367 : vector<2x24xf32>
    %1369 = arith.addf %1333, %1368 : vector<2x24xf32>
    %1370 = math.tanh %1369 : vector<2x24xf32>
    %1371 = vector.extract_strided_slice %1370 {offsets = [0, 0], sizes = [2, 18], strides = [1, 1]} : vector<2x24xf32> to vector<2x18xf32>
    %cst_78 = arith.constant 5.000000e-01 : f32
    %1372 = vector.broadcast %cst_78 : f32 to vector<2x18xf32>
    %1373 = arith.mulf %1372, %1371 : vector<2x18xf32>
    %cst_79 = arith.constant 5.000000e-01 : f32
    %1374 = vector.broadcast %cst_79 : f32 to vector<2x18xf32>
    %1375 = arith.addf %1373, %1374 : vector<2x18xf32>
    %1376 = vector.extract_strided_slice %1375 {offsets = [0, 0], sizes = [2, 6], strides = [1, 1]} : vector<2x18xf32> to vector<2x6xf32>
    %1377 = vector.extract_strided_slice %1375 {offsets = [0, 6], sizes = [2, 6], strides = [1, 1]} : vector<2x18xf32> to vector<2x6xf32>
    %1378 = vector.extract_strided_slice %1375 {offsets = [0, 12], sizes = [2, 6], strides = [1, 1]} : vector<2x18xf32> to vector<2x6xf32>
    %1379 = vector.extract_strided_slice %1370 {offsets = [0, 18], sizes = [2, 6], strides = [1, 1]} : vector<2x24xf32> to vector<2x6xf32>
    %1380 = arith.mulf %1377, %1199 : vector<2x6xf32>
    %1381 = arith.mulf %1376, %1379 : vector<2x6xf32>
    %1382 = arith.addf %1380, %1381 : vector<2x6xf32>
    %1383 = math.tanh %1382 : vector<2x6xf32>
    %1384 = arith.mulf %1378, %1383 : vector<2x6xf32>
    %1385 = vector.extract_strided_slice %1384 {offsets = [0, 0], sizes = [2, 1], strides = [1, 1]} : vector<2x6xf32> to vector<2x1xf32>
    %1386 = vector.extract_strided_slice %6 {offsets = [0, 0], sizes = [1, 24], strides = [1, 1]} : vector<6x24xf32> to vector<1x24xf32>
    %1387 = vector.broadcast %1385 : vector<2x1xf32> to vector<2x24xf32>
    %1388 = vector.broadcast %1386 : vector<1x24xf32> to vector<2x24xf32>
    %1389 = arith.mulf %1387, %1388 : vector<2x24xf32>
    %1390 = vector.extract_strided_slice %1384 {offsets = [0, 1], sizes = [2, 1], strides = [1, 1]} : vector<2x6xf32> to vector<2x1xf32>
    %1391 = vector.extract_strided_slice %6 {offsets = [1, 0], sizes = [1, 24], strides = [1, 1]} : vector<6x24xf32> to vector<1x24xf32>
    %1392 = vector.broadcast %1390 : vector<2x1xf32> to vector<2x24xf32>
    %1393 = vector.broadcast %1391 : vector<1x24xf32> to vector<2x24xf32>
    %1394 = arith.mulf %1392, %1393 : vector<2x24xf32>
    %1395 = arith.addf %1389, %1394 : vector<2x24xf32>
    %1396 = vector.extract_strided_slice %1384 {offsets = [0, 2], sizes = [2, 1], strides = [1, 1]} : vector<2x6xf32> to vector<2x1xf32>
    %1397 = vector.extract_strided_slice %6 {offsets = [2, 0], sizes = [1, 24], strides = [1, 1]} : vector<6x24xf32> to vector<1x24xf32>
    %1398 = vector.broadcast %1396 : vector<2x1xf32> to vector<2x24xf32>
    %1399 = vector.broadcast %1397 : vector<1x24xf32> to vector<2x24xf32>
    %1400 = arith.mulf %1398, %1399 : vector<2x24xf32>
    %1401 = arith.addf %1395, %1400 : vector<2x24xf32>
    %1402 = vector.extract_strided_slice %1384 {offsets = [0, 3], sizes = [2, 1], strides = [1, 1]} : vector<2x6xf32> to vector<2x1xf32>
    %1403 = vector.extract_strided_slice %6 {offsets = [3, 0], sizes = [1, 24], strides = [1, 1]} : vector<6x24xf32> to vector<1x24xf32>
    %1404 = vector.broadcast %1402 : vector<2x1xf32> to vector<2x24xf32>
    %1405 = vector.broadcast %1403 : vector<1x24xf32> to vector<2x24xf32>
    %1406 = arith.mulf %1404, %1405 : vector<2x24xf32>
    %1407 = arith.addf %1401, %1406 : vector<2x24xf32>
    %1408 = vector.extract_strided_slice %1384 {offsets = [0, 4], sizes = [2, 1], strides = [1, 1]} : vector<2x6xf32> to vector<2x1xf32>
    %1409 = vector.extract_strided_slice %6 {offsets = [4, 0], sizes = [1, 24], strides = [1, 1]} : vector<6x24xf32> to vector<1x24xf32>
    %1410 = vector.broadcast %1408 : vector<2x1xf32> to vector<2x24xf32>
    %1411 = vector.broadcast %1409 : vector<1x24xf32> to vector<2x24xf32>
    %1412 = arith.mulf %1410, %1411 : vector<2x24xf32>
    %1413 = arith.addf %1407, %1412 : vector<2x24xf32>
    %1414 = vector.extract_strided_slice %1384 {offsets = [0, 5], sizes = [2, 1], strides = [1, 1]} : vector<2x6xf32> to vector<2x1xf32>
    %1415 = vector.extract_strided_slice %6 {offsets = [5, 0], sizes = [1, 24], strides = [1, 1]} : vector<6x24xf32> to vector<1x24xf32>
    %1416 = vector.broadcast %1414 : vector<2x1xf32> to vector<2x24xf32>
    %1417 = vector.broadcast %1415 : vector<1x24xf32> to vector<2x24xf32>
    %1418 = arith.mulf %1416, %1417 : vector<2x24xf32>
    %1419 = arith.addf %1413, %1418 : vector<2x24xf32>
    %1420 = vector.broadcast %8 : vector<1x24xf32> to vector<2x24xf32>
    %1421 = arith.addf %1420, %1419 : vector<2x24xf32>
    %1422 = vector.extract_strided_slice %1289 {offsets = [0, 0], sizes = [2, 1], strides = [1, 1]} : vector<2x6xf32> to vector<2x1xf32>
    %1423 = vector.extract_strided_slice %7 {offsets = [0, 0], sizes = [1, 24], strides = [1, 1]} : vector<6x24xf32> to vector<1x24xf32>
    %1424 = vector.broadcast %1422 : vector<2x1xf32> to vector<2x24xf32>
    %1425 = vector.broadcast %1423 : vector<1x24xf32> to vector<2x24xf32>
    %1426 = arith.mulf %1424, %1425 : vector<2x24xf32>
    %1427 = vector.extract_strided_slice %1289 {offsets = [0, 1], sizes = [2, 1], strides = [1, 1]} : vector<2x6xf32> to vector<2x1xf32>
    %1428 = vector.extract_strided_slice %7 {offsets = [1, 0], sizes = [1, 24], strides = [1, 1]} : vector<6x24xf32> to vector<1x24xf32>
    %1429 = vector.broadcast %1427 : vector<2x1xf32> to vector<2x24xf32>
    %1430 = vector.broadcast %1428 : vector<1x24xf32> to vector<2x24xf32>
    %1431 = arith.mulf %1429, %1430 : vector<2x24xf32>
    %1432 = arith.addf %1426, %1431 : vector<2x24xf32>
    %1433 = vector.extract_strided_slice %1289 {offsets = [0, 2], sizes = [2, 1], strides = [1, 1]} : vector<2x6xf32> to vector<2x1xf32>
    %1434 = vector.extract_strided_slice %7 {offsets = [2, 0], sizes = [1, 24], strides = [1, 1]} : vector<6x24xf32> to vector<1x24xf32>
    %1435 = vector.broadcast %1433 : vector<2x1xf32> to vector<2x24xf32>
    %1436 = vector.broadcast %1434 : vector<1x24xf32> to vector<2x24xf32>
    %1437 = arith.mulf %1435, %1436 : vector<2x24xf32>
    %1438 = arith.addf %1432, %1437 : vector<2x24xf32>
    %1439 = vector.extract_strided_slice %1289 {offsets = [0, 3], sizes = [2, 1], strides = [1, 1]} : vector<2x6xf32> to vector<2x1xf32>
    %1440 = vector.extract_strided_slice %7 {offsets = [3, 0], sizes = [1, 24], strides = [1, 1]} : vector<6x24xf32> to vector<1x24xf32>
    %1441 = vector.broadcast %1439 : vector<2x1xf32> to vector<2x24xf32>
    %1442 = vector.broadcast %1440 : vector<1x24xf32> to vector<2x24xf32>
    %1443 = arith.mulf %1441, %1442 : vector<2x24xf32>
    %1444 = arith.addf %1438, %1443 : vector<2x24xf32>
    %1445 = vector.extract_strided_slice %1289 {offsets = [0, 4], sizes = [2, 1], strides = [1, 1]} : vector<2x6xf32> to vector<2x1xf32>
    %1446 = vector.extract_strided_slice %7 {offsets = [4, 0], sizes = [1, 24], strides = [1, 1]} : vector<6x24xf32> to vector<1x24xf32>
    %1447 = vector.broadcast %1445 : vector<2x1xf32> to vector<2x24xf32>
    %1448 = vector.broadcast %1446 : vector<1x24xf32> to vector<2x24xf32>
    %1449 = arith.mulf %1447, %1448 : vector<2x24xf32>
    %1450 = arith.addf %1444, %1449 : vector<2x24xf32>
    %1451 = vector.extract_strided_slice %1289 {offsets = [0, 5], sizes = [2, 1], strides = [1, 1]} : vector<2x6xf32> to vector<2x1xf32>
    %1452 = vector.extract_strided_slice %7 {offsets = [5, 0], sizes = [1, 24], strides = [1, 1]} : vector<6x24xf32> to vector<1x24xf32>
    %1453 = vector.broadcast %1451 : vector<2x1xf32> to vector<2x24xf32>
    %1454 = vector.broadcast %1452 : vector<1x24xf32> to vector<2x24xf32>
    %1455 = arith.mulf %1453, %1454 : vector<2x24xf32>
    %1456 = arith.addf %1450, %1455 : vector<2x24xf32>
    %1457 = arith.addf %1421, %1456 : vector<2x24xf32>
    %1458 = math.tanh %1457 : vector<2x24xf32>
    %1459 = vector.extract_strided_slice %1458 {offsets = [0, 0], sizes = [2, 18], strides = [1, 1]} : vector<2x24xf32> to vector<2x18xf32>
    %cst_80 = arith.constant 5.000000e-01 : f32
    %1460 = vector.broadcast %cst_80 : f32 to vector<2x18xf32>
    %1461 = arith.mulf %1460, %1459 : vector<2x18xf32>
    %cst_81 = arith.constant 5.000000e-01 : f32
    %1462 = vector.broadcast %cst_81 : f32 to vector<2x18xf32>
    %1463 = arith.addf %1461, %1462 : vector<2x18xf32>
    %1464 = vector.extract_strided_slice %1463 {offsets = [0, 0], sizes = [2, 6], strides = [1, 1]} : vector<2x18xf32> to vector<2x6xf32>
    %1465 = vector.extract_strided_slice %1463 {offsets = [0, 6], sizes = [2, 6], strides = [1, 1]} : vector<2x18xf32> to vector<2x6xf32>
    %1466 = vector.extract_strided_slice %1463 {offsets = [0, 12], sizes = [2, 6], strides = [1, 1]} : vector<2x18xf32> to vector<2x6xf32>
    %1467 = vector.extract_strided_slice %1458 {offsets = [0, 18], sizes = [2, 6], strides = [1, 1]} : vector<2x24xf32> to vector<2x6xf32>
    %1468 = arith.mulf %1465, %1287 : vector<2x6xf32>
    %1469 = arith.mulf %1464, %1467 : vector<2x6xf32>
    %1470 = arith.addf %1468, %1469 : vector<2x6xf32>
    %1471 = math.tanh %1470 : vector<2x6xf32>
    %1472 = arith.mulf %1466, %1471 : vector<2x6xf32>
    %1473 = arith.index_cast %c7_i32 : i32 to index
    %c0_82 = arith.constant 0 : index
    %c0_83 = arith.constant 0 : index
    %1474 = vector.load %arg8[%1473, %c0_82, %c0_83] : memref<8x2x6xf32, #tpu.memory_space<vmem>>, vector<1x2x6xf32>
    %1475 = vector.shape_cast %1474 : vector<1x2x6xf32> to vector<2x6xf32>
    %1476 = vector.shape_cast %1472 : vector<2x6xf32> to vector<1x2x6xf32>
    tpu.vector_store %arg8[%1473, %c0_82, %c0_83], %1476 {strides = array<i32>} : memref<8x2x6xf32, #tpu.memory_space<vmem>>, vector<1x2x6xf32>,
    %c8_i32 = arith.constant 8 : i32
    %c0_84 = arith.constant 0 : index
    %c0_85 = arith.constant 0 : index
    %1477 = vector.load %arg9[%c0_84, %c0_85] : memref<2x6xf32, #tpu.memory_space<vmem>>, vector<2x6xf32>
    tpu.vector_store %arg9[%c0_84, %c0_85], %1384 {strides = array<i32>} : memref<2x6xf32, #tpu.memory_space<vmem>>, vector<2x6xf32>,
    %c0_86 = arith.constant 0 : index
    %c0_87 = arith.constant 0 : index
    %1478 = vector.load %arg10[%c0_86, %c0_87] : memref<2x6xf32, #tpu.memory_space<vmem>>, vector<2x6xf32>
    tpu.vector_store %arg10[%c0_86, %c0_87], %1382 {strides = array<i32>} : memref<2x6xf32, #tpu.memory_space<vmem>>, vector<2x6xf32>,
    %c0_88 = arith.constant 0 : index
    %c0_89 = arith.constant 0 : index
    %1479 = vector.load %arg11[%c0_88, %c0_89] : memref<2x6xf32, #tpu.memory_space<vmem>>, vector<2x6xf32>
    tpu.vector_store %arg11[%c0_88, %c0_89], %1472 {strides = array<i32>} : memref<2x6xf32, #tpu.memory_space<vmem>>, vector<2x6xf32>,
    %c0_90 = arith.constant 0 : index
    %c0_91 = arith.constant 0 : index
    %1480 = vector.load %arg12[%c0_90, %c0_91] : memref<2x6xf32, #tpu.memory_space<vmem>>, vector<2x6xf32>
    tpu.vector_store %arg12[%c0_90, %c0_91], %1470 {strides = array<i32>} : memref<2x6xf32, #tpu.memory_space<vmem>>, vector<2x6xf32>,
    return
  }
  func.func @transform_0(%arg0: i32) -> (i32, i32, i32) {
    %c0_i32 = arith.constant 0 : i32
    %c0_i32_0 = arith.constant 0 : i32
    %c0_i32_1 = arith.constant 0 : i32
    return %arg0, %c0_i32, %c0_i32_0 : i32, i32, i32
  }
  func.func @transform_1(%arg0: i32) -> (i32, i32) {
    %c0_i32 = arith.constant 0 : i32
    %c0_i32_0 = arith.constant 0 : i32
    %c0_i32_1 = arith.constant 0 : i32
    return %c0_i32, %c0_i32_0 : i32, i32
  }
  func.func @transform_2(%arg0: i32) -> (i32, i32) {
    %c0_i32 = arith.constant 0 : i32
    %c0_i32_0 = arith.constant 0 : i32
    %c0_i32_1 = arith.constant 0 : i32
    return %c0_i32, %c0_i32_0 : i32, i32
  }
  func.func @transform_3(%arg0: i32) -> (i32, i32) {
    %c0_i32 = arith.constant 0 : i32
    %c0_i32_0 = arith.constant 0 : i32
    %c0_i32_1 = arith.constant 0 : i32
    return %c0_i32, %c0_i32_0 : i32, i32
  }
  func.func @transform_4(%arg0: i32) -> (i32, i32) {
    %c0_i32 = arith.constant 0 : i32
    %c0_i32_0 = arith.constant 0 : i32
    %c0_i32_1 = arith.constant 0 : i32
    return %c0_i32, %c0_i32_0 : i32, i32
  }
  func.func @transform_5(%arg0: i32) -> (i32, i32) {
    %c0_i32 = arith.constant 0 : i32
    %c0_i32_0 = arith.constant 0 : i32
    %c0_i32_1 = arith.constant 0 : i32
    return %c0_i32, %c0_i32_0 : i32, i32
  }
  func.func @transform_6(%arg0: i32) -> (i32, i32) {
    %c0_i32 = arith.constant 0 : i32
    %c0_i32_0 = arith.constant 0 : i32
    %c0_i32_1 = arith.constant 0 : i32
    return %c0_i32, %c0_i32_0 : i32, i32
  }
  func.func @transform_7(%arg0: i32) -> (i32, i32, i32) {
    %c0_i32 = arith.constant 0 : i32
    %c0_i32_0 = arith.constant 0 : i32
    %c0_i32_1 = arith.constant 0 : i32
    return %arg0, %c0_i32, %c0_i32_0 : i32, i32, i32
  }
}

</mosaic_0001>

<llo_original>
// kernel: tpu_custom_call.1
$region0: #{tpu_custom_call.1}
  #allocation0 [shape = 'u32[]', space=smem, size = 0x4, offset = 0x4, fixed_abs, tag = 'smem constant byte address 0x4 - core index']
  #allocation1 [shape = 'u32[72,128]{1,0:T(1,128)}', space=vmem, size = 0x9000, scoped, tag = 'internal scratch']
  #allocation2 [shape = 'f32[2,6]{1,0:T(2,128)}', space=vmem, size = 0x400, scoped, tag = 'scratch operand']
  #allocation3 [shape = 'f32[2,6]{1,0:T(2,128)}', space=vmem, size = 0x400, scoped, tag = 'scratch operand']
  #allocation4 [shape = 'f32[2,6]{1,0:T(2,128)}', space=vmem, size = 0x400, scoped, tag = 'scratch operand']
  #allocation5 [shape = 'f32[2,6]{1,0:T(2,128)}', space=vmem, size = 0x400, scoped, tag = 'scratch operand']
  %s0 = inlined_call_operand.vmem [shape: f32[8,2,6], index: 0, kind: input, shape index: {}]
  %s1 = inlined_call_operand.vmem [shape: f32[6,24], index: 1, kind: input, shape index: {}]
  %s2 = inlined_call_operand.vmem [shape: f32[6,24], index: 2, kind: input, shape index: {}]
  %s3 = inlined_call_operand.hbm [shape: f32[1,24], index: 3, kind: input, shape index: {}]
  %s4 = inlined_call_operand.vmem [shape: f32[6,24], index: 4, kind: input, shape index: {}]
  %s5 = inlined_call_operand.vmem [shape: f32[6,24], index: 5, kind: input, shape index: {}]
  %s6 = inlined_call_operand.vmem [shape: f32[1,24], index: 6, kind: input, shape index: {}]
  %s7 = inlined_call_operand.vmem [shape: f32[8,2,6], index: 7, kind: output, shape index: {}]
  %s8 = sld [smem:[#allocation0]]
  $region46: #{tpu_custom_call.1} parent=0
    _
  %s10 = ssub.s32 1, %s8
  %s11 = scalar_select 0, %s10, %s8
  $region1: #{tpu_custom_call.1} parent=0
    #allocation6 [shape = 'u8[512]{0}', space=vmem, size = 0x400, scoped, tag = 'input window, operand 3, single buffered']
    #allocation7 [shape = 's32[1]{0}', space=sflag, size = 0x4, scoped, tag = 'scoped memory for tpu_custom_call.1']
    %12 = vsyncpa [#allocation7], 0
    // Predicated region
    $region2: #{tpu_custom_call.1} parent=1 // pred_check
      _
    $region3: #{tpu_custom_call.1} parent=1 // pred_check_branch
      %14 = sbr.rel (0) target = $region5
    $region4: #{tpu_custom_call.1} parent=1 // pred_region
      _
    $region5: #{tpu_custom_call.1} parent=1 // pred_fallthru
      _
    // Predicated region
    $region6: #{tpu_custom_call.1} parent=1 // pred_check
      _
    $region7: #{tpu_custom_call.1} parent=1 // pred_check_branch
      %16 = sbr.rel (0) target = $region9
    $region8: #{tpu_custom_call.1} parent=1 // pred_region
      _
    $region9: #{tpu_custom_call.1} parent=1 // pred_fallthru
      _
    // Predicated region
    $region10: #{tpu_custom_call.1} parent=1 // pred_check
      _
    $region11: #{tpu_custom_call.1} parent=1 // pred_check_branch
      %18 = sbr.rel (0) target = $region13
    $region12: #{tpu_custom_call.1} parent=1 // pred_region
      _
    $region13: #{tpu_custom_call.1} parent=1 // pred_fallthru
      _
    // Predicated region
    $region14: #{tpu_custom_call.1} parent=1 // pred_check
      _
    $region15: #{tpu_custom_call.1} parent=1 // pred_check_branch
      %20 = sbr.rel (0) target = $region17
    $region16: #{tpu_custom_call.1} parent=1 // pred_region
      %22 = vsyncadd [#allocation7], 0
      %s24 = sshll.u32 %s3, 4
      %s25 = int_to_ptr.hbm [resolvable:$true] %s24
      %s26 = sshll.u32 [#allocation6], 4
      %s27 = int_to_ptr.vmem [resolvable:$true] %s26
      %29 = dma.hbm_to_vmem [thread:$0]  %s25, 16, %s27, [#allocation7]
    $region17: #{tpu_custom_call.1} parent=1 // pred_fallthru
      _
    // Predicated region
    $region18: #{tpu_custom_call.1} parent=1 // pred_check
      _
    $region19: #{tpu_custom_call.1} parent=1 // pred_check_branch
      %31 = sbr.rel (0) target = $region21
    $region20: #{tpu_custom_call.1} parent=1 // pred_region
      _
    $region21: #{tpu_custom_call.1} parent=1 // pred_fallthru
      _
    // Predicated region
    $region22: #{tpu_custom_call.1} parent=1 // pred_check
      _
    $region23: #{tpu_custom_call.1} parent=1 // pred_check_branch
      %33 = sbr.rel (0) target = $region25
    $region24: #{tpu_custom_call.1} parent=1 // pred_region
      _
    $region25: #{tpu_custom_call.1} parent=1 // pred_fallthru
      _
    // Predicated region
    $region26: #{tpu_custom_call.1} parent=1 // pred_check
      _
    $region27: #{tpu_custom_call.1} parent=1 // pred_check_branch
      %35 = sbr.rel (0) target = $region29
    $region28: #{tpu_custom_call.1} parent=1 // pred_region
      _
    $region29: #{tpu_custom_call.1} parent=1 // pred_fallthru
      _
    // Predicated region
    $region30: #{tpu_custom_call.1} parent=1 // pred_check
      _
    $region31: #{tpu_custom_call.1} parent=1 // pred_check_branch
      %37 = sbr.rel (0) target = $region33
    $region32: #{tpu_custom_call.1} parent=1 // pred_region
      %39 = dma.done [#allocation7], 16
    $region33: #{tpu_custom_call.1} parent=1 // pred_fallthru
      _
    %p40 = scmp.eq.s32.totalorder 0, 0
    // Predicated region
    $region34: #{tpu_custom_call.1} parent=1 // pred_check
      %p41 = pneg %p40
    $region35: #{tpu_custom_call.1} parent=1 // pred_check_branch
      %43 = sbr.rel (%p41) target = $region37
    $region36: #{tpu_custom_call.1} parent=1 // pred_region
      %vm44 = vcmask 41984
      %45 = vst.msk [vmem:[#allocation2] sm:$0x3] %vm44, 0.0
      %46 = vst.msk [vmem:[#allocation3] sm:$0x3] %vm44, 0.0
      %47 = vst.msk [vmem:[#allocation4] sm:$0x3] %vm44, 0.0
      %48 = vst.msk [vmem:[#allocation5] sm:$0x3] %vm44, 0.0
    $region37: #{tpu_custom_call.1} parent=1 // pred_fallthru
      _
    %v49 = vld [vmem:[%s1] sm:$0x3f]
    %v50 = vld [vmem:[%s2] sm:$0x3f]
    %v51 = vld [vmem:[#allocation6] sm:$0x1]
    %v52 = vld [vmem:[%s4] sm:$0x3f]
    %v53 = vld [vmem:[%s5] sm:$0x3f]
    %v54 = vld [vmem:[%s6] sm:$0x1]
    %v55 = vld [vmem:[#allocation2] sm:$0x3]
    %v56 = vld [vmem:[#allocation3] sm:$0x3]
    %v57 = vld [vmem:[#allocation4] sm:$0x3]
    %v58 = vld [vmem:[#allocation5] sm:$0x3]
    %v59 = vld [vmem:[%s0] sm:$0x3]
    %61 = vset.pattern.permute.xlu0 0
    %62 = vperm.xlu0 %61, %v59
    %v63 = vpop.permute.xlu0 %62
    %v65 = vperm.slane %v49, 0
    %v66 = vmul.f32 %v63, %v65
    %67 = vset.pattern.permute.xlu0 1
    %68 = vperm.xlu0 %67, %v59
    %v69 = vpop.permute.xlu0 %68
    %v71 = vperm.slane %v49, 1
    %v72 = vmul.f32 %v69, %v71
    %v73 = vadd.f32 %v66, %v72
    %74 = vset.pattern.permute.xlu0 2
    %75 = vperm.xlu0 %74, %v59
    %v76 = vpop.permute.xlu0 %75
    %v78 = vperm.slane %v49, 2
    %v79 = vmul.f32 %v76, %v78
    %v80 = vadd.f32 %v73, %v79
    %81 = vset.pattern.permute.xlu0 3
    %82 = vperm.xlu0 %81, %v59
    %v83 = vpop.permute.xlu0 %82
    %v85 = vperm.slane %v49, 3
    %v86 = vmul.f32 %v83, %v85
    %v87 = vadd.f32 %v80, %v86
    %88 = vset.pattern.permute.xlu0 4
    %89 = vperm.xlu0 %88, %v59
    %v90 = vpop.permute.xlu0 %89
    %v92 = vperm.slane %v49, 4
    %v93 = vmul.f32 %v90, %v92
    %v94 = vadd.f32 %v87, %v93
    %95 = vset.pattern.permute.xlu0 5
    %96 = vperm.xlu0 %95, %v59
    %v97 = vpop.permute.xlu0 %96
    %v99 = vperm.slane %v49, 5
    %v100 = vmul.f32 %v97, %v99
    %v101 = vadd.f32 %v94, %v100
    %v103 = vperm.slane %v51, 0
    %v105 = vadd.f32 %v103, %v101
    %107 = vset.pattern.permute.xlu0 0
    %108 = vperm.xlu0 %107, %v55
    %v109 = vpop.permute.xlu0 %108
    %v111 = vperm.slane %v50, 0
    %v112 = vmul.f32 %v109, %v111
    %113 = vset.pattern.permute.xlu0 1
    %114 = vperm.xlu0 %113, %v55
    %v115 = vpop.permute.xlu0 %114
    %v117 = vperm.slane %v50, 1
    %v118 = vmul.f32 %v115, %v117
    %v119 = vadd.f32 %v112, %v118
    %120 = vset.pattern.permute.xlu0 2
    %121 = vperm.xlu0 %120, %v55
    %v122 = vpop.permute.xlu0 %121
    %v124 = vperm.slane %v50, 2
    %v125 = vmul.f32 %v122, %v124
    %v126 = vadd.f32 %v119, %v125
    %127 = vset.pattern.permute.xlu0 3
    %128 = vperm.xlu0 %127, %v55
    %v129 = vpop.permute.xlu0 %128
    %v131 = vperm.slane %v50, 3
    %v132 = vmul.f32 %v129, %v131
    %v133 = vadd.f32 %v126, %v132
    %134 = vset.pattern.permute.xlu0 4
    %135 = vperm.xlu0 %134, %v55
    %v136 = vpop.permute.xlu0 %135
    %v138 = vperm.slane %v50, 4
    %v139 = vmul.f32 %v136, %v138
    %v140 = vadd.f32 %v133, %v139
    %141 = vset.pattern.permute.xlu0 5
    %142 = vperm.xlu0 %141, %v55
    %v143 = vpop.permute.xlu0 %142
    %v145 = vperm.slane %v50, 5
    %v146 = vmul.f32 %v143, %v145
    %v147 = vadd.f32 %v140, %v146
    %v148 = vadd.f32 %v105, %v147
    %v149 = vtanh.pop %v148
    %v150 = vmul.f32 %v149, 0.5
    %v151 = vadd.f32 %v150, 0.5
    %153 = vrot.lane.b32.xlu0 %v56, 6
    %v154 = vpop.permute.xlu0 %153
    %v156 = vmul.f32 %v151, %v154
    %158 = vrot.lane.b32.xlu0 %v149, 110
    %v159 = vpop.permute.xlu0 %158
    %v161 = vmul.f32 %v151, %v159
    %163 = vrot.lane.b32.xlu0 %v161, 6
    %v164 = vpop.permute.xlu0 %163
    %v166 = vadd.f32 %v156, %v164
    %v167 = vtanh.pop %v166
    %169 = vrot.lane.b32.xlu0 %v167, 6
    %v170 = vpop.permute.xlu0 %169
    %v172 = vmul.f32 %v151, %v170
    %174 = vset.pattern.permute.xlu0 12
    %175 = vperm.xlu0 %174, %v172
    %v176 = vpop.permute.xlu0 %175
    %v178 = vperm.slane %v52, 0
    %v179 = vmul.f32 %v176, %v178
    %180 = vset.pattern.permute.xlu0 13
    %181 = vperm.xlu0 %180, %v172
    %v182 = vpop.permute.xlu0 %181
    %v184 = vperm.slane %v52, 1
    %v185 = vmul.f32 %v182, %v184
    %v186 = vadd.f32 %v179, %v185
    %187 = vset.pattern.permute.xlu0 14
    %188 = vperm.xlu0 %187, %v172
    %v189 = vpop.permute.xlu0 %188
    %v191 = vperm.slane %v52, 2
    %v192 = vmul.f32 %v189, %v191
    %v193 = vadd.f32 %v186, %v192
    %194 = vset.pattern.permute.xlu0 15
    %195 = vperm.xlu0 %194, %v172
    %v196 = vpop.permute.xlu0 %195
    %v198 = vperm.slane %v52, 3
    %v199 = vmul.f32 %v196, %v198
    %v200 = vadd.f32 %v193, %v199
    %201 = vset.pattern.permute.xlu0 16
    %202 = vperm.xlu0 %201, %v172
    %v203 = vpop.permute.xlu0 %202
    %v205 = vperm.slane %v52, 4
    %v206 = vmul.f32 %v203, %v205
    %v207 = vadd.f32 %v200, %v206
    %208 = vset.pattern.permute.xlu0 17
    %209 = vperm.xlu0 %208, %v172
    %v210 = vpop.permute.xlu0 %209
    %v212 = vperm.slane %v52, 5
    %v213 = vmul.f32 %v210, %v212
    %v214 = vadd.f32 %v207, %v213
    %v216 = vperm.slane %v54, 0
    %v218 = vadd.f32 %v216, %v214
    %220 = vset.pattern.permute.xlu0 0
    %221 = vperm.xlu0 %220, %v57
    %v222 = vpop.permute.xlu0 %221
    %v224 = vperm.slane %v53, 0
    %v225 = vmul.f32 %v222, %v224
    %226 = vset.pattern.permute.xlu0 1
    %227 = vperm.xlu0 %226, %v57
    %v228 = vpop.permute.xlu0 %227
    %v230 = vperm.slane %v53, 1
    %v231 = vmul.f32 %v228, %v230
    %v232 = vadd.f32 %v225, %v231
    %233 = vset.pattern.permute.xlu0 2
    %234 = vperm.xlu0 %233, %v57
    %v235 = vpop.permute.xlu0 %234
    %v237 = vperm.slane %v53, 2
    %v238 = vmul.f32 %v235, %v237
    %v239 = vadd.f32 %v232, %v238
    %240 = vset.pattern.permute.xlu0 3
    %241 = vperm.xlu0 %240, %v57
    %v242 = vpop.permute.xlu0 %241
    %v244 = vperm.slane %v53, 3
    %v245 = vmul.f32 %v242, %v244
    %v246 = vadd.f32 %v239, %v245
    %247 = vset.pattern.permute.xlu0 4
    %248 = vperm.xlu0 %247, %v57
    %v249 = vpop.permute.xlu0 %248
    %v251 = vperm.slane %v53, 4
    %v252 = vmul.f32 %v249, %v251
    %v253 = vadd.f32 %v246, %v252
    %254 = vset.pattern.permute.xlu0 5
    %255 = vperm.xlu0 %254, %v57
    %v256 = vpop.permute.xlu0 %255
    %v258 = vperm.slane %v53, 5
    %v259 = vmul.f32 %v256, %v258
    %v260 = vadd.f32 %v253, %v259
    %v261 = vadd.f32 %v218, %v260
    %v262 = vtanh.pop %v261
    %v263 = vmul.f32 %v262, 0.5
    %v264 = vadd.f32 %v263, 0.5
    %266 = vrot.lane.b32.xlu0 %v58, 6
    %v267 = vpop.permute.xlu0 %266
    %v269 = vmul.f32 %v264, %v267
    %271 = vrot.lane.b32.xlu0 %v262, 110
    %v272 = vpop.permute.xlu0 %271
    %v274 = vmul.f32 %v264, %v272
    %276 = vrot.lane.b32.xlu0 %v274, 6
    %v277 = vpop.permute.xlu0 %276
    %v279 = vadd.f32 %v269, %v277
    %v280 = vtanh.pop %v279
    %282 = vrot.lane.b32.xlu0 %v280, 6
    %v283 = vpop.permute.xlu0 %282
    %v285 = vmul.f32 %v264, %v283
    %287 = vrot.lane.b32.xlu0 %v285, 116
    %v288 = vpop.permute.xlu0 %287
    %vm290 = vcmask 41984
    %291 = vst.msk [vmem:[%s7] sm:$0x3] %vm290, %v288
    %s292 = scalar_lea.vmem %s0, 2
    %v293 = vld [vmem:[%s292] sm:$0x3]
    %295 = vset.pattern.permute.xlu0 0
    %296 = vperm.xlu0 %295, %v293
    %v297 = vpop.permute.xlu0 %296
    %v299 = vmul.f32 %v297, %v65
    %300 = vset.pattern.permute.xlu0 1
    %301 = vperm.xlu0 %300, %v293
    %v302 = vpop.permute.xlu0 %301
    %v304 = vmul.f32 %v302, %v71
    %v305 = vadd.f32 %v299, %v304
    %306 = vset.pattern.permute.xlu0 2
    %307 = vperm.xlu0 %306, %v293
    %v308 = vpop.permute.xlu0 %307
    %v310 = vmul.f32 %v308, %v78
    %v311 = vadd.f32 %v305, %v310
    %312 = vset.pattern.permute.xlu0 3
    %313 = vperm.xlu0 %312, %v293
    %v314 = vpop.permute.xlu0 %313
    %v316 = vmul.f32 %v314, %v85
    %v317 = vadd.f32 %v311, %v316
    %318 = vset.pattern.permute.xlu0 4
    %319 = vperm.xlu0 %318, %v293
    %v320 = vpop.permute.xlu0 %319
    %v322 = vmul.f32 %v320, %v92
    %v323 = vadd.f32 %v317, %v322
    %324 = vset.pattern.permute.xlu0 5
    %325 = vperm.xlu0 %324, %v293
    %v326 = vpop.permute.xlu0 %325
    %v328 = vmul.f32 %v326, %v99
    %v329 = vadd.f32 %v323, %v328
    %v330 = vadd.f32 %v103, %v329
    %v331 = vmul.f32 %v176, %v111
    %v332 = vmul.f32 %v182, %v117
    %v333 = vadd.f32 %v331, %v332
    %v334 = vmul.f32 %v189, %v124
    %v335 = vadd.f32 %v333, %v334
    %v336 = vmul.f32 %v196, %v131
    %v337 = vadd.f32 %v335, %v336
    %v338 = vmul.f32 %v203, %v138
    %v339 = vadd.f32 %v337, %v338
    %v340 = vmul.f32 %v210, %v145
    %v341 = vadd.f32 %v339, %v340
    %v342 = vadd.f32 %v330, %v341
    %v343 = vtanh.pop %v342
    %v344 = vmul.f32 %v343, 0.5
    %v345 = vadd.f32 %v344, 0.5
    %v346 = vmul.f32 %v345, %v166
    %348 = vrot.lane.b32.xlu0 %v343, 110
    %v349 = vpop.permute.xlu0 %348
    %v351 = vmul.f32 %v345, %v349
    %353 = vrot.lane.b32.xlu0 %v351, 6
    %v354 = vpop.permute.xlu0 %353
    %v356 = vadd.f32 %v346, %v354
    %v357 = vtanh.pop %v356
    %359 = vrot.lane.b32.xlu0 %v357, 6
    %v360 = vpop.permute.xlu0 %359
    %v362 = vmul.f32 %v345, %v360
    %364 = vset.pattern.permute.xlu0 12
    %365 = vperm.xlu0 %364, %v362
    %v366 = vpop.permute.xlu0 %365
    %v368 = vmul.f32 %v366, %v178
    %369 = vset.pattern.permute.xlu0 13
    %370 = vperm.xlu0 %369, %v362
    %v371 = vpop.permute.xlu0 %370
    %v373 = vmul.f32 %v371, %v184
    %v374 = vadd.f32 %v368, %v373
    %375 = vset.pattern.permute.xlu0 14
    %376 = vperm.xlu0 %375, %v362
    %v377 = vpop.permute.xlu0 %376
    %v379 = vmul.f32 %v377, %v191
    %v380 = vadd.f32 %v374, %v379
    %381 = vset.pattern.permute.xlu0 15
    %382 = vperm.xlu0 %381, %v362
    %v383 = vpop.permute.xlu0 %382
    %v385 = vmul.f32 %v383, %v198
    %v386 = vadd.f32 %v380, %v385
    %387 = vset.pattern.permute.xlu0 16
    %388 = vperm.xlu0 %387, %v362
    %v389 = vpop.permute.xlu0 %388
    %v391 = vmul.f32 %v389, %v205
    %v392 = vadd.f32 %v386, %v391
    %393 = vset.pattern.permute.xlu0 17
    %394 = vperm.xlu0 %393, %v362
    %v395 = vpop.permute.xlu0 %394
    %v397 = vmul.f32 %v395, %v212
    %v398 = vadd.f32 %v392, %v397
    %v399 = vadd.f32 %v216, %v398
    %400 = vset.pattern.permute.xlu0 12
    %401 = vperm.xlu0 %400, %v285
    %v402 = vpop.permute.xlu0 %401
    %v404 = vmul.f32 %v402, %v224
    %405 = vset.pattern.permute.xlu0 13
    %406 = vperm.xlu0 %405, %v285
    %v407 = vpop.permute.xlu0 %406
    %v409 = vmul.f32 %v407, %v230
    %v410 = vadd.f32 %v404, %v409
    %411 = vset.pattern.permute.xlu0 14
    %412 = vperm.xlu0 %411, %v285
    %v413 = vpop.permute.xlu0 %412
    %v415 = vmul.f32 %v413, %v237
    %v416 = vadd.f32 %v410, %v415
    %417 = vset.pattern.permute.xlu0 15
    %418 = vperm.xlu0 %417, %v285
    %v419 = vpop.permute.xlu0 %418
    %v421 = vmul.f32 %v419, %v244
    %v422 = vadd.f32 %v416, %v421
    %423 = vset.pattern.permute.xlu0 16
    %424 = vperm.xlu0 %423, %v285
    %v425 = vpop.permute.xlu0 %424
    %v427 = vmul.f32 %v425, %v251
    %v428 = vadd.f32 %v422, %v427
    %429 = vset.pattern.permute.xlu0 17
    %430 = vperm.xlu0 %429, %v285
    %v431 = vpop.permute.xlu0 %430
    %v433 = vmul.f32 %v431, %v258
    %v434 = vadd.f32 %v428, %v433
    %v435 = vadd.f32 %v399, %v434
    %v436 = vtanh.pop %v435
    %v437 = vmul.f32 %v436, 0.5
    %v438 = vadd.f32 %v437, 0.5
    %v439 = vmul.f32 %v438, %v279
    %441 = vrot.lane.b32.xlu0 %v436, 110
    %v442 = vpop.permute.xlu0 %441
    %v444 = vmul.f32 %v438, %v442
    %446 = vrot.lane.b32.xlu0 %v444, 6
    %v447 = vpop.permute.xlu0 %446
    %v449 = vadd.f32 %v439, %v447
    %v450 = vtanh.pop %v449
    %452 = vrot.lane.b32.xlu0 %v450, 6
    %v453 = vpop.permute.xlu0 %452
    %v455 = vmul.f32 %v438, %v453
    %457 = vrot.lane.b32.xlu0 %v455, 116
    %v458 = vpop.permute.xlu0 %457
    %s460 = scalar_lea.vmem %s7, 2
    %461 = vst.msk [vmem:[%s460] sm:$0x3] %vm290, %v458
    %s462 = scalar_lea.vmem %s0, 4
    %v463 = vld [vmem:[%s462] sm:$0x3]
    %465 = vset.pattern.permute.xlu0 0
    %466 = vperm.xlu0 %465, %v463
    %v467 = vpop.permute.xlu0 %466
    %v469 = vmul.f32 %v467, %v65
    %470 = vset.pattern.permute.xlu0 1
    %471 = vperm.xlu0 %470, %v463
    %v472 = vpop.permute.xlu0 %471
    %v474 = vmul.f32 %v472, %v71
    %v475 = vadd.f32 %v469, %v474
    %476 = vset.pattern.permute.xlu0 2
    %477 = vperm.xlu0 %476, %v463
    %v478 = vpop.permute.xlu0 %477
    %v480 = vmul.f32 %v478, %v78
    %v481 = vadd.f32 %v475, %v480
    %482 = vset.pattern.permute.xlu0 3
    %483 = vperm.xlu0 %482, %v463
    %v484 = vpop.permute.xlu0 %483
    %v486 = vmul.f32 %v484, %v85
    %v487 = vadd.f32 %v481, %v486
    %488 = vset.pattern.permute.xlu0 4
    %489 = vperm.xlu0 %488, %v463
    %v490 = vpop.permute.xlu0 %489
    %v492 = vmul.f32 %v490, %v92
    %v493 = vadd.f32 %v487, %v492
    %494 = vset.pattern.permute.xlu0 5
    %495 = vperm.xlu0 %494, %v463
    %v496 = vpop.permute.xlu0 %495
    %v498 = vmul.f32 %v496, %v99
    %v499 = vadd.f32 %v493, %v498
    %v500 = vadd.f32 %v103, %v499
    %v501 = vmul.f32 %v366, %v111
    %v502 = vmul.f32 %v371, %v117
    %v503 = vadd.f32 %v501, %v502
    %v504 = vmul.f32 %v377, %v124
    %v505 = vadd.f32 %v503, %v504
    %v506 = vmul.f32 %v383, %v131
    %v507 = vadd.f32 %v505, %v506
    %v508 = vmul.f32 %v389, %v138
    %v509 = vadd.f32 %v507, %v508
    %v510 = vmul.f32 %v395, %v145
    %v511 = vadd.f32 %v509, %v510
    %v512 = vadd.f32 %v500, %v511
    %v513 = vtanh.pop %v512
    %v514 = vmul.f32 %v513, 0.5
    %v515 = vadd.f32 %v514, 0.5
    %v516 = vmul.f32 %v515, %v356
    %518 = vrot.lane.b32.xlu0 %v513, 110
    %v519 = vpop.permute.xlu0 %518
    %v521 = vmul.f32 %v515, %v519
    %523 = vrot.lane.b32.xlu0 %v521, 6
    %v524 = vpop.permute.xlu0 %523
    %v526 = vadd.f32 %v516, %v524
    %v527 = vtanh.pop %v526
    %529 = vrot.lane.b32.xlu0 %v527, 6
    %v530 = vpop.permute.xlu0 %529
    %v532 = vmul.f32 %v515, %v530
    %534 = vset.pattern.permute.xlu0 12
    %535 = vperm.xlu0 %534, %v532
    %v536 = vpop.permute.xlu0 %535
    %v538 = vmul.f32 %v536, %v178
    %539 = vset.pattern.permute.xlu0 13
    %540 = vperm.xlu0 %539, %v532
    %v541 = vpop.permute.xlu0 %540
    %v543 = vmul.f32 %v541, %v184
    %v544 = vadd.f32 %v538, %v543
    %545 = vset.pattern.permute.xlu0 14
    %546 = vperm.xlu0 %545, %v532
    %v547 = vpop.permute.xlu0 %546
    %v549 = vmul.f32 %v547, %v191
    %v550 = vadd.f32 %v544, %v549
    %551 = vset.pattern.permute.xlu0 15
    %552 = vperm.xlu0 %551, %v532
    %v553 = vpop.permute.xlu0 %552
    %v555 = vmul.f32 %v553, %v198
    %v556 = vadd.f32 %v550, %v555
    %557 = vset.pattern.permute.xlu0 16
    %558 = vperm.xlu0 %557, %v532
    %v559 = vpop.permute.xlu0 %558
    %v561 = vmul.f32 %v559, %v205
    %v562 = vadd.f32 %v556, %v561
    %563 = vset.pattern.permute.xlu0 17
    %564 = vperm.xlu0 %563, %v532
    %v565 = vpop.permute.xlu0 %564
    %v567 = vmul.f32 %v565, %v212
    %v568 = vadd.f32 %v562, %v567
    %v569 = vadd.f32 %v216, %v568
    %570 = vset.pattern.permute.xlu0 12
    %571 = vperm.xlu0 %570, %v455
    %v572 = vpop.permute.xlu0 %571
    %v574 = vmul.f32 %v572, %v224
    %575 = vset.pattern.permute.xlu0 13
    %576 = vperm.xlu0 %575, %v455
    %v577 = vpop.permute.xlu0 %576
    %v579 = vmul.f32 %v577, %v230
    %v580 = vadd.f32 %v574, %v579
    %581 = vset.pattern.permute.xlu0 14
    %582 = vperm.xlu0 %581, %v455
    %v583 = vpop.permute.xlu0 %582
    %v585 = vmul.f32 %v583, %v237
    %v586 = vadd.f32 %v580, %v585
    %587 = vset.pattern.permute.xlu0 15
    %588 = vperm.xlu0 %587, %v455
    %v589 = vpop.permute.xlu0 %588
    %v591 = vmul.f32 %v589, %v244
    %v592 = vadd.f32 %v586, %v591
    %593 = vset.pattern.permute.xlu0 16
    %594 = vperm.xlu0 %593, %v455
    %v595 = vpop.permute.xlu0 %594
    %v597 = vmul.f32 %v595, %v251
    %v598 = vadd.f32 %v592, %v597
    %599 = vset.pattern.permute.xlu0 17
    %600 = vperm.xlu0 %599, %v455
    %v601 = vpop.permute.xlu0 %600
    %v603 = vmul.f32 %v601, %v258
    %v604 = vadd.f32 %v598, %v603
    %v605 = vadd.f32 %v569, %v604
    %v606 = vtanh.pop %v605
    %v607 = vmul.f32 %v606, 0.5
    %v608 = vadd.f32 %v607, 0.5
    %v609 = vmul.f32 %v608, %v449
    %611 = vrot.lane.b32.xlu0 %v606, 110
    %v612 = vpop.permute.xlu0 %611
    %v614 = vmul.f32 %v608, %v612
    %616 = vrot.lane.b32.xlu0 %v614, 6
    %v617 = vpop.permute.xlu0 %616
    %v619 = vadd.f32 %v609, %v617
    %v620 = vtanh.pop %v619
    %622 = vrot.lane.b32.xlu0 %v620, 6
    %v623 = vpop.permute.xlu0 %622
    %v625 = vmul.f32 %v608, %v623
    %627 = vrot.lane.b32.xlu0 %v625, 116
    %v628 = vpop.permute.xlu0 %627
    %s630 = scalar_lea.vmem %s7, 4
    %631 = vst.msk [vmem:[%s630] sm:$0x3] %vm290, %v628
    %s632 = scalar_lea.vmem %s0, 6
    %v633 = vld [vmem:[%s632] sm:$0x3]
    %635 = vset.pattern.permute.xlu0 0
    %636 = vperm.xlu0 %635, %v633
    %v637 = vpop.permute.xlu0 %636
    %v639 = vmul.f32 %v637, %v65
    %640 = vset.pattern.permute.xlu0 1
    %641 = vperm.xlu0 %640, %v633
    %v642 = vpop.permute.xlu0 %641
    %v644 = vmul.f32 %v642, %v71
    %v645 = vadd.f32 %v639, %v644
    %646 = vset.pattern.permute.xlu0 2
    %647 = vperm.xlu0 %646, %v633
    %v648 = vpop.permute.xlu0 %647
    %v650 = vmul.f32 %v648, %v78
    %v651 = vadd.f32 %v645, %v650
    %652 = vset.pattern.permute.xlu0 3
    %653 = vperm.xlu0 %652, %v633
    %v654 = vpop.permute.xlu0 %653
    %v656 = vmul.f32 %v654, %v85
    %v657 = vadd.f32 %v651, %v656
    %658 = vset.pattern.permute.xlu0 4
    %659 = vperm.xlu0 %658, %v633
    %v660 = vpop.permute.xlu0 %659
    %v662 = vmul.f32 %v660, %v92
    %v663 = vadd.f32 %v657, %v662
    %664 = vset.pattern.permute.xlu0 5
    %665 = vperm.xlu0 %664, %v633
    %v666 = vpop.permute.xlu0 %665
    %v668 = vmul.f32 %v666, %v99
    %v669 = vadd.f32 %v663, %v668
    %v670 = vadd.f32 %v103, %v669
    %v671 = vmul.f32 %v536, %v111
    %v672 = vmul.f32 %v541, %v117
    %v673 = vadd.f32 %v671, %v672
    %v674 = vmul.f32 %v547, %v124
    %v675 = vadd.f32 %v673, %v674
    %v676 = vmul.f32 %v553, %v131
    %v677 = vadd.f32 %v675, %v676
    %v678 = vmul.f32 %v559, %v138
    %v679 = vadd.f32 %v677, %v678
    %v680 = vmul.f32 %v565, %v145
    %v681 = vadd.f32 %v679, %v680
    %v682 = vadd.f32 %v670, %v681
    %v683 = vtanh.pop %v682
    %v684 = vmul.f32 %v683, 0.5
    %v685 = vadd.f32 %v684, 0.5
    %v686 = vmul.f32 %v685, %v526
    %688 = vrot.lane.b32.xlu0 %v683, 110
    %v689 = vpop.permute.xlu0 %688
    %v691 = vmul.f32 %v685, %v689
    %693 = vrot.lane.b32.xlu0 %v691, 6
    %v694 = vpop.permute.xlu0 %693
    %v696 = vadd.f32 %v686, %v694
    %v697 = vtanh.pop %v696
    %699 = vrot.lane.b32.xlu0 %v697, 6
    %v700 = vpop.permute.xlu0 %699
    %v702 = vmul.f32 %v685, %v700
    %704 = vset.pattern.permute.xlu0 12
    %705 = vperm.xlu0 %704, %v702
    %v706 = vpop.permute.xlu0 %705
    %v708 = vmul.f32 %v706, %v178
    %709 = vset.pattern.permute.xlu0 13
    %710 = vperm.xlu0 %709, %v702
    %v711 = vpop.permute.xlu0 %710
    %v713 = vmul.f32 %v711, %v184
    %v714 = vadd.f32 %v708, %v713
    %715 = vset.pattern.permute.xlu0 14
    %716 = vperm.xlu0 %715, %v702
    %v717 = vpop.permute.xlu0 %716
    %v719 = vmul.f32 %v717, %v191
    %v720 = vadd.f32 %v714, %v719
    %721 = vset.pattern.permute.xlu0 15
    %722 = vperm.xlu0 %721, %v702
    %v723 = vpop.permute.xlu0 %722
    %v725 = vmul.f32 %v723, %v198
    %v726 = vadd.f32 %v720, %v725
    %727 = vset.pattern.permute.xlu0 16
    %728 = vperm.xlu0 %727, %v702
    %v729 = vpop.permute.xlu0 %728
    %v731 = vmul.f32 %v729, %v205
    %v732 = vadd.f32 %v726, %v731
    %733 = vset.pattern.permute.xlu0 17
    %734 = vperm.xlu0 %733, %v702
    %v735 = vpop.permute.xlu0 %734
    %v737 = vmul.f32 %v735, %v212
    %v738 = vadd.f32 %v732, %v737
    %v739 = vadd.f32 %v216, %v738
    %740 = vset.pattern.permute.xlu0 12
    %741 = vperm.xlu0 %740, %v625
    %v742 = vpop.permute.xlu0 %741
    %v744 = vmul.f32 %v742, %v224
    %745 = vset.pattern.permute.xlu0 13
    %746 = vperm.xlu0 %745, %v625
    %v747 = vpop.permute.xlu0 %746
    %v749 = vmul.f32 %v747, %v230
    %v750 = vadd.f32 %v744, %v749
    %751 = vset.pattern.permute.xlu0 14
    %752 = vperm.xlu0 %751, %v625
    %v753 = vpop.permute.xlu0 %752
    %v755 = vmul.f32 %v753, %v237
    %v756 = vadd.f32 %v750, %v755
    %757 = vset.pattern.permute.xlu0 15
    %758 = vperm.xlu0 %757, %v625
    %v759 = vpop.permute.xlu0 %758
    %v761 = vmul.f32 %v759, %v244
    %v762 = vadd.f32 %v756, %v761
    %763 = vset.pattern.permute.xlu0 16
    %764 = vperm.xlu0 %763, %v625
    %v765 = vpop.permute.xlu0 %764
    %v767 = vmul.f32 %v765, %v251
    %v768 = vadd.f32 %v762, %v767
    %769 = vset.pattern.permute.xlu0 17
    %770 = vperm.xlu0 %769, %v625
    %v771 = vpop.permute.xlu0 %770
    %v773 = vmul.f32 %v771, %v258
    %v774 = vadd.f32 %v768, %v773
    %v775 = vadd.f32 %v739, %v774
    %v776 = vtanh.pop %v775
    %v777 = vmul.f32 %v776, 0.5
    %v778 = vadd.f32 %v777, 0.5
    %v779 = vmul.f32 %v778, %v619
    %781 = vrot.lane.b32.xlu0 %v776, 110
    %v782 = vpop.permute.xlu0 %781
    %v784 = vmul.f32 %v778, %v782
    %786 = vrot.lane.b32.xlu0 %v784, 6
    %v787 = vpop.permute.xlu0 %786
    %v789 = vadd.f32 %v779, %v787
    %v790 = vtanh.pop %v789
    %792 = vrot.lane.b32.xlu0 %v790, 6
    %v793 = vpop.permute.xlu0 %792
    %v795 = vmul.f32 %v778, %v793
    %797 = vrot.lane.b32.xlu0 %v795, 116
    %v798 = vpop.permute.xlu0 %797
    %s800 = scalar_lea.vmem %s7, 6
    %801 = vst.msk [vmem:[%s800] sm:$0x3] %vm290, %v798
    %s802 = scalar_lea.vmem %s0, 8
    %v803 = vld [vmem:[%s802] sm:$0x3]
    %805 = vset.pattern.permute.xlu0 0
    %806 = vperm.xlu0 %805, %v803
    %v807 = vpop.permute.xlu0 %806
    %v809 = vmul.f32 %v807, %v65
    %810 = vset.pattern.permute.xlu0 1
    %811 = vperm.xlu0 %810, %v803
    %v812 = vpop.permute.xlu0 %811
    %v814 = vmul.f32 %v812, %v71
    %v815 = vadd.f32 %v809, %v814
    %816 = vset.pattern.permute.xlu0 2
    %817 = vperm.xlu0 %816, %v803
    %v818 = vpop.permute.xlu0 %817
    %v820 = vmul.f32 %v818, %v78
    %v821 = vadd.f32 %v815, %v820
    %822 = vset.pattern.permute.xlu0 3
    %823 = vperm.xlu0 %822, %v803
    %v824 = vpop.permute.xlu0 %823
    %v826 = vmul.f32 %v824, %v85
    %v827 = vadd.f32 %v821, %v826
    %828 = vset.pattern.permute.xlu0 4
    %829 = vperm.xlu0 %828, %v803
    %v830 = vpop.permute.xlu0 %829
    %v832 = vmul.f32 %v830, %v92
    %v833 = vadd.f32 %v827, %v832
    %834 = vset.pattern.permute.xlu0 5
    %835 = vperm.xlu0 %834, %v803
    %v836 = vpop.permute.xlu0 %835
    %v838 = vmul.f32 %v836, %v99
    %v839 = vadd.f32 %v833, %v838
    %v840 = vadd.f32 %v103, %v839
    %v841 = vmul.f32 %v706, %v111
    %v842 = vmul.f32 %v711, %v117
    %v843 = vadd.f32 %v841, %v842
    %v844 = vmul.f32 %v717, %v124
    %v845 = vadd.f32 %v843, %v844
    %v846 = vmul.f32 %v723, %v131
    %v847 = vadd.f32 %v845, %v846
    %v848 = vmul.f32 %v729, %v138
    %v849 = vadd.f32 %v847, %v848
    %v850 = vmul.f32 %v735, %v145
    %v851 = vadd.f32 %v849, %v850
    %v852 = vadd.f32 %v840, %v851
    %v853 = vtanh.pop %v852
    %v854 = vmul.f32 %v853, 0.5
    %v855 = vadd.f32 %v854, 0.5
    %v856 = vmul.f32 %v855, %v696
    %858 = vrot.lane.b32.xlu0 %v853, 110
    %v859 = vpop.permute.xlu0 %858
    %v861 = vmul.f32 %v855, %v859
    %863 = vrot.lane.b32.xlu0 %v861, 6
    %v864 = vpop.permute.xlu0 %863
    %v866 = vadd.f32 %v856, %v864
    %v867 = vtanh.pop %v866
    %869 = vrot.lane.b32.xlu0 %v867, 6
    %v870 = vpop.permute.xlu0 %869
    %v872 = vmul.f32 %v855, %v870
    %874 = vset.pattern.permute.xlu0 12
    %875 = vperm.xlu0 %874, %v872
    %v876 = vpop.permute.xlu0 %875
    %v878 = vmul.f32 %v876, %v178
    %879 = vset.pattern.permute.xlu0 13
    %880 = vperm.xlu0 %879, %v872
    %v881 = vpop.permute.xlu0 %880
    %v883 = vmul.f32 %v881, %v184
    %v884 = vadd.f32 %v878, %v883
    %885 = vset.pattern.permute.xlu0 14
    %886 = vperm.xlu0 %885, %v872
    %v887 = vpop.permute.xlu0 %886
    %v889 = vmul.f32 %v887, %v191
    %v890 = vadd.f32 %v884, %v889
    %891 = vset.pattern.permute.xlu0 15
    %892 = vperm.xlu0 %891, %v872
    %v893 = vpop.permute.xlu0 %892
    %v895 = vmul.f32 %v893, %v198
    %v896 = vadd.f32 %v890, %v895
    %897 = vset.pattern.permute.xlu0 16
    %898 = vperm.xlu0 %897, %v872
    %v899 = vpop.permute.xlu0 %898
    %v901 = vmul.f32 %v899, %v205
    %v902 = vadd.f32 %v896, %v901
    %903 = vset.pattern.permute.xlu0 17
    %904 = vperm.xlu0 %903, %v872
    %v905 = vpop.permute.xlu0 %904
    %v907 = vmul.f32 %v905, %v212
    %v908 = vadd.f32 %v902, %v907
    %v909 = vadd.f32 %v216, %v908
    %910 = vset.pattern.permute.xlu0 12
    %911 = vperm.xlu0 %910, %v795
    %v912 = vpop.permute.xlu0 %911
    %v914 = vmul.f32 %v912, %v224
    %915 = vset.pattern.permute.xlu0 13
    %916 = vperm.xlu0 %915, %v795
    %v917 = vpop.permute.xlu0 %916
    %v919 = vmul.f32 %v917, %v230
    %v920 = vadd.f32 %v914, %v919
    %921 = vset.pattern.permute.xlu0 14
    %922 = vperm.xlu0 %921, %v795
    %v923 = vpop.permute.xlu0 %922
    %v925 = vmul.f32 %v923, %v237
    %v926 = vadd.f32 %v920, %v925
    %927 = vset.pattern.permute.xlu0 15
    %928 = vperm.xlu0 %927, %v795
    %v929 = vpop.permute.xlu0 %928
    %v931 = vmul.f32 %v929, %v244
    %v932 = vadd.f32 %v926, %v931
    %933 = vset.pattern.permute.xlu0 16
    %934 = vperm.xlu0 %933, %v795
    %v935 = vpop.permute.xlu0 %934
    %v937 = vmul.f32 %v935, %v251
    %v938 = vadd.f32 %v932, %v937
    %939 = vset.pattern.permute.xlu0 17
    %940 = vperm.xlu0 %939, %v795
    %v941 = vpop.permute.xlu0 %940
    %v943 = vmul.f32 %v941, %v258
    %v944 = vadd.f32 %v938, %v943
    %v945 = vadd.f32 %v909, %v944
    %v946 = vtanh.pop %v945
    %v947 = vmul.f32 %v946, 0.5
    %v948 = vadd.f32 %v947, 0.5
    %v949 = vmul.f32 %v948, %v789
    %951 = vrot.lane.b32.xlu0 %v946, 110
    %v952 = vpop.permute.xlu0 %951
    %v954 = vmul.f32 %v948, %v952
    %956 = vrot.lane.b32.xlu0 %v954, 6
    %v957 = vpop.permute.xlu0 %956
    %v959 = vadd.f32 %v949, %v957
    %v960 = vtanh.pop %v959
    %962 = vrot.lane.b32.xlu0 %v960, 6
    %v963 = vpop.permute.xlu0 %962
    %v965 = vmul.f32 %v948, %v963
    %967 = vrot.lane.b32.xlu0 %v965, 116
    %v968 = vpop.permute.xlu0 %967
    %s970 = scalar_lea.vmem %s7, 8
    %971 = vst.msk [vmem:[%s970] sm:$0x3] %vm290, %v968
    %s972 = scalar_lea.vmem %s0, 10
    %v973 = vld [vmem:[%s972] sm:$0x3]
    %975 = vset.pattern.permute.xlu0 0
    %976 = vperm.xlu0 %975, %v973
    %v977 = vpop.permute.xlu0 %976
    %v979 = vmul.f32 %v977, %v65
    %980 = vset.pattern.permute.xlu0 1
    %981 = vperm.xlu0 %980, %v973
    %v982 = vpop.permute.xlu0 %981
    %v984 = vmul.f32 %v982, %v71
    %v985 = vadd.f32 %v979, %v984
    %986 = vset.pattern.permute.xlu0 2
    %987 = vperm.xlu0 %986, %v973
    %v988 = vpop.permute.xlu0 %987
    %v990 = vmul.f32 %v988, %v78
    %v991 = vadd.f32 %v985, %v990
    %992 = vset.pattern.permute.xlu0 3
    %993 = vperm.xlu0 %992, %v973
    %v994 = vpop.permute.xlu0 %993
    %v996 = vmul.f32 %v994, %v85
    %v997 = vadd.f32 %v991, %v996
    %998 = vset.pattern.permute.xlu0 4
    %999 = vperm.xlu0 %998, %v973
    %v1000 = vpop.permute.xlu0 %999
    %v1002 = vmul.f32 %v1000, %v92
    %v1003 = vadd.f32 %v997, %v1002
    %1004 = vset.pattern.permute.xlu0 5
    %1005 = vperm.xlu0 %1004, %v973
    %v1006 = vpop.permute.xlu0 %1005
    %v1008 = vmul.f32 %v1006, %v99
    %v1009 = vadd.f32 %v1003, %v1008
    %v1010 = vadd.f32 %v103, %v1009
    %v1011 = vmul.f32 %v876, %v111
    %v1012 = vmul.f32 %v881, %v117
    %v1013 = vadd.f32 %v1011, %v1012
    %v1014 = vmul.f32 %v887, %v124
    %v1015 = vadd.f32 %v1013, %v1014
    %v1016 = vmul.f32 %v893, %v131
    %v1017 = vadd.f32 %v1015, %v1016
    %v1018 = vmul.f32 %v899, %v138
    %v1019 = vadd.f32 %v1017, %v1018
    %v1020 = vmul.f32 %v905, %v145
    %v1021 = vadd.f32 %v1019, %v1020
    %v1022 = vadd.f32 %v1010, %v1021
    %v1023 = vtanh.pop %v1022
    %v1024 = vmul.f32 %v1023, 0.5
    %v1025 = vadd.f32 %v1024, 0.5
    %v1026 = vmul.f32 %v1025, %v866
    %1028 = vrot.lane.b32.xlu0 %v1023, 110
    %v1029 = vpop.permute.xlu0 %1028
    %v1031 = vmul.f32 %v1025, %v1029
    %1033 = vrot.lane.b32.xlu0 %v1031, 6
    %v1034 = vpop.permute.xlu0 %1033
    %v1036 = vadd.f32 %v1026, %v1034
    %v1037 = vtanh.pop %v1036
    %1039 = vrot.lane.b32.xlu0 %v1037, 6
    %v1040 = vpop.permute.xlu0 %1039
    %v1042 = vmul.f32 %v1025, %v1040
    %1044 = vset.pattern.permute.xlu0 12
    %1045 = vperm.xlu0 %1044, %v1042
    %v1046 = vpop.permute.xlu0 %1045
    %v1048 = vmul.f32 %v1046, %v178
    %1049 = vset.pattern.permute.xlu0 13
    %1050 = vperm.xlu0 %1049, %v1042
    %v1051 = vpop.permute.xlu0 %1050
    %v1053 = vmul.f32 %v1051, %v184
    %v1054 = vadd.f32 %v1048, %v1053
    %1055 = vset.pattern.permute.xlu0 14
    %1056 = vperm.xlu0 %1055, %v1042
    %v1057 = vpop.permute.xlu0 %1056
    %v1059 = vmul.f32 %v1057, %v191
    %v1060 = vadd.f32 %v1054, %v1059
    %1061 = vset.pattern.permute.xlu0 15
    %1062 = vperm.xlu0 %1061, %v1042
    %v1063 = vpop.permute.xlu0 %1062
    %v1065 = vmul.f32 %v1063, %v198
    %v1066 = vadd.f32 %v1060, %v1065
    %1067 = vset.pattern.permute.xlu0 16
    %1068 = vperm.xlu0 %1067, %v1042
    %v1069 = vpop.permute.xlu0 %1068
    %v1071 = vmul.f32 %v1069, %v205
    %v1072 = vadd.f32 %v1066, %v1071
    %1073 = vset.pattern.permute.xlu0 17
    %1074 = vperm.xlu0 %1073, %v1042
    %v1075 = vpop.permute.xlu0 %1074
    %v1077 = vmul.f32 %v1075, %v212
    %v1078 = vadd.f32 %v1072, %v1077
    %v1079 = vadd.f32 %v216, %v1078
    %1080 = vset.pattern.permute.xlu0 12
    %1081 = vperm.xlu0 %1080, %v965
    %v1082 = vpop.permute.xlu0 %1081
    %v1084 = vmul.f32 %v1082, %v224
    %1085 = vset.pattern.permute.xlu0 13
    %1086 = vperm.xlu0 %1085, %v965
    %v1087 = vpop.permute.xlu0 %1086
    %v1089 = vmul.f32 %v1087, %v230
    %v1090 = vadd.f32 %v1084, %v1089
    %1091 = vset.pattern.permute.xlu0 14
    %1092 = vperm.xlu0 %1091, %v965
    %v1093 = vpop.permute.xlu0 %1092
    %v1095 = vmul.f32 %v1093, %v237
    %v1096 = vadd.f32 %v1090, %v1095
    %1097 = vset.pattern.permute.xlu0 15
    %1098 = vperm.xlu0 %1097, %v965
    %v1099 = vpop.permute.xlu0 %1098
    %v1101 = vmul.f32 %v1099, %v244
    %v1102 = vadd.f32 %v1096, %v1101
    %1103 = vset.pattern.permute.xlu0 16
    %1104 = vperm.xlu0 %1103, %v965
    %v1105 = vpop.permute.xlu0 %1104
    %v1107 = vmul.f32 %v1105, %v251
    %v1108 = vadd.f32 %v1102, %v1107
    %1109 = vset.pattern.permute.xlu0 17
    %1110 = vperm.xlu0 %1109, %v965
    %v1111 = vpop.permute.xlu0 %1110
    %v1113 = vmul.f32 %v1111, %v258
    %v1114 = vadd.f32 %v1108, %v1113
    %v1115 = vadd.f32 %v1079, %v1114
    %v1116 = vtanh.pop %v1115
    %v1117 = vmul.f32 %v1116, 0.5
    %v1118 = vadd.f32 %v1117, 0.5
    %v1119 = vmul.f32 %v1118, %v959
    %1121 = vrot.lane.b32.xlu0 %v1116, 110
    %v1122 = vpop.permute.xlu0 %1121
    %v1124 = vmul.f32 %v1118, %v1122
    %1126 = vrot.lane.b32.xlu0 %v1124, 6
    %v1127 = vpop.permute.xlu0 %1126
    %v1129 = vadd.f32 %v1119, %v1127
    %v1130 = vtanh.pop %v1129
    %1132 = vrot.lane.b32.xlu0 %v1130, 6
    %v1133 = vpop.permute.xlu0 %1132
    %v1135 = vmul.f32 %v1118, %v1133
    %1137 = vrot.lane.b32.xlu0 %v1135, 116
    %v1138 = vpop.permute.xlu0 %1137
    %s1140 = scalar_lea.vmem %s7, 10
    %1141 = vst.msk [vmem:[%s1140] sm:$0x3] %vm290, %v1138
    %s1142 = scalar_lea.vmem %s0, 12
    %v1143 = vld [vmem:[%s1142] sm:$0x3]
    %1145 = vset.pattern.permute.xlu0 0
    %1146 = vperm.xlu0 %1145, %v1143
    %v1147 = vpop.permute.xlu0 %1146
    %v1149 = vmul.f32 %v1147, %v65
    %1150 = vset.pattern.permute.xlu0 1
    %1151 = vperm.xlu0 %1150, %v1143
    %v1152 = vpop.permute.xlu0 %1151
    %v1154 = vmul.f32 %v1152, %v71
    %v1155 = vadd.f32 %v1149, %v1154
    %1156 = vset.pattern.permute.xlu0 2
    %1157 = vperm.xlu0 %1156, %v1143
    %v1158 = vpop.permute.xlu0 %1157
    %v1160 = vmul.f32 %v1158, %v78
    %v1161 = vadd.f32 %v1155, %v1160
    %1162 = vset.pattern.permute.xlu0 3
    %1163 = vperm.xlu0 %1162, %v1143
    %v1164 = vpop.permute.xlu0 %1163
    %v1166 = vmul.f32 %v1164, %v85
    %v1167 = vadd.f32 %v1161, %v1166
    %1168 = vset.pattern.permute.xlu0 4
    %1169 = vperm.xlu0 %1168, %v1143
    %v1170 = vpop.permute.xlu0 %1169
    %v1172 = vmul.f32 %v1170, %v92
    %v1173 = vadd.f32 %v1167, %v1172
    %1174 = vset.pattern.permute.xlu0 5
    %1175 = vperm.xlu0 %1174, %v1143
    %v1176 = vpop.permute.xlu0 %1175
    %v1178 = vmul.f32 %v1176, %v99
    %v1179 = vadd.f32 %v1173, %v1178
    %v1180 = vadd.f32 %v103, %v1179
    %v1181 = vmul.f32 %v1046, %v111
    %v1182 = vmul.f32 %v1051, %v117
    %v1183 = vadd.f32 %v1181, %v1182
    %v1184 = vmul.f32 %v1057, %v124
    %v1185 = vadd.f32 %v1183, %v1184
    %v1186 = vmul.f32 %v1063, %v131
    %v1187 = vadd.f32 %v1185, %v1186
    %v1188 = vmul.f32 %v1069, %v138
    %v1189 = vadd.f32 %v1187, %v1188
    %v1190 = vmul.f32 %v1075, %v145
    %v1191 = vadd.f32 %v1189, %v1190
    %v1192 = vadd.f32 %v1180, %v1191
    %v1193 = vtanh.pop %v1192
    %v1194 = vmul.f32 %v1193, 0.5
    %v1195 = vadd.f32 %v1194, 0.5
    %v1196 = vmul.f32 %v1195, %v1036
    %1198 = vrot.lane.b32.xlu0 %v1193, 110
    %v1199 = vpop.permute.xlu0 %1198
    %v1201 = vmul.f32 %v1195, %v1199
    %1203 = vrot.lane.b32.xlu0 %v1201, 6
    %v1204 = vpop.permute.xlu0 %1203
    %v1206 = vadd.f32 %v1196, %v1204
    %v1207 = vtanh.pop %v1206
    %1209 = vrot.lane.b32.xlu0 %v1207, 6
    %v1210 = vpop.permute.xlu0 %1209
    %v1212 = vmul.f32 %v1195, %v1210
    %1214 = vset.pattern.permute.xlu0 12
    %1215 = vperm.xlu0 %1214, %v1212
    %v1216 = vpop.permute.xlu0 %1215
    %v1218 = vmul.f32 %v1216, %v178
    %1219 = vset.pattern.permute.xlu0 13
    %1220 = vperm.xlu0 %1219, %v1212
    %v1221 = vpop.permute.xlu0 %1220
    %v1223 = vmul.f32 %v1221, %v184
    %v1224 = vadd.f32 %v1218, %v1223
    %1225 = vset.pattern.permute.xlu0 14
    %1226 = vperm.xlu0 %1225, %v1212
    %v1227 = vpop.permute.xlu0 %1226
    %v1229 = vmul.f32 %v1227, %v191
    %v1230 = vadd.f32 %v1224, %v1229
    %1231 = vset.pattern.permute.xlu0 15
    %1232 = vperm.xlu0 %1231, %v1212
    %v1233 = vpop.permute.xlu0 %1232
    %v1235 = vmul.f32 %v1233, %v198
    %v1236 = vadd.f32 %v1230, %v1235
    %1237 = vset.pattern.permute.xlu0 16
    %1238 = vperm.xlu0 %1237, %v1212
    %v1239 = vpop.permute.xlu0 %1238
    %v1241 = vmul.f32 %v1239, %v205
    %v1242 = vadd.f32 %v1236, %v1241
    %1243 = vset.pattern.permute.xlu0 17
    %1244 = vperm.xlu0 %1243, %v1212
    %v1245 = vpop.permute.xlu0 %1244
    %v1247 = vmul.f32 %v1245, %v212
    %v1248 = vadd.f32 %v1242, %v1247
    %v1249 = vadd.f32 %v216, %v1248
    %1250 = vset.pattern.permute.xlu0 12
    %1251 = vperm.xlu0 %1250, %v1135
    %v1252 = vpop.permute.xlu0 %1251
    %v1254 = vmul.f32 %v1252, %v224
    %1255 = vset.pattern.permute.xlu0 13
    %1256 = vperm.xlu0 %1255, %v1135
    %v1257 = vpop.permute.xlu0 %1256
    %v1259 = vmul.f32 %v1257, %v230
    %v1260 = vadd.f32 %v1254, %v1259
    %1261 = vset.pattern.permute.xlu0 14
    %1262 = vperm.xlu0 %1261, %v1135
    %v1263 = vpop.permute.xlu0 %1262
    %v1265 = vmul.f32 %v1263, %v237
    %v1266 = vadd.f32 %v1260, %v1265
    %1267 = vset.pattern.permute.xlu0 15
    %1268 = vperm.xlu0 %1267, %v1135
    %v1269 = vpop.permute.xlu0 %1268
    %v1271 = vmul.f32 %v1269, %v244
    %v1272 = vadd.f32 %v1266, %v1271
    %1273 = vset.pattern.permute.xlu0 16
    %1274 = vperm.xlu0 %1273, %v1135
    %v1275 = vpop.permute.xlu0 %1274
    %v1277 = vmul.f32 %v1275, %v251
    %v1278 = vadd.f32 %v1272, %v1277
    %1279 = vset.pattern.permute.xlu0 17
    %1280 = vperm.xlu0 %1279, %v1135
    %v1281 = vpop.permute.xlu0 %1280
    %v1283 = vmul.f32 %v1281, %v258
    %v1284 = vadd.f32 %v1278, %v1283
    %v1285 = vadd.f32 %v1249, %v1284
    %v1286 = vtanh.pop %v1285
    %v1287 = vmul.f32 %v1286, 0.5
    %v1288 = vadd.f32 %v1287, 0.5
    %v1289 = vmul.f32 %v1288, %v1129
    %1291 = vrot.lane.b32.xlu0 %v1286, 110
    %v1292 = vpop.permute.xlu0 %1291
    %v1294 = vmul.f32 %v1288, %v1292
    %1296 = vrot.lane.b32.xlu0 %v1294, 6
    %v1297 = vpop.permute.xlu0 %1296
    %v1299 = vadd.f32 %v1289, %v1297
    %v1300 = vtanh.pop %v1299
    %1302 = vrot.lane.b32.xlu0 %v1300, 6
    %v1303 = vpop.permute.xlu0 %1302
    %v1305 = vmul.f32 %v1288, %v1303
    %1307 = vrot.lane.b32.xlu0 %v1305, 116
    %v1308 = vpop.permute.xlu0 %1307
    %s1310 = scalar_lea.vmem %s7, 12
    %1311 = vst.msk [vmem:[%s1310] sm:$0x3] %vm290, %v1308
    %s1312 = scalar_lea.vmem %s0, 14
    %v1313 = vld [vmem:[%s1312] sm:$0x3]
    %1315 = vset.pattern.permute.xlu0 0
    %1316 = vperm.xlu0 %1315, %v1313
    %v1317 = vpop.permute.xlu0 %1316
    %v1319 = vmul.f32 %v1317, %v65
    %1320 = vset.pattern.permute.xlu0 1
    %1321 = vperm.xlu0 %1320, %v1313
    %v1322 = vpop.permute.xlu0 %1321
    %v1324 = vmul.f32 %v1322, %v71
    %v1325 = vadd.f32 %v1319, %v1324
    %1326 = vset.pattern.permute.xlu0 2
    %1327 = vperm.xlu0 %1326, %v1313
    %v1328 = vpop.permute.xlu0 %1327
    %v1330 = vmul.f32 %v1328, %v78
    %v1331 = vadd.f32 %v1325, %v1330
    %1332 = vset.pattern.permute.xlu0 3
    %1333 = vperm.xlu0 %1332, %v1313
    %v1334 = vpop.permute.xlu0 %1333
    %v1336 = vmul.f32 %v1334, %v85
    %v1337 = vadd.f32 %v1331, %v1336
    %1338 = vset.pattern.permute.xlu0 4
    %1339 = vperm.xlu0 %1338, %v1313
    %v1340 = vpop.permute.xlu0 %1339
    %v1342 = vmul.f32 %v1340, %v92
    %v1343 = vadd.f32 %v1337, %v1342
    %1344 = vset.pattern.permute.xlu0 5
    %1345 = vperm.xlu0 %1344, %v1313
    %v1346 = vpop.permute.xlu0 %1345
    %v1348 = vmul.f32 %v1346, %v99
    %v1349 = vadd.f32 %v1343, %v1348
    %v1350 = vadd.f32 %v103, %v1349
    %v1351 = vmul.f32 %v1216, %v111
    %v1352 = vmul.f32 %v1221, %v117
    %v1353 = vadd.f32 %v1351, %v1352
    %v1354 = vmul.f32 %v1227, %v124
    %v1355 = vadd.f32 %v1353, %v1354
    %v1356 = vmul.f32 %v1233, %v131
    %v1357 = vadd.f32 %v1355, %v1356
    %v1358 = vmul.f32 %v1239, %v138
    %v1359 = vadd.f32 %v1357, %v1358
    %v1360 = vmul.f32 %v1245, %v145
    %v1361 = vadd.f32 %v1359, %v1360
    %v1362 = vadd.f32 %v1350, %v1361
    %v1363 = vtanh.pop %v1362
    %v1364 = vmul.f32 %v1363, 0.5
    %v1365 = vadd.f32 %v1364, 0.5
    %v1366 = vmul.f32 %v1365, %v1206
    %1368 = vrot.lane.b32.xlu0 %v1363, 110
    %v1369 = vpop.permute.xlu0 %1368
    %v1371 = vmul.f32 %v1365, %v1369
    %1373 = vrot.lane.b32.xlu0 %v1371, 6
    %v1374 = vpop.permute.xlu0 %1373
    %v1376 = vadd.f32 %v1366, %v1374
    %v1377 = vtanh.pop %v1376
    %1379 = vrot.lane.b32.xlu0 %v1377, 6
    %v1380 = vpop.permute.xlu0 %1379
    %v1382 = vmul.f32 %v1365, %v1380
    %1384 = vset.pattern.permute.xlu0 12
    %1385 = vperm.xlu0 %1384, %v1382
    %v1386 = vpop.permute.xlu0 %1385
    %v1388 = vmul.f32 %v1386, %v178
    %1389 = vset.pattern.permute.xlu0 13
    %1390 = vperm.xlu0 %1389, %v1382
    %v1391 = vpop.permute.xlu0 %1390
    %v1393 = vmul.f32 %v1391, %v184
    %v1394 = vadd.f32 %v1388, %v1393
    %1395 = vset.pattern.permute.xlu0 14
    %1396 = vperm.xlu0 %1395, %v1382
    %v1397 = vpop.permute.xlu0 %1396
    %v1399 = vmul.f32 %v1397, %v191
    %v1400 = vadd.f32 %v1394, %v1399
    %1401 = vset.pattern.permute.xlu0 15
    %1402 = vperm.xlu0 %1401, %v1382
    %v1403 = vpop.permute.xlu0 %1402
    %v1405 = vmul.f32 %v1403, %v198
    %v1406 = vadd.f32 %v1400, %v1405
    %1407 = vset.pattern.permute.xlu0 16
    %1408 = vperm.xlu0 %1407, %v1382
    %v1409 = vpop.permute.xlu0 %1408
    %v1411 = vmul.f32 %v1409, %v205
    %v1412 = vadd.f32 %v1406, %v1411
    %1413 = vset.pattern.permute.xlu0 17
    %1414 = vperm.xlu0 %1413, %v1382
    %v1415 = vpop.permute.xlu0 %1414
    %v1417 = vmul.f32 %v1415, %v212
    %v1418 = vadd.f32 %v1412, %v1417
    %v1419 = vadd.f32 %v216, %v1418
    %1420 = vset.pattern.permute.xlu0 12
    %1421 = vperm.xlu0 %1420, %v1305
    %v1422 = vpop.permute.xlu0 %1421
    %v1424 = vmul.f32 %v1422, %v224
    %1425 = vset.pattern.permute.xlu0 13
    %1426 = vperm.xlu0 %1425, %v1305
    %v1427 = vpop.permute.xlu0 %1426
    %v1429 = vmul.f32 %v1427, %v230
    %v1430 = vadd.f32 %v1424, %v1429
    %1431 = vset.pattern.permute.xlu0 14
    %1432 = vperm.xlu0 %1431, %v1305
    %v1433 = vpop.permute.xlu0 %1432
    %v1435 = vmul.f32 %v1433, %v237
    %v1436 = vadd.f32 %v1430, %v1435
    %1437 = vset.pattern.permute.xlu0 15
    %1438 = vperm.xlu0 %1437, %v1305
    %v1439 = vpop.permute.xlu0 %1438
    %v1441 = vmul.f32 %v1439, %v244
    %v1442 = vadd.f32 %v1436, %v1441
    %1443 = vset.pattern.permute.xlu0 16
    %1444 = vperm.xlu0 %1443, %v1305
    %v1445 = vpop.permute.xlu0 %1444
    %v1447 = vmul.f32 %v1445, %v251
    %v1448 = vadd.f32 %v1442, %v1447
    %1449 = vset.pattern.permute.xlu0 17
    %1450 = vperm.xlu0 %1449, %v1305
    %v1451 = vpop.permute.xlu0 %1450
    %v1453 = vmul.f32 %v1451, %v258
    %v1454 = vadd.f32 %v1448, %v1453
    %v1455 = vadd.f32 %v1419, %v1454
    %v1456 = vtanh.pop %v1455
    %v1457 = vmul.f32 %v1456, 0.5
    %v1458 = vadd.f32 %v1457, 0.5
    %v1459 = vmul.f32 %v1458, %v1299
    %1461 = vrot.lane.b32.xlu0 %v1456, 110
    %v1462 = vpop.permute.xlu0 %1461
    %v1464 = vmul.f32 %v1458, %v1462
    %1466 = vrot.lane.b32.xlu0 %v1464, 6
    %v1467 = vpop.permute.xlu0 %1466
    %v1469 = vadd.f32 %v1459, %v1467
    %v1470 = vtanh.pop %v1469
    %1472 = vrot.lane.b32.xlu0 %v1470, 6
    %v1473 = vpop.permute.xlu0 %1472
    %v1475 = vmul.f32 %v1458, %v1473
    %1477 = vrot.lane.b32.xlu0 %v1475, 116
    %v1478 = vpop.permute.xlu0 %1477
    %s1480 = scalar_lea.vmem %s7, 14
    %1481 = vst.msk [vmem:[%s1480] sm:$0x3] %vm290, %v1478
    %1482 = vrot.lane.b32.xlu0 %v1382, 116
    %v1483 = vpop.permute.xlu0 %1482
    %1485 = vst.msk [vmem:[#allocation2] sm:$0x3] %vm290, %v1483
    %1487 = vrot.lane.b32.xlu0 %v1376, 122
    %v1488 = vpop.permute.xlu0 %1487
    %1490 = vst.msk [vmem:[#allocation3] sm:$0x3] %vm290, %v1488
    %1491 = vst.msk [vmem:[#allocation4] sm:$0x3] %vm290, %v1478
    %1493 = vrot.lane.b32.xlu0 %v1469, 122
    %v1494 = vpop.permute.xlu0 %1493
    %1496 = vst.msk [vmem:[#allocation5] sm:$0x3] %vm290, %v1494
    // Predicated region
    $region38: #{tpu_custom_call.1} parent=1 // pred_check
      _
    $region39: #{tpu_custom_call.1} parent=1 // pred_check_branch
      %1498 = sbr.rel (0) target = $region41
    $region40: #{tpu_custom_call.1} parent=1 // pred_region
      _
    $region41: #{tpu_custom_call.1} parent=1 // pred_fallthru
      _
    // Predicated region
    $region42: #{tpu_custom_call.1} parent=1 // pred_check
      _
    $region43: #{tpu_custom_call.1} parent=1 // pred_check_branch
      %1500 = sbr.rel (0) target = $region45
    $region44: #{tpu_custom_call.1} parent=1 // pred_region
      _
    $region45: #{tpu_custom_call.1} parent=1 // pred_fallthru
      _
    %1501 = vsyncpa [#allocation7], 1

</llo_original>
